<compile_context>
chip_gen: v7x
topology: tpu7x:2x2x1
jax: 0.10.0
libtpu: 0.0.40
codegen_flags: <defaults>
</compile_context>

<pallas_src>
import functools
import math

import jax
import jax.numpy as jnp
from jax import lax
from jax.experimental import pallas as pl
from jax.experimental.pallas import tpu as pltpu


def _layernorm(x, gamma, beta, eps=1e-5):
    mean = jnp.mean(x, axis=-1, keepdims=True)
    var = jnp.mean((x - mean) ** 2, axis=-1, keepdims=True)
    return (x - mean) * lax.rsqrt(var + eps) * gamma + beta


def encoder_kernel(x_ref,
                   wqkv_ref, bqkv_ref, wo_ref, bo_ref,
                   w1_ref, b1_ref, w2_ref, b2_ref,
                   g1_ref, be1_ref, g2_ref, be2_ref,
                   o_ref, *, num_heads):
    B, L, C = x_ref.shape                       # (B_blk, L, C) tile
    Dh = C // num_heads
    scale = 1.0 / math.sqrt(Dh)

    x = x_ref[...].astype(jnp.float32)          # (B, L, C)
    # L is a multiple of 8 sublanes, so collapsing (B, L, C) -> (B*L, C) is a
    # free relayout; all row-wise matmuls / LayerNorms run on the big 2-D slab.
    x2d = x.reshape(B * L, C)

    # --- fused Q/K/V projection: one bf16 MXU matmul, f32 accumulation ---
    qkv = jnp.dot(x2d.astype(jnp.bfloat16), wqkv_ref[...],
                  preferred_element_type=jnp.float32) + bqkv_ref[...]
    # Fold the attention scale into Q once (cheaper than scaling every (L, L)
    # score matrix per head), then cast MXU operands to bf16.
    qb = (qkv[:, :C] * scale).reshape(B, L, C).astype(jnp.bfloat16)
    kb = qkv[:, C:2 * C].reshape(B, L, C).astype(jnp.bfloat16)
    vb = qkv[:, 2 * C:].reshape(B, L, C).astype(jnp.bfloat16)

    # --- multi-head self-attention, batched over the B_blk batches ---
    # Head outputs are accumulated directly through the output projection:
    #   attn += softmax(q_h k_h^T) v_h @ Wo[h*Dh:(h+1)*Dh, :]
    attn = jnp.zeros((B * L, C), jnp.float32)
    for h in range(num_heads):
        lo = h * Dh
        qh = qb[:, :, lo:lo + Dh]               # (B, L, Dh)
        kh = kb[:, :, lo:lo + Dh]
        vh = vb[:, :, lo:lo + Dh]
        s = jnp.einsum("bqd,bkd->bqk", qh, kh,
                       preferred_element_type=jnp.float32)            # (B, L, L)
        s = s - jnp.max(s, axis=-1, keepdims=True)
        p = jnp.exp(s)
        p = p * pl.reciprocal(jnp.sum(p, axis=-1, keepdims=True), approx=True)
        ao = jnp.einsum("bqk,bkd->bqd", p.astype(jnp.bfloat16), vh,
                        preferred_element_type=jnp.float32)           # (B, L, Dh)
        attn = attn + jnp.dot(ao.reshape(B * L, Dh).astype(jnp.bfloat16),
                              wo_ref[lo:lo + Dh, :],
                              preferred_element_type=jnp.float32)
    attn = attn + bo_ref[...]

    # --- residual + LayerNorm 1 (f32) ---
    x1 = _layernorm(x2d + attn, g1_ref[...], be1_ref[...])

    # --- feed-forward (bf16 MXU operands, f32 accumulation / elementwise) ---
    h1 = jnp.dot(x1.astype(jnp.bfloat16), w1_ref[...],
                 preferred_element_type=jnp.float32) + b1_ref[...]
    h1 = jnp.maximum(h1, 0.0)
    h2 = jnp.dot(h1.astype(jnp.bfloat16), w2_ref[...],
                 preferred_element_type=jnp.float32) + b2_ref[...]

    # --- residual + LayerNorm 2 (f32) ---
    out = _layernorm(x1 + h2, g2_ref[...], be2_ref[...])

    o_ref[...] = out.reshape(B, L, C).astype(o_ref.dtype)


def _pick_batch_block(n_batch, seq_len, target_rows=512):
    """Largest divisor of n_batch such that b * seq_len <= target_rows (>= 1)."""
    best = 1
    for b in range(1, n_batch + 1):
        if n_batch % b == 0 and b * seq_len <= target_rows:
            best = b
    return best


def _full_spec(a):
    nd = a.ndim
    return pl.BlockSpec(a.shape, lambda b, _nd=nd: (0,) * _nd)


def transformer_encoder(x, kparams, *, num_heads, b_block=None):
    """x: (L, N, C) float32, seq-first like nn.MultiheadAttention(batch_first=False)."""
    L, N, C = x.shape
    assert C % num_heads == 0
    if b_block is None:
        b_block = _pick_batch_block(N, L)
    assert N % b_block == 0, (N, b_block)

    # Single transpose so each grid step sees a contiguous (b_block, L, C) tile.
    xb = jnp.transpose(x, (1, 0, 2))            # (N, L, C)

    weight_args = (
        kparams["wqkv"], kparams["bqkv"], kparams["wo"], kparams["bo"],
        kparams["w1"], kparams["b1"], kparams["w2"], kparams["b2"],
        kparams["g1"], kparams["be1"], kparams["g2"], kparams["be2"],
    )

    out = pl.pallas_call(
        functools.partial(encoder_kernel, num_heads=num_heads),
        out_shape=jax.ShapeDtypeStruct((N, L, C), x.dtype),
        grid_spec=pltpu.PrefetchScalarGridSpec(
            num_scalar_prefetch=0,
            grid=(N // b_block,),
            in_specs=[pl.BlockSpec((b_block, L, C), lambda b: (b, 0, 0))]
                     + [_full_spec(a) for a in weight_args],
            out_specs=pl.BlockSpec((b_block, L, C), lambda b: (b, 0, 0)),
        ),
        compiler_params=pltpu.CompilerParams(
            dimension_semantics=("parallel",),      # batch blocks -> both TCs on v7x
            vmem_limit_bytes=32 * 1024 * 1024,      # raise v5e's 16 MiB default
        ),
    )(xb, *weight_args)

    return jnp.transpose(out, (1, 0, 2))            # back to (L, N, C)


def init_params(key, num_channels, dim_feedforward):
    C, F = num_channels, dim_feedforward
    ks = jax.random.split(key, 8)
    s = 0.05
    # MultiheadAttention in_proj (3C, C) split into q/k/v, stored pre-transposed
    # so the kernel computes x @ W_t + b.
    wq = jax.random.normal(ks[0], (C, C), jnp.float32) * s
    wk = jax.random.normal(ks[1], (C, C), jnp.float32) * s
    wv = jax.random.normal(ks[2], (C, C), jnp.float32) * s
    wo = jax.random.normal(ks[3], (C, C), jnp.float32) * s
    w1 = jax.random.normal(ks[4], (F, C), jnp.float32) * s   # linear1.weight
    w2 = jax.random.normal(ks[5], (C, F), jnp.float32) * s   # linear2.weight
    bq = jax.random.normal(ks[6], (1, C), jnp.float32) * s
    bk = jnp.zeros((1, C), jnp.float32)
    bv = jax.random.normal(ks[7], (1, C), jnp.float32) * s
    return dict(
        wq_t=wq.T, wk_t=wk.T, wv_t=wv.T,
        bq=bq, bk=bk, bv=bv,
        wo_t=wo.T, bo=jnp.zeros((1, C), jnp.float32),
        w1_t=w1.T, b1=jnp.full((1, F), 0.01, jnp.float32),
        w2_t=w2.T, b2=jnp.full((1, C), -0.01, jnp.float32),
        g1=jnp.ones((1, C), jnp.float32), be1=jnp.zeros((1, C), jnp.float32),
        g2=jnp.ones((1, C), jnp.float32), be2=jnp.zeros((1, C), jnp.float32),
    )


def prepare_kernel_params(p):
    """Fuse Q/K/V weights and cast MXU operand weights to bf16 once, at init."""
    return dict(
        wqkv=jnp.concatenate([p["wq_t"], p["wk_t"], p["wv_t"]],
                             axis=1).astype(jnp.bfloat16),          # (C, 3C)
        bqkv=jnp.concatenate([p["bq"], p["bk"], p["bv"]], axis=1),  # (1, 3C) f32
        wo=p["wo_t"].astype(jnp.bfloat16), bo=p["bo"],
        w1=p["w1_t"].astype(jnp.bfloat16), b1=p["b1"],
        w2=p["w2_t"].astype(jnp.bfloat16), b2=p["b2"],
        g1=p["g1"], be1=p["be1"], g2=p["g2"], be2=p["be2"],
    )


def reference(x, p, num_heads):
    """Pure-JAX f32 reference of the PyTorch forward (eval mode)."""
    L, N, C = x.shape
    Dh = C // num_heads
    xf = x.astype(jnp.float32)

    def per_batch(xb):  # (L, C)
        q = xb @ p["wq_t"] + p["bq"]
        k = xb @ p["wk_t"] + p["bk"]
        v = xb @ p["wv_t"] + p["bv"]
        qh = q.reshape(L, num_heads, Dh).transpose(1, 0, 2) / math.sqrt(Dh)
        kh = k.reshape(L, num_heads, Dh).transpose(1, 0, 2)
        vh = v.reshape(L, num_heads, Dh).transpose(1, 0, 2)
        sc = jnp.einsum("hqd,hkd->hqk", qh, kh)
        pr = jax.nn.softmax(sc, axis=-1)
        a = jnp.einsum("hqk,hkd->hqd", pr, vh).transpose(1, 0, 2).reshape(L, C)
        a = a @ p["wo_t"] + p["bo"]
        x1 = _layernorm(xb + a, p["g1"], p["be1"])
        h = jnp.maximum(x1 @ p["w1_t"] + p["b1"], 0.0)
        h = h @ p["w2_t"] + p["b2"]
        return _layernorm(x1 + h, p["g2"], p["be2"])

    out = jax.vmap(per_batch, in_axes=1, out_axes=1)(xf)
    return out.astype(x.dtype)


if __name__ == "__main__":
    # Small shapes consistent with the module (channels divisible by heads).
    SEQ, BATCH, CHANNELS, HEADS, FFN = 8, 4, 128, 8, 128

    key = jax.random.PRNGKey(0)
    kx, kp = jax.random.split(key)
    x = jax.random.normal(kx, (SEQ, BATCH, CHANNELS), jnp.float32)   # (L, N, C)
    params = init_params(kp, CHANNELS, FFN)
    kparams = prepare_kernel_params(params)

    # b_block=2 -> grid of 2 batch blocks, each working on a (2*8, 128) slab.
    out = transformer_encoder(x, kparams, num_heads=HEADS, b_block=2)
    out = jax.block_until_ready(out)

    ref = reference(x, params, HEADS)
    assert out.shape == (SEQ, BATCH, CHANNELS)
    # Kernel uses bf16 MXU operands (f32 accumulation) + approx reciprocal, so
    # the tolerance vs. the pure-f32 reference is loosened accordingly.
    err = float(jnp.abs(out - ref).max())
    assert jnp.allclose(out, ref, atol=3e-2, rtol=3e-2), err

    print("KERNEL_OK")
</pallas_src>

<mosaic_0001>
module attributes {stable_mosaic.version = 11 : i64} {
  func.func @encoder_kernel(%arg0: i32, %arg1: memref<2x8x128xf32, #tpu.memory_space<vmem>>, %arg2: memref<128x384xbf16, #tpu.memory_space<vmem>>, %arg3: memref<1x384xf32, #tpu.memory_space<vmem>>, %arg4: memref<128x128xbf16, #tpu.memory_space<vmem>>, %arg5: memref<1x128xf32, #tpu.memory_space<vmem>>, %arg6: memref<128x128xbf16, #tpu.memory_space<vmem>>, %arg7: memref<1x128xf32, #tpu.memory_space<vmem>>, %arg8: memref<128x128xbf16, #tpu.memory_space<vmem>>, %arg9: memref<1x128xf32, #tpu.memory_space<vmem>>, %arg10: memref<1x128xf32, #tpu.memory_space<vmem>>, %arg11: memref<1x128xf32, #tpu.memory_space<vmem>>, %arg12: memref<1x128xf32, #tpu.memory_space<vmem>>, %arg13: memref<1x128xf32, #tpu.memory_space<vmem>>, %arg14: memref<2x8x128xf32, #tpu.memory_space<vmem>>) attributes {dimension_semantics = [#tpu.dimension_semantics<parallel>], iteration_bounds = array<i64: 2>, scalar_prefetch = 0 : i64, scratch_operands = 0 : i64, tpu.core_type = #tpu.core_type<tc>, window_params = [{transform_indices = @transform_0, window_bounds = array<i64: 2, 8, 128>}, {pipeline_mode = #tpu.pipeline_mode<synchronous>, transform_indices = @transform_1, window_bounds = array<i64: 128, 384>}, {pipeline_mode = #tpu.pipeline_mode<synchronous>, transform_indices = @transform_2, window_bounds = array<i64: 1, 384>}, {pipeline_mode = #tpu.pipeline_mode<synchronous>, transform_indices = @transform_3, window_bounds = array<i64: 128, 128>}, {pipeline_mode = #tpu.pipeline_mode<synchronous>, transform_indices = @transform_4, window_bounds = array<i64: 1, 128>}, {pipeline_mode = #tpu.pipeline_mode<synchronous>, transform_indices = @transform_5, window_bounds = array<i64: 128, 128>}, {pipeline_mode = #tpu.pipeline_mode<synchronous>, transform_indices = @transform_6, window_bounds = array<i64: 1, 128>}, {pipeline_mode = #tpu.pipeline_mode<synchronous>, transform_indices = @transform_7, window_bounds = array<i64: 128, 128>}, {pipeline_mode = #tpu.pipeline_mode<synchronous>, transform_indices = @transform_8, window_bounds = array<i64: 1, 128>}, {pipeline_mode = #tpu.pipeline_mode<synchronous>, transform_indices = @transform_9, window_bounds = array<i64: 1, 128>}, {pipeline_mode = #tpu.pipeline_mode<synchronous>, transform_indices = @transform_10, window_bounds = array<i64: 1, 128>}, {pipeline_mode = #tpu.pipeline_mode<synchronous>, transform_indices = @transform_11, window_bounds = array<i64: 1, 128>}, {pipeline_mode = #tpu.pipeline_mode<synchronous>, transform_indices = @transform_12, window_bounds = array<i64: 1, 128>}, {transform_indices = @transform_13, window_bounds = array<i64: 2, 8, 128>}]} {
    %c0 = arith.constant 0 : index
    %c0_0 = arith.constant 0 : index
    %c0_1 = arith.constant 0 : index
    %0 = vector.load %arg1[%c0, %c0_0, %c0_1] : memref<2x8x128xf32, #tpu.memory_space<vmem>>, vector<2x8x128xf32>
    %1 = vector.shape_cast %0 : vector<2x8x128xf32> to vector<16x128xf32>
    %2 = arith.truncf %1 : vector<16x128xf32> to vector<16x128xbf16>
    %c0_2 = arith.constant 0 : index
    %c0_3 = arith.constant 0 : index
    %3 = vector.load %arg2[%c0_2, %c0_3] : memref<128x384xbf16, #tpu.memory_space<vmem>>, vector<128x384xbf16>
    %cst = arith.constant dense<0.000000e+00> : vector<16x384xf32>
    %4 = tpu.matmul %2, %3, %cst {dimension_numbers = #tpu.dot_dimension_numbers<[1], [0], [0], [1], [0, 0, 1, 1], [], []>} : vector<16x128xbf16>, vector<128x384xbf16>, vector<16x384xf32> -> vector<16x384xf32>
    %c0_4 = arith.constant 0 : index
    %c0_5 = arith.constant 0 : index
    %5 = vector.load %arg3[%c0_4, %c0_5] : memref<1x384xf32, #tpu.memory_space<vmem>>, vector<1x384xf32>
    %6 = vector.broadcast %5 : vector<1x384xf32> to vector<16x384xf32>
    %7 = arith.addf %4, %6 : vector<16x384xf32>
    %8 = vector.extract_strided_slice %7 {offsets = [0, 0], sizes = [16, 128], strides = [1, 1]} : vector<16x384xf32> to vector<16x128xf32>
    %cst_6 = arith.constant 2.500000e-01 : f32
    %9 = vector.broadcast %cst_6 : f32 to vector<16x128xf32>
    %10 = arith.mulf %8, %9 : vector<16x128xf32>
    %11 = vector.shape_cast %10 : vector<16x128xf32> to vector<2x8x128xf32>
    %12 = arith.truncf %11 : vector<2x8x128xf32> to vector<2x8x128xbf16>
    %13 = vector.extract_strided_slice %7 {offsets = [0, 128], sizes = [16, 128], strides = [1, 1]} : vector<16x384xf32> to vector<16x128xf32>
    %14 = vector.shape_cast %13 : vector<16x128xf32> to vector<2x8x128xf32>
    %15 = arith.truncf %14 : vector<2x8x128xf32> to vector<2x8x128xbf16>
    %16 = vector.extract_strided_slice %7 {offsets = [0, 256], sizes = [16, 128], strides = [1, 1]} : vector<16x384xf32> to vector<16x128xf32>
    %17 = vector.shape_cast %16 : vector<16x128xf32> to vector<2x8x128xf32>
    %18 = arith.truncf %17 : vector<2x8x128xf32> to vector<2x8x128xbf16>
    %cst_7 = arith.constant 0.000000e+00 : f32
    %19 = vector.broadcast %cst_7 : f32 to vector<16x128xf32>
    %20 = vector.extract_strided_slice %12 {offsets = [0, 0, 0], sizes = [2, 8, 16], strides = [1, 1, 1]} : vector<2x8x128xbf16> to vector<2x8x16xbf16>
    %21 = vector.extract_strided_slice %15 {offsets = [0, 0, 0], sizes = [2, 8, 16], strides = [1, 1, 1]} : vector<2x8x128xbf16> to vector<2x8x16xbf16>
    %22 = vector.extract_strided_slice %18 {offsets = [0, 0, 0], sizes = [2, 8, 16], strides = [1, 1, 1]} : vector<2x8x128xbf16> to vector<2x8x16xbf16>
    "tpu.trace_start"() <{level = 10 : i32, message = "bqd,bkd->bqk"}> : () -> ()
    %cst_8 = arith.constant dense<0.000000e+00> : vector<2x8x8xf32>
    %23 = tpu.matmul %20, %21, %cst_8 {dimension_numbers = #tpu.dot_dimension_numbers<[2], [2], [1], [1], [0, 0, 0, 1, 1, 1], [0], [0]>} : vector<2x8x16xbf16>, vector<2x8x16xbf16>, vector<2x8x8xf32> -> vector<2x8x8xf32>
    "tpu.trace_stop"() : () -> ()
    %cst_9 = arith.constant dense<0xFF800000> : vector<2x8xf32>
    %24 = vector.multi_reduction <maximumf>, %23, %cst_9 [2] : vector<2x8x8xf32> to vector<2x8xf32>
    %25 = vector.shape_cast %24 : vector<2x8xf32> to vector<2x8x1xf32>
    %26 = vector.broadcast %25 : vector<2x8x1xf32> to vector<2x8x8xf32>
    %27 = arith.subf %23, %26 : vector<2x8x8xf32>
    %28 = math.exp %27 : vector<2x8x8xf32>
    %cst_10 = arith.constant dense<0.000000e+00> : vector<2x8xf32>
    %29 = vector.multi_reduction <add>, %28, %cst_10 [2] : vector<2x8x8xf32> to vector<2x8xf32>
    %30 = vector.shape_cast %29 : vector<2x8xf32> to vector<2x8x1xf32>
    %31 = tpu.reciprocal %30 {approx = true} : vector<2x8x1xf32> -> vector<2x8x1xf32>
    %32 = vector.broadcast %31 : vector<2x8x1xf32> to vector<2x8x8xf32>
    %33 = arith.mulf %28, %32 : vector<2x8x8xf32>
    %34 = arith.truncf %33 : vector<2x8x8xf32> to vector<2x8x8xbf16>
    "tpu.trace_start"() <{level = 10 : i32, message = "bqk,bkd->bqd"}> : () -> ()
    %cst_11 = arith.constant dense<0.000000e+00> : vector<2x8x16xf32>
    %35 = tpu.matmul %34, %22, %cst_11 {dimension_numbers = #tpu.dot_dimension_numbers<[2], [1], [1], [2], [0, 0, 0, 1, 1, 2], [0], [0]>} : vector<2x8x8xbf16>, vector<2x8x16xbf16>, vector<2x8x16xf32> -> vector<2x8x16xf32>
    "tpu.trace_stop"() : () -> ()
    %36 = vector.shape_cast %35 : vector<2x8x16xf32> to vector<16x16xf32>
    %37 = arith.truncf %36 : vector<16x16xf32> to vector<16x16xbf16>
    %c0_12 = arith.constant 0 : index
    %c0_13 = arith.constant 0 : index
    %38 = vector.load %arg4[%c0_12, %c0_13] : memref<128x128xbf16, #tpu.memory_space<vmem>>, vector<16x128xbf16>
    %cst_14 = arith.constant dense<0.000000e+00> : vector<16x128xf32>
    %39 = tpu.matmul %37, %38, %cst_14 {dimension_numbers = #tpu.dot_dimension_numbers<[1], [0], [0], [1], [0, 0, 1, 1], [], []>} : vector<16x16xbf16>, vector<16x128xbf16>, vector<16x128xf32> -> vector<16x128xf32>
    %40 = arith.addf %19, %39 : vector<16x128xf32>
    %41 = vector.extract_strided_slice %12 {offsets = [0, 0, 16], sizes = [2, 8, 16], strides = [1, 1, 1]} : vector<2x8x128xbf16> to vector<2x8x16xbf16>
    %42 = vector.extract_strided_slice %15 {offsets = [0, 0, 16], sizes = [2, 8, 16], strides = [1, 1, 1]} : vector<2x8x128xbf16> to vector<2x8x16xbf16>
    %43 = vector.extract_strided_slice %18 {offsets = [0, 0, 16], sizes = [2, 8, 16], strides = [1, 1, 1]} : vector<2x8x128xbf16> to vector<2x8x16xbf16>
    "tpu.trace_start"() <{level = 10 : i32, message = "bqd,bkd->bqk"}> : () -> ()
    %cst_15 = arith.constant dense<0.000000e+00> : vector<2x8x8xf32>
    %44 = tpu.matmul %41, %42, %cst_15 {dimension_numbers = #tpu.dot_dimension_numbers<[2], [2], [1], [1], [0, 0, 0, 1, 1, 1], [0], [0]>} : vector<2x8x16xbf16>, vector<2x8x16xbf16>, vector<2x8x8xf32> -> vector<2x8x8xf32>
    "tpu.trace_stop"() : () -> ()
    %cst_16 = arith.constant dense<0xFF800000> : vector<2x8xf32>
    %45 = vector.multi_reduction <maximumf>, %44, %cst_16 [2] : vector<2x8x8xf32> to vector<2x8xf32>
    %46 = vector.shape_cast %45 : vector<2x8xf32> to vector<2x8x1xf32>
    %47 = vector.broadcast %46 : vector<2x8x1xf32> to vector<2x8x8xf32>
    %48 = arith.subf %44, %47 : vector<2x8x8xf32>
    %49 = math.exp %48 : vector<2x8x8xf32>
    %cst_17 = arith.constant dense<0.000000e+00> : vector<2x8xf32>
    %50 = vector.multi_reduction <add>, %49, %cst_17 [2] : vector<2x8x8xf32> to vector<2x8xf32>
    %51 = vector.shape_cast %50 : vector<2x8xf32> to vector<2x8x1xf32>
    %52 = tpu.reciprocal %51 {approx = true} : vector<2x8x1xf32> -> vector<2x8x1xf32>
    %53 = vector.broadcast %52 : vector<2x8x1xf32> to vector<2x8x8xf32>
    %54 = arith.mulf %49, %53 : vector<2x8x8xf32>
    %55 = arith.truncf %54 : vector<2x8x8xf32> to vector<2x8x8xbf16>
    "tpu.trace_start"() <{level = 10 : i32, message = "bqk,bkd->bqd"}> : () -> ()
    %cst_18 = arith.constant dense<0.000000e+00> : vector<2x8x16xf32>
    %56 = tpu.matmul %55, %43, %cst_18 {dimension_numbers = #tpu.dot_dimension_numbers<[2], [1], [1], [2], [0, 0, 0, 1, 1, 2], [0], [0]>} : vector<2x8x8xbf16>, vector<2x8x16xbf16>, vector<2x8x16xf32> -> vector<2x8x16xf32>
    "tpu.trace_stop"() : () -> ()
    %57 = vector.shape_cast %56 : vector<2x8x16xf32> to vector<16x16xf32>
    %58 = arith.truncf %57 : vector<16x16xf32> to vector<16x16xbf16>
    %c16 = arith.constant 16 : index
    %c0_19 = arith.constant 0 : index
    %59 = vector.load %arg4[%c16, %c0_19] : memref<128x128xbf16, #tpu.memory_space<vmem>>, vector<16x128xbf16>
    %cst_20 = arith.constant dense<0.000000e+00> : vector<16x128xf32>
    %60 = tpu.matmul %58, %59, %cst_20 {dimension_numbers = #tpu.dot_dimension_numbers<[1], [0], [0], [1], [0, 0, 1, 1], [], []>} : vector<16x16xbf16>, vector<16x128xbf16>, vector<16x128xf32> -> vector<16x128xf32>
    %61 = arith.addf %40, %60 : vector<16x128xf32>
    %62 = vector.extract_strided_slice %12 {offsets = [0, 0, 32], sizes = [2, 8, 16], strides = [1, 1, 1]} : vector<2x8x128xbf16> to vector<2x8x16xbf16>
    %63 = vector.extract_strided_slice %15 {offsets = [0, 0, 32], sizes = [2, 8, 16], strides = [1, 1, 1]} : vector<2x8x128xbf16> to vector<2x8x16xbf16>
    %64 = vector.extract_strided_slice %18 {offsets = [0, 0, 32], sizes = [2, 8, 16], strides = [1, 1, 1]} : vector<2x8x128xbf16> to vector<2x8x16xbf16>
    "tpu.trace_start"() <{level = 10 : i32, message = "bqd,bkd->bqk"}> : () -> ()
    %cst_21 = arith.constant dense<0.000000e+00> : vector<2x8x8xf32>
    %65 = tpu.matmul %62, %63, %cst_21 {dimension_numbers = #tpu.dot_dimension_numbers<[2], [2], [1], [1], [0, 0, 0, 1, 1, 1], [0], [0]>} : vector<2x8x16xbf16>, vector<2x8x16xbf16>, vector<2x8x8xf32> -> vector<2x8x8xf32>
    "tpu.trace_stop"() : () -> ()
    %cst_22 = arith.constant dense<0xFF800000> : vector<2x8xf32>
    %66 = vector.multi_reduction <maximumf>, %65, %cst_22 [2] : vector<2x8x8xf32> to vector<2x8xf32>
    %67 = vector.shape_cast %66 : vector<2x8xf32> to vector<2x8x1xf32>
    %68 = vector.broadcast %67 : vector<2x8x1xf32> to vector<2x8x8xf32>
    %69 = arith.subf %65, %68 : vector<2x8x8xf32>
    %70 = math.exp %69 : vector<2x8x8xf32>
    %cst_23 = arith.constant dense<0.000000e+00> : vector<2x8xf32>
    %71 = vector.multi_reduction <add>, %70, %cst_23 [2] : vector<2x8x8xf32> to vector<2x8xf32>
    %72 = vector.shape_cast %71 : vector<2x8xf32> to vector<2x8x1xf32>
    %73 = tpu.reciprocal %72 {approx = true} : vector<2x8x1xf32> -> vector<2x8x1xf32>
    %74 = vector.broadcast %73 : vector<2x8x1xf32> to vector<2x8x8xf32>
    %75 = arith.mulf %70, %74 : vector<2x8x8xf32>
    %76 = arith.truncf %75 : vector<2x8x8xf32> to vector<2x8x8xbf16>
    "tpu.trace_start"() <{level = 10 : i32, message = "bqk,bkd->bqd"}> : () -> ()
    %cst_24 = arith.constant dense<0.000000e+00> : vector<2x8x16xf32>
    %77 = tpu.matmul %76, %64, %cst_24 {dimension_numbers = #tpu.dot_dimension_numbers<[2], [1], [1], [2], [0, 0, 0, 1, 1, 2], [0], [0]>} : vector<2x8x8xbf16>, vector<2x8x16xbf16>, vector<2x8x16xf32> -> vector<2x8x16xf32>
    "tpu.trace_stop"() : () -> ()
    %78 = vector.shape_cast %77 : vector<2x8x16xf32> to vector<16x16xf32>
    %79 = arith.truncf %78 : vector<16x16xf32> to vector<16x16xbf16>
    %c32 = arith.constant 32 : index
    %c0_25 = arith.constant 0 : index
    %80 = vector.load %arg4[%c32, %c0_25] : memref<128x128xbf16, #tpu.memory_space<vmem>>, vector<16x128xbf16>
    %cst_26 = arith.constant dense<0.000000e+00> : vector<16x128xf32>
    %81 = tpu.matmul %79, %80, %cst_26 {dimension_numbers = #tpu.dot_dimension_numbers<[1], [0], [0], [1], [0, 0, 1, 1], [], []>} : vector<16x16xbf16>, vector<16x128xbf16>, vector<16x128xf32> -> vector<16x128xf32>
    %82 = arith.addf %61, %81 : vector<16x128xf32>
    %83 = vector.extract_strided_slice %12 {offsets = [0, 0, 48], sizes = [2, 8, 16], strides = [1, 1, 1]} : vector<2x8x128xbf16> to vector<2x8x16xbf16>
    %84 = vector.extract_strided_slice %15 {offsets = [0, 0, 48], sizes = [2, 8, 16], strides = [1, 1, 1]} : vector<2x8x128xbf16> to vector<2x8x16xbf16>
    %85 = vector.extract_strided_slice %18 {offsets = [0, 0, 48], sizes = [2, 8, 16], strides = [1, 1, 1]} : vector<2x8x128xbf16> to vector<2x8x16xbf16>
    "tpu.trace_start"() <{level = 10 : i32, message = "bqd,bkd->bqk"}> : () -> ()
    %cst_27 = arith.constant dense<0.000000e+00> : vector<2x8x8xf32>
    %86 = tpu.matmul %83, %84, %cst_27 {dimension_numbers = #tpu.dot_dimension_numbers<[2], [2], [1], [1], [0, 0, 0, 1, 1, 1], [0], [0]>} : vector<2x8x16xbf16>, vector<2x8x16xbf16>, vector<2x8x8xf32> -> vector<2x8x8xf32>
    "tpu.trace_stop"() : () -> ()
    %cst_28 = arith.constant dense<0xFF800000> : vector<2x8xf32>
    %87 = vector.multi_reduction <maximumf>, %86, %cst_28 [2] : vector<2x8x8xf32> to vector<2x8xf32>
    %88 = vector.shape_cast %87 : vector<2x8xf32> to vector<2x8x1xf32>
    %89 = vector.broadcast %88 : vector<2x8x1xf32> to vector<2x8x8xf32>
    %90 = arith.subf %86, %89 : vector<2x8x8xf32>
    %91 = math.exp %90 : vector<2x8x8xf32>
    %cst_29 = arith.constant dense<0.000000e+00> : vector<2x8xf32>
    %92 = vector.multi_reduction <add>, %91, %cst_29 [2] : vector<2x8x8xf32> to vector<2x8xf32>
    %93 = vector.shape_cast %92 : vector<2x8xf32> to vector<2x8x1xf32>
    %94 = tpu.reciprocal %93 {approx = true} : vector<2x8x1xf32> -> vector<2x8x1xf32>
    %95 = vector.broadcast %94 : vector<2x8x1xf32> to vector<2x8x8xf32>
    %96 = arith.mulf %91, %95 : vector<2x8x8xf32>
    %97 = arith.truncf %96 : vector<2x8x8xf32> to vector<2x8x8xbf16>
    "tpu.trace_start"() <{level = 10 : i32, message = "bqk,bkd->bqd"}> : () -> ()
    %cst_30 = arith.constant dense<0.000000e+00> : vector<2x8x16xf32>
    %98 = tpu.matmul %97, %85, %cst_30 {dimension_numbers = #tpu.dot_dimension_numbers<[2], [1], [1], [2], [0, 0, 0, 1, 1, 2], [0], [0]>} : vector<2x8x8xbf16>, vector<2x8x16xbf16>, vector<2x8x16xf32> -> vector<2x8x16xf32>
    "tpu.trace_stop"() : () -> ()
    %99 = vector.shape_cast %98 : vector<2x8x16xf32> to vector<16x16xf32>
    %100 = arith.truncf %99 : vector<16x16xf32> to vector<16x16xbf16>
    %c48 = arith.constant 48 : index
    %c0_31 = arith.constant 0 : index
    %101 = vector.load %arg4[%c48, %c0_31] : memref<128x128xbf16, #tpu.memory_space<vmem>>, vector<16x128xbf16>
    %cst_32 = arith.constant dense<0.000000e+00> : vector<16x128xf32>
    %102 = tpu.matmul %100, %101, %cst_32 {dimension_numbers = #tpu.dot_dimension_numbers<[1], [0], [0], [1], [0, 0, 1, 1], [], []>} : vector<16x16xbf16>, vector<16x128xbf16>, vector<16x128xf32> -> vector<16x128xf32>
    %103 = arith.addf %82, %102 : vector<16x128xf32>
    %104 = vector.extract_strided_slice %12 {offsets = [0, 0, 64], sizes = [2, 8, 16], strides = [1, 1, 1]} : vector<2x8x128xbf16> to vector<2x8x16xbf16>
    %105 = vector.extract_strided_slice %15 {offsets = [0, 0, 64], sizes = [2, 8, 16], strides = [1, 1, 1]} : vector<2x8x128xbf16> to vector<2x8x16xbf16>
    %106 = vector.extract_strided_slice %18 {offsets = [0, 0, 64], sizes = [2, 8, 16], strides = [1, 1, 1]} : vector<2x8x128xbf16> to vector<2x8x16xbf16>
    "tpu.trace_start"() <{level = 10 : i32, message = "bqd,bkd->bqk"}> : () -> ()
    %cst_33 = arith.constant dense<0.000000e+00> : vector<2x8x8xf32>
    %107 = tpu.matmul %104, %105, %cst_33 {dimension_numbers = #tpu.dot_dimension_numbers<[2], [2], [1], [1], [0, 0, 0, 1, 1, 1], [0], [0]>} : vector<2x8x16xbf16>, vector<2x8x16xbf16>, vector<2x8x8xf32> -> vector<2x8x8xf32>
    "tpu.trace_stop"() : () -> ()
    %cst_34 = arith.constant dense<0xFF800000> : vector<2x8xf32>
    %108 = vector.multi_reduction <maximumf>, %107, %cst_34 [2] : vector<2x8x8xf32> to vector<2x8xf32>
    %109 = vector.shape_cast %108 : vector<2x8xf32> to vector<2x8x1xf32>
    %110 = vector.broadcast %109 : vector<2x8x1xf32> to vector<2x8x8xf32>
    %111 = arith.subf %107, %110 : vector<2x8x8xf32>
    %112 = math.exp %111 : vector<2x8x8xf32>
    %cst_35 = arith.constant dense<0.000000e+00> : vector<2x8xf32>
    %113 = vector.multi_reduction <add>, %112, %cst_35 [2] : vector<2x8x8xf32> to vector<2x8xf32>
    %114 = vector.shape_cast %113 : vector<2x8xf32> to vector<2x8x1xf32>
    %115 = tpu.reciprocal %114 {approx = true} : vector<2x8x1xf32> -> vector<2x8x1xf32>
    %116 = vector.broadcast %115 : vector<2x8x1xf32> to vector<2x8x8xf32>
    %117 = arith.mulf %112, %116 : vector<2x8x8xf32>
    %118 = arith.truncf %117 : vector<2x8x8xf32> to vector<2x8x8xbf16>
    "tpu.trace_start"() <{level = 10 : i32, message = "bqk,bkd->bqd"}> : () -> ()
    %cst_36 = arith.constant dense<0.000000e+00> : vector<2x8x16xf32>
    %119 = tpu.matmul %118, %106, %cst_36 {dimension_numbers = #tpu.dot_dimension_numbers<[2], [1], [1], [2], [0, 0, 0, 1, 1, 2], [0], [0]>} : vector<2x8x8xbf16>, vector<2x8x16xbf16>, vector<2x8x16xf32> -> vector<2x8x16xf32>
    "tpu.trace_stop"() : () -> ()
    %120 = vector.shape_cast %119 : vector<2x8x16xf32> to vector<16x16xf32>
    %121 = arith.truncf %120 : vector<16x16xf32> to vector<16x16xbf16>
    %c64 = arith.constant 64 : index
    %c0_37 = arith.constant 0 : index
    %122 = vector.load %arg4[%c64, %c0_37] : memref<128x128xbf16, #tpu.memory_space<vmem>>, vector<16x128xbf16>
    %cst_38 = arith.constant dense<0.000000e+00> : vector<16x128xf32>
    %123 = tpu.matmul %121, %122, %cst_38 {dimension_numbers = #tpu.dot_dimension_numbers<[1], [0], [0], [1], [0, 0, 1, 1], [], []>} : vector<16x16xbf16>, vector<16x128xbf16>, vector<16x128xf32> -> vector<16x128xf32>
    %124 = arith.addf %103, %123 : vector<16x128xf32>
    %125 = vector.extract_strided_slice %12 {offsets = [0, 0, 80], sizes = [2, 8, 16], strides = [1, 1, 1]} : vector<2x8x128xbf16> to vector<2x8x16xbf16>
    %126 = vector.extract_strided_slice %15 {offsets = [0, 0, 80], sizes = [2, 8, 16], strides = [1, 1, 1]} : vector<2x8x128xbf16> to vector<2x8x16xbf16>
    %127 = vector.extract_strided_slice %18 {offsets = [0, 0, 80], sizes = [2, 8, 16], strides = [1, 1, 1]} : vector<2x8x128xbf16> to vector<2x8x16xbf16>
    "tpu.trace_start"() <{level = 10 : i32, message = "bqd,bkd->bqk"}> : () -> ()
    %cst_39 = arith.constant dense<0.000000e+00> : vector<2x8x8xf32>
    %128 = tpu.matmul %125, %126, %cst_39 {dimension_numbers = #tpu.dot_dimension_numbers<[2], [2], [1], [1], [0, 0, 0, 1, 1, 1], [0], [0]>} : vector<2x8x16xbf16>, vector<2x8x16xbf16>, vector<2x8x8xf32> -> vector<2x8x8xf32>
    "tpu.trace_stop"() : () -> ()
    %cst_40 = arith.constant dense<0xFF800000> : vector<2x8xf32>
    %129 = vector.multi_reduction <maximumf>, %128, %cst_40 [2] : vector<2x8x8xf32> to vector<2x8xf32>
    %130 = vector.shape_cast %129 : vector<2x8xf32> to vector<2x8x1xf32>
    %131 = vector.broadcast %130 : vector<2x8x1xf32> to vector<2x8x8xf32>
    %132 = arith.subf %128, %131 : vector<2x8x8xf32>
    %133 = math.exp %132 : vector<2x8x8xf32>
    %cst_41 = arith.constant dense<0.000000e+00> : vector<2x8xf32>
    %134 = vector.multi_reduction <add>, %133, %cst_41 [2] : vector<2x8x8xf32> to vector<2x8xf32>
    %135 = vector.shape_cast %134 : vector<2x8xf32> to vector<2x8x1xf32>
    %136 = tpu.reciprocal %135 {approx = true} : vector<2x8x1xf32> -> vector<2x8x1xf32>
    %137 = vector.broadcast %136 : vector<2x8x1xf32> to vector<2x8x8xf32>
    %138 = arith.mulf %133, %137 : vector<2x8x8xf32>
    %139 = arith.truncf %138 : vector<2x8x8xf32> to vector<2x8x8xbf16>
    "tpu.trace_start"() <{level = 10 : i32, message = "bqk,bkd->bqd"}> : () -> ()
    %cst_42 = arith.constant dense<0.000000e+00> : vector<2x8x16xf32>
    %140 = tpu.matmul %139, %127, %cst_42 {dimension_numbers = #tpu.dot_dimension_numbers<[2], [1], [1], [2], [0, 0, 0, 1, 1, 2], [0], [0]>} : vector<2x8x8xbf16>, vector<2x8x16xbf16>, vector<2x8x16xf32> -> vector<2x8x16xf32>
    "tpu.trace_stop"() : () -> ()
    %141 = vector.shape_cast %140 : vector<2x8x16xf32> to vector<16x16xf32>
    %142 = arith.truncf %141 : vector<16x16xf32> to vector<16x16xbf16>
    %c80 = arith.constant 80 : index
    %c0_43 = arith.constant 0 : index
    %143 = vector.load %arg4[%c80, %c0_43] : memref<128x128xbf16, #tpu.memory_space<vmem>>, vector<16x128xbf16>
    %cst_44 = arith.constant dense<0.000000e+00> : vector<16x128xf32>
    %144 = tpu.matmul %142, %143, %cst_44 {dimension_numbers = #tpu.dot_dimension_numbers<[1], [0], [0], [1], [0, 0, 1, 1], [], []>} : vector<16x16xbf16>, vector<16x128xbf16>, vector<16x128xf32> -> vector<16x128xf32>
    %145 = arith.addf %124, %144 : vector<16x128xf32>
    %146 = vector.extract_strided_slice %12 {offsets = [0, 0, 96], sizes = [2, 8, 16], strides = [1, 1, 1]} : vector<2x8x128xbf16> to vector<2x8x16xbf16>
    %147 = vector.extract_strided_slice %15 {offsets = [0, 0, 96], sizes = [2, 8, 16], strides = [1, 1, 1]} : vector<2x8x128xbf16> to vector<2x8x16xbf16>
    %148 = vector.extract_strided_slice %18 {offsets = [0, 0, 96], sizes = [2, 8, 16], strides = [1, 1, 1]} : vector<2x8x128xbf16> to vector<2x8x16xbf16>
    "tpu.trace_start"() <{level = 10 : i32, message = "bqd,bkd->bqk"}> : () -> ()
    %cst_45 = arith.constant dense<0.000000e+00> : vector<2x8x8xf32>
    %149 = tpu.matmul %146, %147, %cst_45 {dimension_numbers = #tpu.dot_dimension_numbers<[2], [2], [1], [1], [0, 0, 0, 1, 1, 1], [0], [0]>} : vector<2x8x16xbf16>, vector<2x8x16xbf16>, vector<2x8x8xf32> -> vector<2x8x8xf32>
    "tpu.trace_stop"() : () -> ()
    %cst_46 = arith.constant dense<0xFF800000> : vector<2x8xf32>
    %150 = vector.multi_reduction <maximumf>, %149, %cst_46 [2] : vector<2x8x8xf32> to vector<2x8xf32>
    %151 = vector.shape_cast %150 : vector<2x8xf32> to vector<2x8x1xf32>
    %152 = vector.broadcast %151 : vector<2x8x1xf32> to vector<2x8x8xf32>
    %153 = arith.subf %149, %152 : vector<2x8x8xf32>
    %154 = math.exp %153 : vector<2x8x8xf32>
    %cst_47 = arith.constant dense<0.000000e+00> : vector<2x8xf32>
    %155 = vector.multi_reduction <add>, %154, %cst_47 [2] : vector<2x8x8xf32> to vector<2x8xf32>
    %156 = vector.shape_cast %155 : vector<2x8xf32> to vector<2x8x1xf32>
    %157 = tpu.reciprocal %156 {approx = true} : vector<2x8x1xf32> -> vector<2x8x1xf32>
    %158 = vector.broadcast %157 : vector<2x8x1xf32> to vector<2x8x8xf32>
    %159 = arith.mulf %154, %158 : vector<2x8x8xf32>
    %160 = arith.truncf %159 : vector<2x8x8xf32> to vector<2x8x8xbf16>
    "tpu.trace_start"() <{level = 10 : i32, message = "bqk,bkd->bqd"}> : () -> ()
    %cst_48 = arith.constant dense<0.000000e+00> : vector<2x8x16xf32>
    %161 = tpu.matmul %160, %148, %cst_48 {dimension_numbers = #tpu.dot_dimension_numbers<[2], [1], [1], [2], [0, 0, 0, 1, 1, 2], [0], [0]>} : vector<2x8x8xbf16>, vector<2x8x16xbf16>, vector<2x8x16xf32> -> vector<2x8x16xf32>
    "tpu.trace_stop"() : () -> ()
    %162 = vector.shape_cast %161 : vector<2x8x16xf32> to vector<16x16xf32>
    %163 = arith.truncf %162 : vector<16x16xf32> to vector<16x16xbf16>
    %c96 = arith.constant 96 : index
    %c0_49 = arith.constant 0 : index
    %164 = vector.load %arg4[%c96, %c0_49] : memref<128x128xbf16, #tpu.memory_space<vmem>>, vector<16x128xbf16>
    %cst_50 = arith.constant dense<0.000000e+00> : vector<16x128xf32>
    %165 = tpu.matmul %163, %164, %cst_50 {dimension_numbers = #tpu.dot_dimension_numbers<[1], [0], [0], [1], [0, 0, 1, 1], [], []>} : vector<16x16xbf16>, vector<16x128xbf16>, vector<16x128xf32> -> vector<16x128xf32>
    %166 = arith.addf %145, %165 : vector<16x128xf32>
    %167 = vector.extract_strided_slice %12 {offsets = [0, 0, 112], sizes = [2, 8, 16], strides = [1, 1, 1]} : vector<2x8x128xbf16> to vector<2x8x16xbf16>
    %168 = vector.extract_strided_slice %15 {offsets = [0, 0, 112], sizes = [2, 8, 16], strides = [1, 1, 1]} : vector<2x8x128xbf16> to vector<2x8x16xbf16>
    %169 = vector.extract_strided_slice %18 {offsets = [0, 0, 112], sizes = [2, 8, 16], strides = [1, 1, 1]} : vector<2x8x128xbf16> to vector<2x8x16xbf16>
    "tpu.trace_start"() <{level = 10 : i32, message = "bqd,bkd->bqk"}> : () -> ()
    %cst_51 = arith.constant dense<0.000000e+00> : vector<2x8x8xf32>
    %170 = tpu.matmul %167, %168, %cst_51 {dimension_numbers = #tpu.dot_dimension_numbers<[2], [2], [1], [1], [0, 0, 0, 1, 1, 1], [0], [0]>} : vector<2x8x16xbf16>, vector<2x8x16xbf16>, vector<2x8x8xf32> -> vector<2x8x8xf32>
    "tpu.trace_stop"() : () -> ()
    %cst_52 = arith.constant dense<0xFF800000> : vector<2x8xf32>
    %171 = vector.multi_reduction <maximumf>, %170, %cst_52 [2] : vector<2x8x8xf32> to vector<2x8xf32>
    %172 = vector.shape_cast %171 : vector<2x8xf32> to vector<2x8x1xf32>
    %173 = vector.broadcast %172 : vector<2x8x1xf32> to vector<2x8x8xf32>
    %174 = arith.subf %170, %173 : vector<2x8x8xf32>
    %175 = math.exp %174 : vector<2x8x8xf32>
    %cst_53 = arith.constant dense<0.000000e+00> : vector<2x8xf32>
    %176 = vector.multi_reduction <add>, %175, %cst_53 [2] : vector<2x8x8xf32> to vector<2x8xf32>
    %177 = vector.shape_cast %176 : vector<2x8xf32> to vector<2x8x1xf32>
    %178 = tpu.reciprocal %177 {approx = true} : vector<2x8x1xf32> -> vector<2x8x1xf32>
    %179 = vector.broadcast %178 : vector<2x8x1xf32> to vector<2x8x8xf32>
    %180 = arith.mulf %175, %179 : vector<2x8x8xf32>
    %181 = arith.truncf %180 : vector<2x8x8xf32> to vector<2x8x8xbf16>
    "tpu.trace_start"() <{level = 10 : i32, message = "bqk,bkd->bqd"}> : () -> ()
    %cst_54 = arith.constant dense<0.000000e+00> : vector<2x8x16xf32>
    %182 = tpu.matmul %181, %169, %cst_54 {dimension_numbers = #tpu.dot_dimension_numbers<[2], [1], [1], [2], [0, 0, 0, 1, 1, 2], [0], [0]>} : vector<2x8x8xbf16>, vector<2x8x16xbf16>, vector<2x8x16xf32> -> vector<2x8x16xf32>
    "tpu.trace_stop"() : () -> ()
    %183 = vector.shape_cast %182 : vector<2x8x16xf32> to vector<16x16xf32>
    %184 = arith.truncf %183 : vector<16x16xf32> to vector<16x16xbf16>
    %c112 = arith.constant 112 : index
    %c0_55 = arith.constant 0 : index
    %185 = vector.load %arg4[%c112, %c0_55] : memref<128x128xbf16, #tpu.memory_space<vmem>>, vector<16x128xbf16>
    %cst_56 = arith.constant dense<0.000000e+00> : vector<16x128xf32>
    %186 = tpu.matmul %184, %185, %cst_56 {dimension_numbers = #tpu.dot_dimension_numbers<[1], [0], [0], [1], [0, 0, 1, 1], [], []>} : vector<16x16xbf16>, vector<16x128xbf16>, vector<16x128xf32> -> vector<16x128xf32>
    %187 = arith.addf %166, %186 : vector<16x128xf32>
    %c0_57 = arith.constant 0 : index
    %c0_58 = arith.constant 0 : index
    %188 = vector.load %arg5[%c0_57, %c0_58] : memref<1x128xf32, #tpu.memory_space<vmem>>, vector<1x128xf32>
    %189 = vector.broadcast %188 : vector<1x128xf32> to vector<16x128xf32>
    %190 = arith.addf %187, %189 : vector<16x128xf32>
    %191 = arith.addf %1, %190 : vector<16x128xf32>
    %c0_59 = arith.constant 0 : index
    %c0_60 = arith.constant 0 : index
    %192 = vector.load %arg10[%c0_59, %c0_60] : memref<1x128xf32, #tpu.memory_space<vmem>>, vector<1x128xf32>
    %c0_61 = arith.constant 0 : index
    %c0_62 = arith.constant 0 : index
    %193 = vector.load %arg11[%c0_61, %c0_62] : memref<1x128xf32, #tpu.memory_space<vmem>>, vector<1x128xf32>
    %cst_63 = arith.constant dense<0.000000e+00> : vector<16xf32>
    %194 = vector.multi_reduction <add>, %191, %cst_63 [1] : vector<16x128xf32> to vector<16xf32>
    %195 = vector.shape_cast %194 : vector<16xf32> to vector<16x1xf32>
    %cst_64 = arith.constant 1.280000e+02 : f32
    %196 = vector.broadcast %cst_64 : f32 to vector<16x1xf32>
    %197 = arith.divf %195, %196 : vector<16x1xf32>
    %198 = vector.broadcast %197 : vector<16x1xf32> to vector<16x128xf32>
    %199 = arith.subf %191, %198 : vector<16x128xf32>
    %200 = arith.mulf %199, %199 : vector<16x128xf32>
    %cst_65 = arith.constant dense<0.000000e+00> : vector<16xf32>
    %201 = vector.multi_reduction <add>, %200, %cst_65 [1] : vector<16x128xf32> to vector<16xf32>
    %202 = vector.shape_cast %201 : vector<16xf32> to vector<16x1xf32>
    %cst_66 = arith.constant 1.280000e+02 : f32
    %203 = vector.broadcast %cst_66 : f32 to vector<16x1xf32>
    %204 = arith.divf %202, %203 : vector<16x1xf32>
    %205 = vector.broadcast %197 : vector<16x1xf32> to vector<16x128xf32>
    %206 = arith.subf %191, %205 : vector<16x128xf32>
    %cst_67 = arith.constant 9.99999974E-6 : f32
    %207 = vector.broadcast %cst_67 : f32 to vector<16x1xf32>
    %208 = arith.addf %204, %207 : vector<16x1xf32>
    %209 = math.rsqrt %208 : vector<16x1xf32>
    %210 = vector.broadcast %209 : vector<16x1xf32> to vector<16x128xf32>
    %211 = arith.mulf %206, %210 : vector<16x128xf32>
    %212 = vector.broadcast %192 : vector<1x128xf32> to vector<16x128xf32>
    %213 = arith.mulf %211, %212 : vector<16x128xf32>
    %214 = vector.broadcast %193 : vector<1x128xf32> to vector<16x128xf32>
    %215 = arith.addf %213, %214 : vector<16x128xf32>
    %216 = arith.truncf %215 : vector<16x128xf32> to vector<16x128xbf16>
    %c0_68 = arith.constant 0 : index
    %c0_69 = arith.constant 0 : index
    %217 = vector.load %arg6[%c0_68, %c0_69] : memref<128x128xbf16, #tpu.memory_space<vmem>>, vector<128x128xbf16>
    %cst_70 = arith.constant dense<0.000000e+00> : vector<16x128xf32>
    %218 = tpu.matmul %216, %217, %cst_70 {dimension_numbers = #tpu.dot_dimension_numbers<[1], [0], [0], [1], [0, 0, 1, 1], [], []>} : vector<16x128xbf16>, vector<128x128xbf16>, vector<16x128xf32> -> vector<16x128xf32>
    %c0_71 = arith.constant 0 : index
    %c0_72 = arith.constant 0 : index
    %219 = vector.load %arg7[%c0_71, %c0_72] : memref<1x128xf32, #tpu.memory_space<vmem>>, vector<1x128xf32>
    %220 = vector.broadcast %219 : vector<1x128xf32> to vector<16x128xf32>
    %221 = arith.addf %218, %220 : vector<16x128xf32>
    %cst_73 = arith.constant 0.000000e+00 : f32
    %222 = vector.broadcast %cst_73 : f32 to vector<16x128xf32>
    %223 = arith.maximumf %221, %222 : vector<16x128xf32>
    %224 = arith.truncf %223 : vector<16x128xf32> to vector<16x128xbf16>
    %c0_74 = arith.constant 0 : index
    %c0_75 = arith.constant 0 : index
    %225 = vector.load %arg8[%c0_74, %c0_75] : memref<128x128xbf16, #tpu.memory_space<vmem>>, vector<128x128xbf16>
    %cst_76 = arith.constant dense<0.000000e+00> : vector<16x128xf32>
    %226 = tpu.matmul %224, %225, %cst_76 {dimension_numbers = #tpu.dot_dimension_numbers<[1], [0], [0], [1], [0, 0, 1, 1], [], []>} : vector<16x128xbf16>, vector<128x128xbf16>, vector<16x128xf32> -> vector<16x128xf32>
    %c0_77 = arith.constant 0 : index
    %c0_78 = arith.constant 0 : index
    %227 = vector.load %arg9[%c0_77, %c0_78] : memref<1x128xf32, #tpu.memory_space<vmem>>, vector<1x128xf32>
    %228 = vector.broadcast %227 : vector<1x128xf32> to vector<16x128xf32>
    %229 = arith.addf %226, %228 : vector<16x128xf32>
    %230 = arith.addf %215, %229 : vector<16x128xf32>
    %c0_79 = arith.constant 0 : index
    %c0_80 = arith.constant 0 : index
    %231 = vector.load %arg12[%c0_79, %c0_80] : memref<1x128xf32, #tpu.memory_space<vmem>>, vector<1x128xf32>
    %c0_81 = arith.constant 0 : index
    %c0_82 = arith.constant 0 : index
    %232 = vector.load %arg13[%c0_81, %c0_82] : memref<1x128xf32, #tpu.memory_space<vmem>>, vector<1x128xf32>
    %cst_83 = arith.constant dense<0.000000e+00> : vector<16xf32>
    %233 = vector.multi_reduction <add>, %230, %cst_83 [1] : vector<16x128xf32> to vector<16xf32>
    %234 = vector.shape_cast %233 : vector<16xf32> to vector<16x1xf32>
    %cst_84 = arith.constant 1.280000e+02 : f32
    %235 = vector.broadcast %cst_84 : f32 to vector<16x1xf32>
    %236 = arith.divf %234, %235 : vector<16x1xf32>
    %237 = vector.broadcast %236 : vector<16x1xf32> to vector<16x128xf32>
    %238 = arith.subf %230, %237 : vector<16x128xf32>
    %239 = arith.mulf %238, %238 : vector<16x128xf32>
    %cst_85 = arith.constant dense<0.000000e+00> : vector<16xf32>
    %240 = vector.multi_reduction <add>, %239, %cst_85 [1] : vector<16x128xf32> to vector<16xf32>
    %241 = vector.shape_cast %240 : vector<16xf32> to vector<16x1xf32>
    %cst_86 = arith.constant 1.280000e+02 : f32
    %242 = vector.broadcast %cst_86 : f32 to vector<16x1xf32>
    %243 = arith.divf %241, %242 : vector<16x1xf32>
    %244 = vector.broadcast %236 : vector<16x1xf32> to vector<16x128xf32>
    %245 = arith.subf %230, %244 : vector<16x128xf32>
    %cst_87 = arith.constant 9.99999974E-6 : f32
    %246 = vector.broadcast %cst_87 : f32 to vector<16x1xf32>
    %247 = arith.addf %243, %246 : vector<16x1xf32>
    %248 = math.rsqrt %247 : vector<16x1xf32>
    %249 = vector.broadcast %248 : vector<16x1xf32> to vector<16x128xf32>
    %250 = arith.mulf %245, %249 : vector<16x128xf32>
    %251 = vector.broadcast %231 : vector<1x128xf32> to vector<16x128xf32>
    %252 = arith.mulf %250, %251 : vector<16x128xf32>
    %253 = vector.broadcast %232 : vector<1x128xf32> to vector<16x128xf32>
    %254 = arith.addf %252, %253 : vector<16x128xf32>
    %255 = vector.shape_cast %254 : vector<16x128xf32> to vector<2x8x128xf32>
    %c0_88 = arith.constant 0 : index
    %c0_89 = arith.constant 0 : index
    %c0_90 = arith.constant 0 : index
    %256 = vector.load %arg14[%c0_88, %c0_89, %c0_90] : memref<2x8x128xf32, #tpu.memory_space<vmem>>, vector<2x8x128xf32>
    tpu.vector_store %arg14[%c0_88, %c0_89, %c0_90], %255 {strides = array<i32>} : memref<2x8x128xf32, #tpu.memory_space<vmem>>, vector<2x8x128xf32>,
    return
  }
  func.func @transform_0(%arg0: i32) -> (i32, i32, i32) {
    %c0_i32 = arith.constant 0 : i32
    %c0_i32_0 = arith.constant 0 : i32
    %c0_i32_1 = arith.constant 0 : i32
    return %arg0, %c0_i32, %c0_i32_0 : i32, i32, i32
  }
  func.func @transform_1(%arg0: i32) -> (i32, i32) {
    %c0_i32 = arith.constant 0 : i32
    %c0_i32_0 = arith.constant 0 : i32
    %c0_i32_1 = arith.constant 0 : i32
    return %c0_i32, %c0_i32_0 : i32, i32
  }
  func.func @transform_2(%arg0: i32) -> (i32, i32) {
    %c0_i32 = arith.constant 0 : i32
    %c0_i32_0 = arith.constant 0 : i32
    %c0_i32_1 = arith.constant 0 : i32
    return %c0_i32, %c0_i32_0 : i32, i32
  }
  func.func @transform_3(%arg0: i32) -> (i32, i32) {
    %c0_i32 = arith.constant 0 : i32
    %c0_i32_0 = arith.constant 0 : i32
    %c0_i32_1 = arith.constant 0 : i32
    return %c0_i32, %c0_i32_0 : i32, i32
  }
  func.func @transform_4(%arg0: i32) -> (i32, i32) {
    %c0_i32 = arith.constant 0 : i32
    %c0_i32_0 = arith.constant 0 : i32
    %c0_i32_1 = arith.constant 0 : i32
    return %c0_i32, %c0_i32_0 : i32, i32
  }
  func.func @transform_5(%arg0: i32) -> (i32, i32) {
    %c0_i32 = arith.constant 0 : i32
    %c0_i32_0 = arith.constant 0 : i32
    %c0_i32_1 = arith.constant 0 : i32
    return %c0_i32, %c0_i32_0 : i32, i32
  }
  func.func @transform_6(%arg0: i32) -> (i32, i32) {
    %c0_i32 = arith.constant 0 : i32
    %c0_i32_0 = arith.constant 0 : i32
    %c0_i32_1 = arith.constant 0 : i32
    return %c0_i32, %c0_i32_0 : i32, i32
  }
  func.func @transform_7(%arg0: i32) -> (i32, i32) {
    %c0_i32 = arith.constant 0 : i32
    %c0_i32_0 = arith.constant 0 : i32
    %c0_i32_1 = arith.constant 0 : i32
    return %c0_i32, %c0_i32_0 : i32, i32
  }
  func.func @transform_8(%arg0: i32) -> (i32, i32) {
    %c0_i32 = arith.constant 0 : i32
    %c0_i32_0 = arith.constant 0 : i32
    %c0_i32_1 = arith.constant 0 : i32
    return %c0_i32, %c0_i32_0 : i32, i32
  }
  func.func @transform_9(%arg0: i32) -> (i32, i32) {
    %c0_i32 = arith.constant 0 : i32
    %c0_i32_0 = arith.constant 0 : i32
    %c0_i32_1 = arith.constant 0 : i32
    return %c0_i32, %c0_i32_0 : i32, i32
  }
  func.func @transform_10(%arg0: i32) -> (i32, i32) {
    %c0_i32 = arith.constant 0 : i32
    %c0_i32_0 = arith.constant 0 : i32
    %c0_i32_1 = arith.constant 0 : i32
    return %c0_i32, %c0_i32_0 : i32, i32
  }
  func.func @transform_11(%arg0: i32) -> (i32, i32) {
    %c0_i32 = arith.constant 0 : i32
    %c0_i32_0 = arith.constant 0 : i32
    %c0_i32_1 = arith.constant 0 : i32
    return %c0_i32, %c0_i32_0 : i32, i32
  }
  func.func @transform_12(%arg0: i32) -> (i32, i32) {
    %c0_i32 = arith.constant 0 : i32
    %c0_i32_0 = arith.constant 0 : i32
    %c0_i32_1 = arith.constant 0 : i32
    return %c0_i32, %c0_i32_0 : i32, i32
  }
  func.func @transform_13(%arg0: i32) -> (i32, i32, i32) {
    %c0_i32 = arith.constant 0 : i32
    %c0_i32_0 = arith.constant 0 : i32
    %c0_i32_1 = arith.constant 0 : i32
    return %arg0, %c0_i32, %c0_i32_0 : i32, i32, i32
  }
}

</mosaic_0001>

<llo_original>
// kernel: tpu_custom_call.1
$region0: #{tpu_custom_call.1}
  #allocation0 [shape = 'u32[]', space=smem, size = 0x4, offset = 0x4, fixed_abs, tag = 'smem constant byte address 0x4 - core index']
  #allocation1 [shape = 'u32[144,128]{1,0:T(1,128)}', space=vmem, size = 0x12000, scoped, tag = 'internal scratch']
  %s0 = inlined_call_operand.hbm [shape: f32[4,8,128], index: 0, kind: input, shape index: {}]
  %s1 = inlined_call_operand.hbm [shape: bf16[128,384], index: 1, kind: input, shape index: {}]
  %s2 = inlined_call_operand.vmem [shape: f32[1,384], index: 2, kind: input, shape index: {}]
  %s3 = inlined_call_operand.hbm [shape: bf16[128,128], index: 3, kind: input, shape index: {}]
  %s4 = inlined_call_operand.vmem [shape: f32[1,128], index: 4, kind: input, shape index: {}]
  %s5 = inlined_call_operand.hbm [shape: bf16[128,128], index: 5, kind: input, shape index: {}]
  %s6 = inlined_call_operand.vmem [shape: f32[1,128], index: 6, kind: input, shape index: {}]
  %s7 = inlined_call_operand.hbm [shape: bf16[128,128], index: 7, kind: input, shape index: {}]
  %s8 = inlined_call_operand.vmem [shape: f32[1,128], index: 8, kind: input, shape index: {}]
  %s9 = inlined_call_operand.vmem [shape: f32[1,128], index: 9, kind: input, shape index: {}]
  %s10 = inlined_call_operand.vmem [shape: f32[1,128], index: 10, kind: input, shape index: {}]
  %s11 = inlined_call_operand.vmem [shape: f32[1,128], index: 11, kind: input, shape index: {}]
  %s12 = inlined_call_operand.vmem [shape: f32[1,128], index: 12, kind: input, shape index: {}]
  %s13 = inlined_call_operand.hbm [shape: f32[4,8,128], index: 13, kind: output, shape index: {}]
  %s14 = sld [smem:[#allocation0]]
  $region105: #{tpu_custom_call.1} parent=0
    _
  %s16 = ssub.s32 1, %s14
  %s17 = scalar_select 0, %s16, %s14
  $region1: #{tpu_custom_call.1} parent=0
    #allocation2 [shape = 'u8[16384]{0}', space=vmem, size = 0x4000, scoped, tag = 'input window, operand 0']
    #allocation3 [shape = 's32[2]{0}', space=sflag, size = 0x8, scoped, tag = 'scoped memory for tpu_custom_call.1']
    #allocation4 [shape = 's32[2]{0}', space=sflag, size = 0x8, scoped, tag = 'scoped memory for tpu_custom_call.1']
    #allocation5 [shape = 'u8[98304]{0}', space=vmem, size = 0x18000, scoped, tag = 'input window, operand 1, single buffered']
    #allocation6 [shape = 's32[1]{0}', space=sflag, size = 0x4, scoped, tag = 'scoped memory for tpu_custom_call.1']
    #allocation7 [shape = 'u8[32768]{0}', space=vmem, size = 0x8000, scoped, tag = 'input window, operand 3, single buffered']
    #allocation8 [shape = 'u8[32768]{0}', space=vmem, size = 0x8000, scoped, tag = 'input window, operand 5, single buffered']
    #allocation9 [shape = 's32[1]{0}', space=sflag, size = 0x4, scoped, tag = 'scoped memory for tpu_custom_call.1']
    #allocation10 [shape = 'u8[32768]{0}', space=vmem, size = 0x8000, scoped, tag = 'input window, operand 7, single buffered']
    #allocation11 [shape = 'u8[16384]{0}', space=vmem, size = 0x4000, scoped, tag = 'output window, operand 0']
    %18 = vsyncpa [#allocation3], 0
    %s19 = scalar_lea.sflag [#allocation3], 1
    %20 = vsyncpa %s19, 0
    %21 = vsyncpa [#allocation6], 0
    %22 = vsyncpa [#allocation9], 0
    %23 = vsyncpa [#allocation4], 0
    %s24 = scalar_lea.sflag [#allocation4], 1
    %25 = vsyncpa %s24, 0
    loop: start=0, step=1, limit=4
    $region2: #{tpu_custom_call.1} parent=1 // loop_pre_header
      _
    $region3: #{tpu_custom_call.1} parent=1 // loop_header
      %s27 = sphi 0, %s31
      %p28 = scmp.ge.s32.totalorder %s27, 4
      %s37 = sphi 0, %s39
      %s40 = sphi 0, %s37
      %s41 = sphi 0, %s40
      %s57 = sphi 0, %s41
      %s61 = sphi 0, %s61
      %s63 = sphi 0, %s61
      %s64 = sphi 0, %s63
      %s78 = sphi 0, %s64
      %s82 = sphi 0, %s82
      %s84 = sphi 0, %s82
      %s85 = sphi 0, %s84
      %s99 = sphi 0, %s85
      %s103 = sphi 0, %s103
      %s105 = sphi 0, %s103
      %s106 = sphi 0, %s105
      %s120 = sphi 0, %s106
      %s124 = sphi 0, %s124
      %s126 = sphi 0, %s124
      %s127 = sphi 0, %s126
      %s141 = sphi 0, %s127
      %s145 = sphi 0, %s145
      %s147 = sphi 0, %s145
      %s148 = sphi 0, %s147
      %s162 = sphi 0, %s148
      %s166 = sphi 0, %s166
      %s168 = sphi 0, %s166
      %s169 = sphi 0, %s168
      %s183 = sphi 0, %s169
      %s187 = sphi 0, %s187
      %s189 = sphi 0, %s187
      %s190 = sphi 0, %s189
      %s204 = sphi 0, %s190
      %s208 = sphi 0, %s208
      %s210 = sphi 0, %s208
      %s211 = sphi 0, %s210
      %s225 = sphi 0, %s211
      %s229 = sphi 0, %s229
      %s231 = sphi 0, %s229
      %s232 = sphi 0, %s231
      %s246 = sphi 0, %s232
      %s250 = sphi 0, %s250
      %s252 = sphi 0, %s250
      %s253 = sphi 0, %s252
      %s267 = sphi 0, %s253
      %s271 = sphi 0, %s271
      %s273 = sphi 0, %s271
      %s274 = sphi 0, %s273
      %s288 = sphi 0, %s274
      %s292 = sphi 0, %s292
      %s294 = sphi 0, %s292
      %s295 = sphi 0, %s294
      %s309 = sphi 0, %s295
      %s315 = sphi 0, %s317
      %s318 = sphi 0, %s315
      %s319 = sphi 0, %s318
      %s335 = sphi 0, %s319
    $region4: #{tpu_custom_call.1} parent=1 // loop_header_branch
      %30 = sbr.rel (%p28) target = $region8
    $region5: #{tpu_custom_call.1} parent=1 // loop_body
      %s32 = ssub.s32 %s27, 1
      %s33 = ssub.s32 %s27, 2
      %s34 = sadd.s32 %s27, 1
      %s35 = ssub.s32 %s27, %s34
      %p36 = scmp.eq.s32.totalorder %s35, 0
      %s38 = sadd.s32 %s37, 1
      %s39 = scalar_select %p36, %s37, %s38
      %p42 = pneg %p36
      %p43 = scmp.eq.s32.totalorder %s27, 1
      %p44 = por %p42, %p43
      %p45 = scmp.ne.s32.totalorder %s37, %s40
      %p46 = scmp.eq.s32.totalorder %s27, 0
      %p47 = por %p45, %p46
      %p48 = scmp.ne.s32.totalorder %s37, %s40
      %p49 = scmp.eq.s32.totalorder %s32, 1
      %p50 = por %p48, %p49
      %p51 = scmp.ne.s32.totalorder %s40, %s41
      %p52 = scmp.eq.s32.totalorder %s32, 0
      %p53 = por %p51, %p52
      %p54 = scmp.ne.s32.totalorder %s40, %s41
      %p55 = scmp.eq.s32.totalorder %s33, 1
      %p56 = por %p54, %p55
      %p58 = scmp.ne.s32.totalorder %s41, %s57
      %p59 = scmp.eq.s32.totalorder %s33, 0
      %p60 = por %p58, %p59
      %s62 = sadd.s32 %s61, 1
      %p65 = scmp.eq.s32.totalorder %s27, 1
      %p66 = scmp.ne.s32.totalorder %s61, %s63
      %p67 = scmp.eq.s32.totalorder %s27, 0
      %p68 = por %p66, %p67
      %p69 = scmp.ne.s32.totalorder %s61, %s63
      %p70 = scmp.eq.s32.totalorder %s32, 1
      %p71 = por %p69, %p70
      %p72 = scmp.ne.s32.totalorder %s63, %s64
      %p73 = scmp.eq.s32.totalorder %s32, 0
      %p74 = por %p72, %p73
      %p75 = scmp.ne.s32.totalorder %s63, %s64
      %p76 = scmp.eq.s32.totalorder %s33, 1
      %p77 = por %p75, %p76
      %p79 = scmp.ne.s32.totalorder %s64, %s78
      %p80 = scmp.eq.s32.totalorder %s33, 0
      %p81 = por %p79, %p80
      %s83 = sadd.s32 %s82, 1
      %p86 = scmp.eq.s32.totalorder %s27, 1
      %p87 = scmp.ne.s32.totalorder %s82, %s84
      %p88 = scmp.eq.s32.totalorder %s27, 0
      %p89 = por %p87, %p88
      %p90 = scmp.ne.s32.totalorder %s82, %s84
      %p91 = scmp.eq.s32.totalorder %s32, 1
      %p92 = por %p90, %p91
      %p93 = scmp.ne.s32.totalorder %s84, %s85
      %p94 = scmp.eq.s32.totalorder %s32, 0
      %p95 = por %p93, %p94
      %p96 = scmp.ne.s32.totalorder %s84, %s85
      %p97 = scmp.eq.s32.totalorder %s33, 1
      %p98 = por %p96, %p97
      %p100 = scmp.ne.s32.totalorder %s85, %s99
      %p101 = scmp.eq.s32.totalorder %s33, 0
      %p102 = por %p100, %p101
      %s104 = sadd.s32 %s103, 1
      %p107 = scmp.eq.s32.totalorder %s27, 1
      %p108 = scmp.ne.s32.totalorder %s103, %s105
      %p109 = scmp.eq.s32.totalorder %s27, 0
      %p110 = por %p108, %p109
      %p111 = scmp.ne.s32.totalorder %s103, %s105
      %p112 = scmp.eq.s32.totalorder %s32, 1
      %p113 = por %p111, %p112
      %p114 = scmp.ne.s32.totalorder %s105, %s106
      %p115 = scmp.eq.s32.totalorder %s32, 0
      %p116 = por %p114, %p115
      %p117 = scmp.ne.s32.totalorder %s105, %s106
      %p118 = scmp.eq.s32.totalorder %s33, 1
      %p119 = por %p117, %p118
      %p121 = scmp.ne.s32.totalorder %s106, %s120
      %p122 = scmp.eq.s32.totalorder %s33, 0
      %p123 = por %p121, %p122
      %s125 = sadd.s32 %s124, 1
      %p128 = scmp.eq.s32.totalorder %s27, 1
      %p129 = scmp.ne.s32.totalorder %s124, %s126
      %p130 = scmp.eq.s32.totalorder %s27, 0
      %p131 = por %p129, %p130
      %p132 = scmp.ne.s32.totalorder %s124, %s126
      %p133 = scmp.eq.s32.totalorder %s32, 1
      %p134 = por %p132, %p133
      %p135 = scmp.ne.s32.totalorder %s126, %s127
      %p136 = scmp.eq.s32.totalorder %s32, 0
      %p137 = por %p135, %p136
      %p138 = scmp.ne.s32.totalorder %s126, %s127
      %p139 = scmp.eq.s32.totalorder %s33, 1
      %p140 = por %p138, %p139
      %p142 = scmp.ne.s32.totalorder %s127, %s141
      %p143 = scmp.eq.s32.totalorder %s33, 0
      %p144 = por %p142, %p143
      %s146 = sadd.s32 %s145, 1
      %p149 = scmp.eq.s32.totalorder %s27, 1
      %p150 = scmp.ne.s32.totalorder %s145, %s147
      %p151 = scmp.eq.s32.totalorder %s27, 0
      %p152 = por %p150, %p151
      %p153 = scmp.ne.s32.totalorder %s145, %s147
      %p154 = scmp.eq.s32.totalorder %s32, 1
      %p155 = por %p153, %p154
      %p156 = scmp.ne.s32.totalorder %s147, %s148
      %p157 = scmp.eq.s32.totalorder %s32, 0
      %p158 = por %p156, %p157
      %p159 = scmp.ne.s32.totalorder %s147, %s148
      %p160 = scmp.eq.s32.totalorder %s33, 1
      %p161 = por %p159, %p160
      %p163 = scmp.ne.s32.totalorder %s148, %s162
      %p164 = scmp.eq.s32.totalorder %s33, 0
      %p165 = por %p163, %p164
      %s167 = sadd.s32 %s166, 1
      %p170 = scmp.eq.s32.totalorder %s27, 1
      %p171 = scmp.ne.s32.totalorder %s166, %s168
      %p172 = scmp.eq.s32.totalorder %s27, 0
      %p173 = por %p171, %p172
      %p174 = scmp.ne.s32.totalorder %s166, %s168
      %p175 = scmp.eq.s32.totalorder %s32, 1
      %p176 = por %p174, %p175
      %p177 = scmp.ne.s32.totalorder %s168, %s169
      %p178 = scmp.eq.s32.totalorder %s32, 0
      %p179 = por %p177, %p178
      %p180 = scmp.ne.s32.totalorder %s168, %s169
      %p181 = scmp.eq.s32.totalorder %s33, 1
      %p182 = por %p180, %p181
      %p184 = scmp.ne.s32.totalorder %s169, %s183
      %p185 = scmp.eq.s32.totalorder %s33, 0
      %p186 = por %p184, %p185
      %s188 = sadd.s32 %s187, 1
      %p191 = scmp.eq.s32.totalorder %s27, 1
      %p192 = scmp.ne.s32.totalorder %s187, %s189
      %p193 = scmp.eq.s32.totalorder %s27, 0
      %p194 = por %p192, %p193
      %p195 = scmp.ne.s32.totalorder %s187, %s189
      %p196 = scmp.eq.s32.totalorder %s32, 1
      %p197 = por %p195, %p196
      %p198 = scmp.ne.s32.totalorder %s189, %s190
      %p199 = scmp.eq.s32.totalorder %s32, 0
      %p200 = por %p198, %p199
      %p201 = scmp.ne.s32.totalorder %s189, %s190
      %p202 = scmp.eq.s32.totalorder %s33, 1
      %p203 = por %p201, %p202
      %p205 = scmp.ne.s32.totalorder %s190, %s204
      %p206 = scmp.eq.s32.totalorder %s33, 0
      %p207 = por %p205, %p206
      %s209 = sadd.s32 %s208, 1
      %p212 = scmp.eq.s32.totalorder %s27, 1
      %p213 = scmp.ne.s32.totalorder %s208, %s210
      %p214 = scmp.eq.s32.totalorder %s27, 0
      %p215 = por %p213, %p214
      %p216 = scmp.ne.s32.totalorder %s208, %s210
      %p217 = scmp.eq.s32.totalorder %s32, 1
      %p218 = por %p216, %p217
      %p219 = scmp.ne.s32.totalorder %s210, %s211
      %p220 = scmp.eq.s32.totalorder %s32, 0
      %p221 = por %p219, %p220
      %p222 = scmp.ne.s32.totalorder %s210, %s211
      %p223 = scmp.eq.s32.totalorder %s33, 1
      %p224 = por %p222, %p223
      %p226 = scmp.ne.s32.totalorder %s211, %s225
      %p227 = scmp.eq.s32.totalorder %s33, 0
      %p228 = por %p226, %p227
      %s230 = sadd.s32 %s229, 1
      %p233 = scmp.eq.s32.totalorder %s27, 1
      %p234 = scmp.ne.s32.totalorder %s229, %s231
      %p235 = scmp.eq.s32.totalorder %s27, 0
      %p236 = por %p234, %p235
      %p237 = scmp.ne.s32.totalorder %s229, %s231
      %p238 = scmp.eq.s32.totalorder %s32, 1
      %p239 = por %p237, %p238
      %p240 = scmp.ne.s32.totalorder %s231, %s232
      %p241 = scmp.eq.s32.totalorder %s32, 0
      %p242 = por %p240, %p241
      %p243 = scmp.ne.s32.totalorder %s231, %s232
      %p244 = scmp.eq.s32.totalorder %s33, 1
      %p245 = por %p243, %p244
      %p247 = scmp.ne.s32.totalorder %s232, %s246
      %p248 = scmp.eq.s32.totalorder %s33, 0
      %p249 = por %p247, %p248
      %s251 = sadd.s32 %s250, 1
      %p254 = scmp.eq.s32.totalorder %s27, 1
      %p255 = scmp.ne.s32.totalorder %s250, %s252
      %p256 = scmp.eq.s32.totalorder %s27, 0
      %p257 = por %p255, %p256
      %p258 = scmp.ne.s32.totalorder %s250, %s252
      %p259 = scmp.eq.s32.totalorder %s32, 1
      %p260 = por %p258, %p259
      %p261 = scmp.ne.s32.totalorder %s252, %s253
      %p262 = scmp.eq.s32.totalorder %s32, 0
      %p263 = por %p261, %p262
      %p264 = scmp.ne.s32.totalorder %s252, %s253
      %p265 = scmp.eq.s32.totalorder %s33, 1
      %p266 = por %p264, %p265
      %p268 = scmp.ne.s32.totalorder %s253, %s267
      %p269 = scmp.eq.s32.totalorder %s33, 0
      %p270 = por %p268, %p269
      %s272 = sadd.s32 %s271, 1
      %p275 = scmp.eq.s32.totalorder %s27, 1
      %p276 = scmp.ne.s32.totalorder %s271, %s273
      %p277 = scmp.eq.s32.totalorder %s27, 0
      %p278 = por %p276, %p277
      %p279 = scmp.ne.s32.totalorder %s271, %s273
      %p280 = scmp.eq.s32.totalorder %s32, 1
      %p281 = por %p279, %p280
      %p282 = scmp.ne.s32.totalorder %s273, %s274
      %p283 = scmp.eq.s32.totalorder %s32, 0
      %p284 = por %p282, %p283
      %p285 = scmp.ne.s32.totalorder %s273, %s274
      %p286 = scmp.eq.s32.totalorder %s33, 1
      %p287 = por %p285, %p286
      %p289 = scmp.ne.s32.totalorder %s274, %s288
      %p290 = scmp.eq.s32.totalorder %s33, 0
      %p291 = por %p289, %p290
      %s293 = sadd.s32 %s292, 1
      %p296 = scmp.eq.s32.totalorder %s27, 1
      %p297 = scmp.ne.s32.totalorder %s292, %s294
      %p298 = scmp.eq.s32.totalorder %s27, 0
      %p299 = por %p297, %p298
      %p300 = scmp.ne.s32.totalorder %s292, %s294
      %p301 = scmp.eq.s32.totalorder %s32, 1
      %p302 = por %p300, %p301
      %p303 = scmp.ne.s32.totalorder %s294, %s295
      %p304 = scmp.eq.s32.totalorder %s32, 0
      %p305 = por %p303, %p304
      %p306 = scmp.ne.s32.totalorder %s294, %s295
      %p307 = scmp.eq.s32.totalorder %s33, 1
      %p308 = por %p306, %p307
      %p310 = scmp.ne.s32.totalorder %s295, %s309
      %p311 = scmp.eq.s32.totalorder %s33, 0
      %p312 = por %p310, %p311
      %s313 = ssub.s32 %s27, %s34
      %p314 = scmp.eq.s32.totalorder %s313, 0
      %s316 = sadd.s32 %s315, 1
      %s317 = scalar_select %p314, %s315, %s316
      %p320 = pneg %p314
      %p321 = scmp.eq.s32.totalorder %s27, 1
      %p322 = por %p320, %p321
      %p323 = scmp.ne.s32.totalorder %s315, %s318
      %p324 = scmp.eq.s32.totalorder %s27, 0
      %p325 = por %p323, %p324
      %p326 = scmp.ne.s32.totalorder %s315, %s318
      %p327 = scmp.eq.s32.totalorder %s32, 1
      %p328 = por %p326, %p327
      %p329 = scmp.ne.s32.totalorder %s318, %s319
      %p330 = scmp.eq.s32.totalorder %s32, 0
      %p331 = por %p329, %p330
      %p332 = scmp.ne.s32.totalorder %s318, %s319
      %p333 = scmp.eq.s32.totalorder %s33, 1
      %p334 = por %p332, %p333
      %p336 = scmp.ne.s32.totalorder %s319, %s335
      %p337 = scmp.eq.s32.totalorder %s33, 0
      %p338 = por %p336, %p337
      %p339 = scmp.le.s32.totalorder 1, %s27
      %p340 = scmp.lt.s32.totalorder %s27, 3
      %p341 = pnand %p339, %p340
      %p342 = pneg %p341
      // Predicated region
      $region9: #{tpu_custom_call.1} parent=5 // pred_check
        _
      $region10: #{tpu_custom_call.1} parent=5 // pred_check_branch
        %344 = sbr.rel (%p341) target = $region12
      $region11: #{tpu_custom_call.1} parent=5 // pred_region
        %s345 = ssub.s32 %s27, 1
        // Predicated region
        $region13: #{tpu_custom_call.1} parent=11 // pred_check
          %p346 = pneg %p74
        $region14: #{tpu_custom_call.1} parent=11 // pred_check_branch
          %348 = sbr.rel (%p346) target = $region16
        $region15: #{tpu_custom_call.1} parent=11 // pred_region
          %s350 = ssub.s32 3072, 3072
          %351 = vsyncadd [#allocation6], %s350
          %s352 = sshll.u32 [#allocation5], 4
          %s353 = int_to_ptr.vmem [resolvable:$true] %s352
          %358 = dma.hbm_to_vmem [thread:$0]  %s1, 3072, %s353, [#allocation6], 192, 192, 12
        $region16: #{tpu_custom_call.1} parent=11 // pred_fallthru
          _
        // Predicated region
        $region17: #{tpu_custom_call.1} parent=11 // pred_check
          %p359 = pneg %p95
        $region18: #{tpu_custom_call.1} parent=11 // pred_check_branch
          %361 = sbr.rel (%p359) target = $region20
        $region19: #{tpu_custom_call.1} parent=11 // pred_region
          _
        $region20: #{tpu_custom_call.1} parent=11 // pred_fallthru
          _
        // Predicated region
        $region21: #{tpu_custom_call.1} parent=11 // pred_check
          %p362 = pneg %p116
        $region22: #{tpu_custom_call.1} parent=11 // pred_check_branch
          %364 = sbr.rel (%p362) target = $region24
        $region23: #{tpu_custom_call.1} parent=11 // pred_region
          %s366 = ssub.s32 1024, 1024
          %367 = vsyncadd [#allocation6], %s366
          %s368 = sshll.u32 [#allocation7], 4
          %s369 = int_to_ptr.vmem [resolvable:$true] %s368
          %374 = dma.hbm_to_vmem [thread:$0]  %s3, 1024, %s369, [#allocation6], 64, 64, 4
        $region24: #{tpu_custom_call.1} parent=11 // pred_fallthru
          _
        // Predicated region
        $region25: #{tpu_custom_call.1} parent=11 // pred_check
          %p375 = pneg %p137
        $region26: #{tpu_custom_call.1} parent=11 // pred_check_branch
          %377 = sbr.rel (%p375) target = $region28
        $region27: #{tpu_custom_call.1} parent=11 // pred_region
          _
        $region28: #{tpu_custom_call.1} parent=11 // pred_fallthru
          _
        // Predicated region
        $region29: #{tpu_custom_call.1} parent=11 // pred_check
          %p378 = pneg %p158
        $region30: #{tpu_custom_call.1} parent=11 // pred_check_branch
          %380 = sbr.rel (%p378) target = $region32
        $region31: #{tpu_custom_call.1} parent=11 // pred_region
          %s382 = ssub.s32 1024, 1024
          %383 = vsyncadd [#allocation9], %s382
          %s384 = sshll.u32 [#allocation8], 4
          %s385 = int_to_ptr.vmem [resolvable:$true] %s384
          %390 = dma.hbm_to_vmem [thread:$0]  %s5, 1024, %s385, [#allocation9], 64, 64, 4
        $region32: #{tpu_custom_call.1} parent=11 // pred_fallthru
          _
        // Predicated region
        $region33: #{tpu_custom_call.1} parent=11 // pred_check
          %p391 = pneg %p179
        $region34: #{tpu_custom_call.1} parent=11 // pred_check_branch
          %393 = sbr.rel (%p391) target = $region36
        $region35: #{tpu_custom_call.1} parent=11 // pred_region
          _
        $region36: #{tpu_custom_call.1} parent=11 // pred_fallthru
          _
        // Predicated region
        $region37: #{tpu_custom_call.1} parent=11 // pred_check
          %p394 = pneg %p200
        $region38: #{tpu_custom_call.1} parent=11 // pred_check_branch
          %396 = sbr.rel (%p394) target = $region40
        $region39: #{tpu_custom_call.1} parent=11 // pred_region
          %s398 = ssub.s32 1024, 1024
          %399 = vsyncadd [#allocation9], %s398
          %s400 = sshll.u32 [#allocation10], 4
          %s401 = int_to_ptr.vmem [resolvable:$true] %s400
          %406 = dma.hbm_to_vmem [thread:$0]  %s7, 1024, %s401, [#allocation9], 64, 64, 4
        $region40: #{tpu_custom_call.1} parent=11 // pred_fallthru
          _
        // Predicated region
        $region41: #{tpu_custom_call.1} parent=11 // pred_check
          %p407 = pneg %p221
        $region42: #{tpu_custom_call.1} parent=11 // pred_check_branch
          %409 = sbr.rel (%p407) target = $region44
        $region43: #{tpu_custom_call.1} parent=11 // pred_region
          _
        $region44: #{tpu_custom_call.1} parent=11 // pred_fallthru
          _
        // Predicated region
        $region45: #{tpu_custom_call.1} parent=11 // pred_check
          %p410 = pneg %p242
        $region46: #{tpu_custom_call.1} parent=11 // pred_check_branch
          %412 = sbr.rel (%p410) target = $region48
        $region47: #{tpu_custom_call.1} parent=11 // pred_region
          _
        $region48: #{tpu_custom_call.1} parent=11 // pred_fallthru
          _
        // Predicated region
        $region49: #{tpu_custom_call.1} parent=11 // pred_check
          %p413 = pneg %p263
        $region50: #{tpu_custom_call.1} parent=11 // pred_check_branch
          %415 = sbr.rel (%p413) target = $region52
        $region51: #{tpu_custom_call.1} parent=11 // pred_region
          _
        $region52: #{tpu_custom_call.1} parent=11 // pred_fallthru
          _
        // Predicated region
        $region53: #{tpu_custom_call.1} parent=11 // pred_check
          %p416 = pneg %p284
        $region54: #{tpu_custom_call.1} parent=11 // pred_check_branch
          %418 = sbr.rel (%p416) target = $region56
        $region55: #{tpu_custom_call.1} parent=11 // pred_region
          _
        $region56: #{tpu_custom_call.1} parent=11 // pred_fallthru
          _
        // Predicated region
        $region57: #{tpu_custom_call.1} parent=11 // pred_check
          %p419 = pneg %p305
        $region58: #{tpu_custom_call.1} parent=11 // pred_check_branch
          %421 = sbr.rel (%p419) target = $region60
        $region59: #{tpu_custom_call.1} parent=11 // pred_region
          _
        $region60: #{tpu_custom_call.1} parent=11 // pred_fallthru
          _
      $region12: #{tpu_custom_call.1} parent=5 // pred_fallthru
        _
      %p422 = scmp.lt.s32.totalorder %s27, 2
      // Predicated region
      $region61: #{tpu_custom_call.1} parent=5 // pred_check
        %p423 = pneg %p422
      $region62: #{tpu_custom_call.1} parent=5 // pred_check_branch
        %425 = sbr.rel (%p423) target = $region64
      $region63: #{tpu_custom_call.1} parent=5 // pred_region
        // Predicated region
        $region65: #{tpu_custom_call.1} parent=63 // pred_check
          %p426 = pneg %p47
        $region66: #{tpu_custom_call.1} parent=63 // pred_check_branch
          %428 = sbr.rel (%p426) target = $region68
        $region67: #{tpu_custom_call.1} parent=63 // pred_region
          %s429 = sand.u32 %s37, 1
          %s430 = scalar_lea.sflag [#allocation3], %s429
          %s431 = sand.u32 %s37, 1
          %s432 = smul.addr %s431, 16
          %s433 = scalar_lea.vmem [#allocation2], %s432
          %s434 = smul.u32 2, %s27
          %s436 = ssub.s32 256, 256
          %437 = vsyncadd %s430, %s436
          %s438 = smul.addr %s434, 128
          %s439 = scalar_lea.hbm %s0, %s438
          %s440 = sshll.u32 %s433, 4
          %s441 = int_to_ptr.vmem [resolvable:$true] %s440
          %446 = dma.hbm_to_vmem [thread:$0]  %s439, 256, %s441, %s430, 128, 128, 8
        $region68: #{tpu_custom_call.1} parent=63 // pred_fallthru
          _
      $region64: #{tpu_custom_call.1} parent=5 // pred_fallthru
        _
      %p447 = scmp.le.s32.totalorder 1, %s27
      %p448 = scmp.lt.s32.totalorder %s27, 3
      %p449 = pnand %p447, %p448
      %p450 = pneg %p449
      // Predicated region
      $region69: #{tpu_custom_call.1} parent=5 // pred_check
        _
      $region70: #{tpu_custom_call.1} parent=5 // pred_check_branch
        %452 = sbr.rel (%p449) target = $region72
      $region71: #{tpu_custom_call.1} parent=5 // pred_region
        %s453 = ssub.s32 %s27, 1
        %s454 = sand.u32 %s40, 1
        %s455 = scalar_lea.sflag [#allocation3], %s454
        %s456 = sand.u32 %s40, 1
        %s457 = smul.addr %s456, 16
        %s458 = scalar_lea.vmem [#allocation2], %s457
        // Predicated region
        $region73: #{tpu_custom_call.1} parent=71 // pred_check
          %p459 = pneg %p53
        $region74: #{tpu_custom_call.1} parent=71 // pred_check_branch
          %461 = sbr.rel (%p459) target = $region76
        $region75: #{tpu_custom_call.1} parent=71 // pred_region
          %462 = dma.done %s455, 256
        $region76: #{tpu_custom_call.1} parent=71 // pred_fallthru
          _
        // Predicated region
        $region77: #{tpu_custom_call.1} parent=71 // pred_check
          %p463 = pneg %p74
        $region78: #{tpu_custom_call.1} parent=71 // pred_check_branch
          %465 = sbr.rel (%p463) target = $region80
        $region79: #{tpu_custom_call.1} parent=71 // pred_region
          %466 = dma.done [#allocation6], 3072
        $region80: #{tpu_custom_call.1} parent=71 // pred_fallthru
          _
        // Predicated region
        $region81: #{tpu_custom_call.1} parent=71 // pred_check
          %p467 = pneg %p116
        $region82: #{tpu_custom_call.1} parent=71 // pred_check_branch
          %469 = sbr.rel (%p467) target = $region84
        $region83: #{tpu_custom_call.1} parent=71 // pred_region
          %470 = dma.done [#allocation6], 1024
        $region84: #{tpu_custom_call.1} parent=71 // pred_fallthru
          _
        // Predicated region
        $region85: #{tpu_custom_call.1} parent=71 // pred_check
          %p471 = pneg %p158
        $region86: #{tpu_custom_call.1} parent=71 // pred_check_branch
          %473 = sbr.rel (%p471) target = $region88
        $region87: #{tpu_custom_call.1} parent=71 // pred_region
          %474 = dma.done [#allocation9], 1024
        $region88: #{tpu_custom_call.1} parent=71 // pred_fallthru
          _
        // Predicated region
        $region89: #{tpu_custom_call.1} parent=71 // pred_check
          %p475 = pneg %p200
        $region90: #{tpu_custom_call.1} parent=71 // pred_check_branch
          %477 = sbr.rel (%p475) target = $region92
        $region91: #{tpu_custom_call.1} parent=71 // pred_region
          %478 = dma.done [#allocation9], 1024
        $region92: #{tpu_custom_call.1} parent=71 // pred_fallthru
          _
        %s479 = sand.u32 %s40, 1
        %s480 = scalar_lea.sflag [#allocation3], %s479
        %s481 = sand.u32 %s40, 1
        %s482 = smul.addr %s481, 16
        %s483 = scalar_lea.vmem [#allocation2], %s482
        %p484 = pneg %p53
        %p485 = pneg %p50
        %p486 = pneg %p74
        %p487 = pneg %p71
        %p488 = pneg %p95
        %p489 = pneg %p92
        %p490 = pneg %p116
        %p491 = pneg %p113
        %p492 = pneg %p137
        %p493 = pneg %p134
        %p494 = pneg %p158
        %p495 = pneg %p155
        %p496 = pneg %p179
        %p497 = pneg %p176
        %p498 = pneg %p200
        %p499 = pneg %p197
        %p500 = pneg %p221
        %p501 = pneg %p218
        %p502 = pneg %p242
        %p503 = pneg %p239
        %p504 = pneg %p263
        %p505 = pneg %p260
        %p506 = pneg %p284
        %p507 = pneg %p281
        %p508 = pneg %p305
        %p509 = pneg %p302
        %p510 = pneg %p331
        %p511 = pneg %p328
        %s512 = sand.u32 %s318, 1
        %s513 = scalar_lea.sflag [#allocation4], %s512
        %s514 = sand.u32 %s318, 1
        %s515 = smul.addr %s514, 16
        %s516 = scalar_lea.vmem [#allocation11], %s515
        %s517 = smul.u32 2, %s32
        %s518 = smul.u32 2, %s32
        %v520 = vld [vmem:[%s458] sm:$0xff]
        %v521 = vld [vmem:[%s458 + $0x8] sm:$0xff]
        %v522 = vpack.c.bf16 %v521, %v520
        %v523 = vld [vmem:[#allocation5] sm:$0xff]
        %v524 = vld [vmem:[#allocation5 + $0x8] sm:$0xf]
        %v525 = vld [vmem:[#allocation5 + $0xc] sm:$0xff]
        %v526 = vld [vmem:[#allocation5 + $0x14] sm:$0xf]
        %v527 = vld [vmem:[#allocation5 + $0x18] sm:$0xff]
        %v528 = vld [vmem:[#allocation5 + $0x20] sm:$0xf]
        %v529 = vld [vmem:[#allocation5 + $0x24] sm:$0xff]
        %v530 = vld [vmem:[#allocation5 + $0x2c] sm:$0xf]
        %v531 = vld [vmem:[#allocation5 + $0x30] sm:$0xff]
        %v532 = vld [vmem:[#allocation5 + $0x38] sm:$0xf]
        %v533 = vld [vmem:[#allocation5 + $0x3c] sm:$0xff]
        %v534 = vld [vmem:[#allocation5 + $0x44] sm:$0xf]
        %v535 = vld [vmem:[#allocation5 + $0x48] sm:$0xff]
        %v536 = vld [vmem:[#allocation5 + $0x50] sm:$0xf]
        %v537 = vld [vmem:[#allocation5 + $0x54] sm:$0xff]
        %v538 = vld [vmem:[#allocation5 + $0x5c] sm:$0xf]
        %v539 = vld [vmem:[#allocation5 + $0x60] sm:$0xff]
        %v540 = vld [vmem:[#allocation5 + $0x68] sm:$0xf]
        %v541 = vld [vmem:[#allocation5 + $0x6c] sm:$0xff]
        %v542 = vld [vmem:[#allocation5 + $0x74] sm:$0xf]
        %v543 = vld [vmem:[#allocation5 + $0x78] sm:$0xff]
        %v544 = vld [vmem:[#allocation5 + $0x80] sm:$0xf]
        %v545 = vld [vmem:[#allocation5 + $0x84] sm:$0xff]
        %v546 = vld [vmem:[#allocation5 + $0x8c] sm:$0xf]
        %v547 = vld [vmem:[#allocation5 + $0x90] sm:$0xff]
        %v548 = vld [vmem:[#allocation5 + $0x98] sm:$0xf]
        %v549 = vld [vmem:[#allocation5 + $0x9c] sm:$0xff]
        %v550 = vld [vmem:[#allocation5 + $0xa4] sm:$0xf]
        %v551 = vld [vmem:[#allocation5 + $0xa8] sm:$0xff]
        %v552 = vld [vmem:[#allocation5 + $0xb0] sm:$0xf]
        %v553 = vld [vmem:[#allocation5 + $0xb4] sm:$0xff]
        %v554 = vld [vmem:[#allocation5 + $0xbc] sm:$0xf]
        %v555 = vld [vmem:[%s2] sm:$0x7]
        %v557 = vlaneseq
        %v558 = vshrl.u32 %v557, 7
        %v559 = vsub.s32 0, %v558
        %v560 = vrot.slane %v555, %v559
        %v561 = vlaneseq
        %v562 = vshrl.u32 %v561, 7
        %v563 = vsub.s32 1, %v562
        %v564 = vrot.slane %v555, %v563
        %v565 = vlaneseq
        %v566 = vshrl.u32 %v565, 7
        %v567 = vsub.s32 2, %v566
        %v568 = vrot.slane %v555, %v567
        %v604 = vunpack.c.l.b16 %v523
        %v605 = vunpack.c.h.b16 %v523
        %v606 = vunpack.c.l.b16 %v524
        %v607 = vunpack.c.l.b16 %v525
        %v608 = vunpack.c.h.b16 %v525
        %v609 = vunpack.c.l.b16 %v526
        %v610 = vunpack.c.l.b16 %v527
        %v611 = vunpack.c.h.b16 %v527
        %v612 = vunpack.c.l.b16 %v528
        %v613 = vunpack.c.l.b16 %v529
        %v614 = vunpack.c.h.b16 %v529
        %v615 = vunpack.c.l.b16 %v530
        %v616 = vunpack.c.l.b16 %v531
        %v617 = vunpack.c.h.b16 %v531
        %v618 = vunpack.c.l.b16 %v532
        %v619 = vunpack.c.l.b16 %v533
        %v620 = vunpack.c.h.b16 %v533
        %v621 = vunpack.c.l.b16 %v534
        %v622 = vunpack.c.l.b16 %v535
        %v623 = vunpack.c.h.b16 %v535
        %v624 = vunpack.c.l.b16 %v536
        %v625 = vunpack.c.l.b16 %v537
        %v626 = vunpack.c.h.b16 %v537
        %v627 = vunpack.c.l.b16 %v538
        %v628 = vunpack.c.l.b16 %v539
        %v629 = vunpack.c.h.b16 %v539
        %v630 = vunpack.c.l.b16 %v540
        %v631 = vunpack.c.l.b16 %v541
        %v632 = vunpack.c.h.b16 %v541
        %v633 = vunpack.c.l.b16 %v542
        %v634 = vunpack.c.l.b16 %v543
        %v635 = vunpack.c.h.b16 %v543
        %v636 = vunpack.c.l.b16 %v544
        %v637 = vunpack.c.l.b16 %v545
        %v638 = vunpack.c.h.b16 %v545
        %v639 = vunpack.c.l.b16 %v546
        %v640 = vunpack.c.l.b16 %v547
        %v641 = vunpack.c.h.b16 %v547
        %v642 = vunpack.c.l.b16 %v548
        %v643 = vunpack.c.l.b16 %v549
        %v644 = vunpack.c.h.b16 %v549
        %v645 = vunpack.c.l.b16 %v550
        %v646 = vunpack.c.l.b16 %v551
        %v647 = vunpack.c.h.b16 %v551
        %v648 = vunpack.c.l.b16 %v552
        %v649 = vunpack.c.l.b16 %v553
        %v650 = vunpack.c.h.b16 %v553
        %v651 = vunpack.c.l.b16 %v554
        %v652 = vpack.c.b16 %v607, %v604
        %v653 = vpack.c.b16 %v608, %v605
        %v654 = vpack.c.b16 %v609, %v606
        %v655 = vpack.c.b16 %v613, %v610
        %v656 = vpack.c.b16 %v614, %v611
        %v657 = vpack.c.b16 %v615, %v612
        %v658 = vpack.c.b16 %v619, %v616
        %v659 = vpack.c.b16 %v620, %v617
        %v660 = vpack.c.b16 %v621, %v618
        %v661 = vpack.c.b16 %v625, %v622
        %v662 = vpack.c.b16 %v626, %v623
        %v663 = vpack.c.b16 %v627, %v624
        %v664 = vpack.c.b16 %v631, %v628
        %v665 = vpack.c.b16 %v632, %v629
        %v666 = vpack.c.b16 %v633, %v630
        %v667 = vpack.c.b16 %v637, %v634
        %v668 = vpack.c.b16 %v638, %v635
        %v669 = vpack.c.b16 %v639, %v636
        %v670 = vpack.c.b16 %v643, %v640
        %v671 = vpack.c.b16 %v644, %v641
        %v672 = vpack.c.b16 %v645, %v642
        %v673 = vpack.c.b16 %v649, %v646
        %v674 = vpack.c.b16 %v650, %v647
        %v675 = vpack.c.b16 %v651, %v648
        %700 = vmatprep.subr.bf16.mxu0 %v653
        %701 = vmatpush1.bf16.msra.mxu0 %v652
        %702 = vmatprep.subr.bf16.mxu0 %v656
        %703 = vmatpush1.bf16.msra.mxu0 %v655
        %704 = vmatprep.subr.bf16.mxu0 %v659
        %705 = vmatpush1.bf16.msra.mxu0 %v658
        %706 = vmatprep.subr.bf16.mxu0 %v662
        %707 = vmatpush1.bf16.msra.mxu0 %v661
        %708 = vmatprep.subr.bf16.mxu0 %v665
        %709 = vmatpush1.bf16.msra.mxu0 %v664
        %710 = vmatprep.subr.bf16.mxu0 %v668
        %711 = vmatpush1.bf16.msra.mxu0 %v667
        %712 = vmatprep.subr.bf16.mxu0 %v671
        %713 = vmatpush1.bf16.msra.mxu0 %v670
        %714 = vmatprep.subr.bf16.mxu0 %v674
        %715 = vmatpush1.bf16.msra.mxu0 %v673
        %716 = vmatprep.subr.bf16.mxu0 0
        %717 = vmatpush1.bf16.msra.mxu0 0
        %718 = vmatprep.subr.bf16.mxu0 0
        %719 = vmatpush1.bf16.msra.mxu0 0
        %720 = vmatprep.subr.bf16.mxu0 0
        %721 = vmatpush1.bf16.msra.mxu0 0
        %722 = vmatprep.subr.bf16.mxu0 0
        %723 = vmatpush1.bf16.msra.mxu0 0
        %724 = vmatprep.subr.bf16.mxu0 0
        %725 = vmatpush1.bf16.msra.mxu0 0
        %726 = vmatprep.subr.bf16.mxu0 0
        %727 = vmatpush1.bf16.msra.mxu0 0
        %728 = vmatprep.subr.bf16.mxu0 0
        %729 = vmatpush1.bf16.msra.mxu0 0
        %730 = vmatprep.subr.bf16.mxu0 0
        %731 = vmatpush1.bf16.msra.mxu0 0
        %732 = vmatprep.mubr.bf16.mxu0 0
        %733 = vmatmul.mubr.bf16.gmra.mrb[0].mxu0 %v522
        %v734 = vpop.f32.mrb[0].mxu0
        %v735 = vadd.f32 %v560, %v734
        %v736 = vpop.f32.mrb[0].mxu0
        %v737 = vadd.f32 %v564, %v736
        %v738 = vpop.f32.mrb[0].mxu0
        %v739 = vadd.f32 %v560, %v738
        %v740 = vpop.f32.mrb[0].mxu0
        %v741 = vadd.f32 %v564, %v740
        %742 = vdwg.mxu0
        %743 = vmatprep.subr.bf16.mxu0 0
        %744 = vmatpush1.bf16.msra.mxu0 %v654
        %745 = vmatprep.subr.bf16.mxu0 0
        %746 = vmatpush1.bf16.msra.mxu0 %v657
        %747 = vmatprep.subr.bf16.mxu0 0
        %748 = vmatpush1.bf16.msra.mxu0 %v660
        %749 = vmatprep.subr.bf16.mxu0 0
        %750 = vmatpush1.bf16.msra.mxu0 %v663
        %751 = vmatprep.subr.bf16.mxu0 0
        %752 = vmatpush1.bf16.msra.mxu0 %v666
        %753 = vmatprep.subr.bf16.mxu0 0
        %754 = vmatpush1.bf16.msra.mxu0 %v669
        %755 = vmatprep.subr.bf16.mxu0 0
        %756 = vmatpush1.bf16.msra.mxu0 %v672
        %757 = vmatprep.subr.bf16.mxu0 0
        %758 = vmatpush1.bf16.msra.mxu0 %v675
        %759 = vmatprep.subr.bf16.mxu0 0
        %760 = vmatpush1.bf16.msra.mxu0 0
        %761 = vmatprep.subr.bf16.mxu0 0
        %762 = vmatpush1.bf16.msra.mxu0 0
        %763 = vmatprep.subr.bf16.mxu0 0
        %764 = vmatpush1.bf16.msra.mxu0 0
        %765 = vmatprep.subr.bf16.mxu0 0
        %766 = vmatpush1.bf16.msra.mxu0 0
        %767 = vmatprep.subr.bf16.mxu0 0
        %768 = vmatpush1.bf16.msra.mxu0 0
        %769 = vmatprep.subr.bf16.mxu0 0
        %770 = vmatpush1.bf16.msra.mxu0 0
        %771 = vmatprep.subr.bf16.mxu0 0
        %772 = vmatpush1.bf16.msra.mxu0 0
        %773 = vmatprep.subr.bf16.mxu0 0
        %774 = vmatpush1.bf16.msra.mxu0 0
        %775 = vmatprep.mubr.bf16.mxu0 0
        %776 = vmatmul.mubr.bf16.gmra.mrb[0].mxu0 %v522
        %v777 = vpop.f32.mrb[0].mxu0
        %v778 = vadd.f32 %v568, %v777
        %v779 = vpop.f32.mrb[0].mxu0
        %v780 = vpop.f32.mrb[0].mxu0
        %v781 = vadd.f32 %v568, %v780
        %v782 = vpop.f32.mrb[0].mxu0
        %783 = vdwg.mxu0
        %v784 = vmul.f32 %v735, 0.25
        %v785 = vmul.f32 %v739, 0.25
        %v786 = vpack.c.bf16 %v784, %v784
        %v787 = vpack.c.bf16 %v785, %v785
        %v788 = vpack.c.bf16 %v737, %v737
        %v789 = vpack.c.bf16 %v741, %v741
        %v790 = vpack.c.bf16 %v778, %v778
        %v791 = vpack.c.bf16 %v781, %v781
        %vm792 = vcmask 130048
        %v794 = vsel %vm792, %v786, 0
        %v797 = vsel %vm792, %v788, 0
        %799 = vmatprep.subr.bf16.mxu0 0
        %800 = vmatpush1.bf16.xpose.msra.mxu0 %v797
        %801 = vmatprep.subr.bf16.mxu0 0
        %802 = vmatpush1.bf16.xpose.msra.mxu0 0
        %803 = vmatprep.subr.bf16.mxu0 0
        %804 = vmatpush1.bf16.xpose.msra.mxu0 0
        %805 = vmatprep.subr.bf16.mxu0 0
        %806 = vmatpush1.bf16.xpose.msra.mxu0 0
        %807 = vmatprep.subr.bf16.mxu0 0
        %808 = vmatpush1.bf16.xpose.msra.mxu0 0
        %809 = vmatprep.subr.bf16.mxu0 0
        %810 = vmatpush1.bf16.xpose.msra.mxu0 0
        %811 = vmatprep.subr.bf16.mxu0 0
        %812 = vmatpush1.bf16.xpose.msra.mxu0 0
        %813 = vmatprep.subr.bf16.mxu0 0
        %814 = vmatpush1.bf16.xpose.msra.mxu0 0
        %815 = vmatprep.subr.bf16.mxu0 0
        %816 = vmatpush1.bf16.xpose.msra.mxu0 0
        %817 = vmatprep.subr.bf16.mxu0 0
        %818 = vmatpush1.bf16.xpose.msra.mxu0 0
        %819 = vmatprep.subr.bf16.mxu0 0
        %820 = vmatpush1.bf16.xpose.msra.mxu0 0
        %821 = vmatprep.subr.bf16.mxu0 0
        %822 = vmatpush1.bf16.xpose.msra.mxu0 0
        %823 = vmatprep.subr.bf16.mxu0 0
        %824 = vmatpush1.bf16.xpose.msra.mxu0 0
        %825 = vmatprep.subr.bf16.mxu0 0
        %826 = vmatpush1.bf16.xpose.msra.mxu0 0
        %827 = vmatprep.subr.bf16.mxu0 0
        %828 = vmatpush1.bf16.xpose.msra.mxu0 0
        %829 = vmatprep.subr.bf16.mxu0 0
        %830 = vmatpush1.bf16.xpose.msra.mxu0 0
        %831 = vmatprep.mubr.bf16.mxu0 0
        %832 = vmatmul.mubr.bf16.gmra.mrb[0].mxu0 %v794
        %v833 = vpop.f32.mrb[0].mxu0
        %v834 = vadd.f32 0.0, %v833
        %v835 = vpop.f32.mrb[0].mxu0
        %v836 = vpop.f32.mrb[0].mxu0
        %v837 = vpop.f32.mrb[0].mxu0
        %838 = vdwg.mxu0
        %v840 = vsel %vm792, %v787, 0
        %v843 = vsel %vm792, %v789, 0
        %845 = vmatprep.subr.bf16.mxu0 0
        %846 = vmatpush1.bf16.xpose.msra.mxu0 %v843
        %847 = vmatprep.subr.bf16.mxu0 0
        %848 = vmatpush1.bf16.xpose.msra.mxu0 0
        %849 = vmatprep.subr.bf16.mxu0 0
        %850 = vmatpush1.bf16.xpose.msra.mxu0 0
        %851 = vmatprep.subr.bf16.mxu0 0
        %852 = vmatpush1.bf16.xpose.msra.mxu0 0
        %853 = vmatprep.subr.bf16.mxu0 0
        %854 = vmatpush1.bf16.xpose.msra.mxu0 0
        %855 = vmatprep.subr.bf16.mxu0 0
        %856 = vmatpush1.bf16.xpose.msra.mxu0 0
        %857 = vmatprep.subr.bf16.mxu0 0
        %858 = vmatpush1.bf16.xpose.msra.mxu0 0
        %859 = vmatprep.subr.bf16.mxu0 0
        %860 = vmatpush1.bf16.xpose.msra.mxu0 0
        %861 = vmatprep.subr.bf16.mxu0 0
        %862 = vmatpush1.bf16.xpose.msra.mxu0 0
        %863 = vmatprep.subr.bf16.mxu0 0
        %864 = vmatpush1.bf16.xpose.msra.mxu0 0
        %865 = vmatprep.subr.bf16.mxu0 0
        %866 = vmatpush1.bf16.xpose.msra.mxu0 0
        %867 = vmatprep.subr.bf16.mxu0 0
        %868 = vmatpush1.bf16.xpose.msra.mxu0 0
        %869 = vmatprep.subr.bf16.mxu0 0
        %870 = vmatpush1.bf16.xpose.msra.mxu0 0
        %871 = vmatprep.subr.bf16.mxu0 0
        %872 = vmatpush1.bf16.xpose.msra.mxu0 0
        %873 = vmatprep.subr.bf16.mxu0 0
        %874 = vmatpush1.bf16.xpose.msra.mxu0 0
        %875 = vmatprep.subr.bf16.mxu0 0
        %876 = vmatpush1.bf16.xpose.msra.mxu0 0
        %877 = vmatprep.mubr.bf16.mxu0 0
        %878 = vmatmul.mubr.bf16.gmra.mrb[0].mxu0 %v840
        %v879 = vpop.f32.mrb[0].mxu0
        %v880 = vadd.f32 0.0, %v879
        %v881 = vpop.f32.mrb[0].mxu0
        %v882 = vpop.f32.mrb[0].mxu0
        %v883 = vpop.f32.mrb[0].mxu0
        %884 = vdwg.mxu0
        %vm885 = vcmask 64512
        %v886 = vsel %vm885, %v834, -inf
        %887 = vmax.xlane.f32.xlu0 %v886
        %v888 = vpop.xlane.xlu0 %887
        %v889 = vsel %vm885, %v880, -inf
        %890 = vmax.xlane.f32.xlu0 %v889
        %v891 = vpop.xlane.xlu0 %890
        %v892 = vsub.f32 %v834, %v888
        %v893 = vsub.f32 %v880, %v891
        %v894 = vmul.f32 %v892, 1.442695
        %v895 = vpow.pop %v894
        %v896 = vmul.f32 %v893, 1.442695
        %v897 = vpow.pop %v896
        %v898 = vsel %vm885, %v895, 0.0
        %899 = vadd.xlane.f32.xlu0 %v898
        %v900 = vpop.xlane.xlu0 %899
        %v901 = vsel %vm885, %v897, 0.0
        %902 = vadd.xlane.f32.xlu0 %v901
        %v903 = vpop.xlane.xlu0 %902
        %v904 = vrcp.pop %v900
        %v905 = vrcp.pop %v903
        %v906 = vmul.f32 %v895, %v904
        %v907 = vmul.f32 %v897, %v905
        %v908 = vpack.c.bf16 %v906, %v906
        %v909 = vpack.c.bf16 %v907, %v907
        %v911 = vsel %vm885, %v908, 0
        %vm913 = vcmask 1043456
        %v915 = vsel %vm913, %v790, 0
        %917 = vmatprep.subr.bf16.mxu0 0
        %918 = vmatpush1.bf16.msra.mxu0 %v915
        %919 = vmatprep.subr.bf16.mxu0 0
        %920 = vmatpush1.bf16.msra.mxu0 0
        %921 = vmatprep.subr.bf16.mxu0 0
        %922 = vmatpush1.bf16.msra.mxu0 0
        %923 = vmatprep.subr.bf16.mxu0 0
        %924 = vmatpush1.bf16.msra.mxu0 0
        %925 = vmatprep.subr.bf16.mxu0 0
        %926 = vmatpush1.bf16.msra.mxu0 0
        %927 = vmatprep.subr.bf16.mxu0 0
        %928 = vmatpush1.bf16.msra.mxu0 0
        %929 = vmatprep.subr.bf16.mxu0 0
        %930 = vmatpush1.bf16.msra.mxu0 0
        %931 = vmatprep.subr.bf16.mxu0 0
        %932 = vmatpush1.bf16.msra.mxu0 0
        %933 = vmatprep.subr.bf16.mxu0 0
        %934 = vmatpush1.bf16.msra.mxu0 0
        %935 = vmatprep.subr.bf16.mxu0 0
        %936 = vmatpush1.bf16.msra.mxu0 0
        %937 = vmatprep.subr.bf16.mxu0 0
        %938 = vmatpush1.bf16.msra.mxu0 0
        %939 = vmatprep.subr.bf16.mxu0 0
        %940 = vmatpush1.bf16.msra.mxu0 0
        %941 = vmatprep.subr.bf16.mxu0 0
        %942 = vmatpush1.bf16.msra.mxu0 0
        %943 = vmatprep.subr.bf16.mxu0 0
        %944 = vmatpush1.bf16.msra.mxu0 0
        %945 = vmatprep.subr.bf16.mxu0 0
        %946 = vmatpush1.bf16.msra.mxu0 0
        %947 = vmatprep.subr.bf16.mxu0 0
        %948 = vmatpush1.bf16.msra.mxu0 0
        %949 = vmatprep.mubr.bf16.mxu0 0
        %950 = vmatmul.mubr.bf16.gmra.mrb[0].mxu0 %v911
        %v951 = vpop.f32.mrb[0].mxu0
        %v952 = vadd.f32 0.0, %v951
        %v953 = vpop.f32.mrb[0].mxu0
        %v954 = vpop.f32.mrb[0].mxu0
        %v955 = vpop.f32.mrb[0].mxu0
        %956 = vdwg.mxu0
        %v958 = vsel %vm885, %v909, 0
        %v961 = vsel %vm913, %v791, 0
        %963 = vmatprep.subr.bf16.mxu0 0
        %964 = vmatpush1.bf16.msra.mxu0 %v961
        %965 = vmatprep.subr.bf16.mxu0 0
        %966 = vmatpush1.bf16.msra.mxu0 0
        %967 = vmatprep.subr.bf16.mxu0 0
        %968 = vmatpush1.bf16.msra.mxu0 0
        %969 = vmatprep.subr.bf16.mxu0 0
        %970 = vmatpush1.bf16.msra.mxu0 0
        %971 = vmatprep.subr.bf16.mxu0 0
        %972 = vmatpush1.bf16.msra.mxu0 0
        %973 = vmatprep.subr.bf16.mxu0 0
        %974 = vmatpush1.bf16.msra.mxu0 0
        %975 = vmatprep.subr.bf16.mxu0 0
        %976 = vmatpush1.bf16.msra.mxu0 0
        %977 = vmatprep.subr.bf16.mxu0 0
        %978 = vmatpush1.bf16.msra.mxu0 0
        %979 = vmatprep.subr.bf16.mxu0 0
        %980 = vmatpush1.bf16.msra.mxu0 0
        %981 = vmatprep.subr.bf16.mxu0 0
        %982 = vmatpush1.bf16.msra.mxu0 0
        %983 = vmatprep.subr.bf16.mxu0 0
        %984 = vmatpush1.bf16.msra.mxu0 0
        %985 = vmatprep.subr.bf16.mxu0 0
        %986 = vmatpush1.bf16.msra.mxu0 0
        %987 = vmatprep.subr.bf16.mxu0 0
        %988 = vmatpush1.bf16.msra.mxu0 0
        %989 = vmatprep.subr.bf16.mxu0 0
        %990 = vmatpush1.bf16.msra.mxu0 0
        %991 = vmatprep.subr.bf16.mxu0 0
        %992 = vmatpush1.bf16.msra.mxu0 0
        %993 = vmatprep.subr.bf16.mxu0 0
        %994 = vmatpush1.bf16.msra.mxu0 0
        %995 = vmatprep.mubr.bf16.mxu0 0
        %996 = vmatmul.mubr.bf16.gmra.mrb[0].mxu0 %v958
        %v997 = vpop.f32.mrb[0].mxu0
        %v998 = vadd.f32 0.0, %v997
        %v999 = vpop.f32.mrb[0].mxu0
        %v1000 = vpop.f32.mrb[0].mxu0
        %v1001 = vpop.f32.mrb[0].mxu0
        %1002 = vdwg.mxu0
        %v1003 = vpack.c.bf16 %v998, %v952
        %v1004 = vld [vmem:[#allocation7] sm:$0xf]
        %v1005 = vld [vmem:[#allocation7 + $0x4] sm:$0xf]
        %1007 = vrot.lane.b32.xlu0 %v786, 112
        %v1008 = vpop.permute.xlu0 %1007
        %1010 = vrot.lane.b32.xlu0 %v788, 112
        %v1011 = vpop.permute.xlu0 %1010
        %v1013 = vsel %vm792, %v1008, 0
        %v1016 = vsel %vm792, %v1011, 0
        %1018 = vmatprep.subr.bf16.mxu0 0
        %1019 = vmatpush1.bf16.xpose.msra.mxu0 %v1016
        %1020 = vmatprep.subr.bf16.mxu0 0
        %1021 = vmatpush1.bf16.xpose.msra.mxu0 0
        %1022 = vmatprep.subr.bf16.mxu0 0
        %1023 = vmatpush1.bf16.xpose.msra.mxu0 0
        %1024 = vmatprep.subr.bf16.mxu0 0
        %1025 = vmatpush1.bf16.xpose.msra.mxu0 0
        %1026 = vmatprep.subr.bf16.mxu0 0
        %1027 = vmatpush1.bf16.xpose.msra.mxu0 0
        %1028 = vmatprep.subr.bf16.mxu0 0
        %1029 = vmatpush1.bf16.xpose.msra.mxu0 0
        %1030 = vmatprep.subr.bf16.mxu0 0
        %1031 = vmatpush1.bf16.xpose.msra.mxu0 0
        %1032 = vmatprep.subr.bf16.mxu0 0
        %1033 = vmatpush1.bf16.xpose.msra.mxu0 0
        %1034 = vmatprep.subr.bf16.mxu0 0
        %1035 = vmatpush1.bf16.xpose.msra.mxu0 0
        %1036 = vmatprep.subr.bf16.mxu0 0
        %1037 = vmatpush1.bf16.xpose.msra.mxu0 0
        %1038 = vmatprep.subr.bf16.mxu0 0
        %1039 = vmatpush1.bf16.xpose.msra.mxu0 0
        %1040 = vmatprep.subr.bf16.mxu0 0
        %1041 = vmatpush1.bf16.xpose.msra.mxu0 0
        %1042 = vmatprep.subr.bf16.mxu0 0
        %1043 = vmatpush1.bf16.xpose.msra.mxu0 0
        %1044 = vmatprep.subr.bf16.mxu0 0
        %1045 = vmatpush1.bf16.xpose.msra.mxu0 0
        %1046 = vmatprep.subr.bf16.mxu0 0
        %1047 = vmatpush1.bf16.xpose.msra.mxu0 0
        %1048 = vmatprep.subr.bf16.mxu0 0
        %1049 = vmatpush1.bf16.xpose.msra.mxu0 0
        %1050 = vmatprep.mubr.bf16.mxu0 0
        %1051 = vmatmul.mubr.bf16.gmra.mrb[0].mxu0 %v1013
        %v1052 = vpop.f32.mrb[0].mxu0
        %v1053 = vadd.f32 0.0, %v1052
        %v1054 = vpop.f32.mrb[0].mxu0
        %v1055 = vpop.f32.mrb[0].mxu0
        %v1056 = vpop.f32.mrb[0].mxu0
        %1057 = vdwg.mxu0
        %1059 = vrot.lane.b32.xlu0 %v787, 112
        %v1060 = vpop.permute.xlu0 %1059
        %1062 = vrot.lane.b32.xlu0 %v789, 112
        %v1063 = vpop.permute.xlu0 %1062
        %v1065 = vsel %vm792, %v1060, 0
        %v1068 = vsel %vm792, %v1063, 0
        %1070 = vmatprep.subr.bf16.mxu0 0
        %1071 = vmatpush1.bf16.xpose.msra.mxu0 %v1068
        %1072 = vmatprep.subr.bf16.mxu0 0
        %1073 = vmatpush1.bf16.xpose.msra.mxu0 0
        %1074 = vmatprep.subr.bf16.mxu0 0
        %1075 = vmatpush1.bf16.xpose.msra.mxu0 0
        %1076 = vmatprep.subr.bf16.mxu0 0
        %1077 = vmatpush1.bf16.xpose.msra.mxu0 0
        %1078 = vmatprep.subr.bf16.mxu0 0
        %1079 = vmatpush1.bf16.xpose.msra.mxu0 0
        %1080 = vmatprep.subr.bf16.mxu0 0
        %1081 = vmatpush1.bf16.xpose.msra.mxu0 0
        %1082 = vmatprep.subr.bf16.mxu0 0
        %1083 = vmatpush1.bf16.xpose.msra.mxu0 0
        %1084 = vmatprep.subr.bf16.mxu0 0
        %1085 = vmatpush1.bf16.xpose.msra.mxu0 0
        %1086 = vmatprep.subr.bf16.mxu0 0
        %1087 = vmatpush1.bf16.xpose.msra.mxu0 0
        %1088 = vmatprep.subr.bf16.mxu0 0
        %1089 = vmatpush1.bf16.xpose.msra.mxu0 0
        %1090 = vmatprep.subr.bf16.mxu0 0
        %1091 = vmatpush1.bf16.xpose.msra.mxu0 0
        %1092 = vmatprep.subr.bf16.mxu0 0
        %1093 = vmatpush1.bf16.xpose.msra.mxu0 0
        %1094 = vmatprep.subr.bf16.mxu0 0
        %1095 = vmatpush1.bf16.xpose.msra.mxu0 0
        %1096 = vmatprep.subr.bf16.mxu0 0
        %1097 = vmatpush1.bf16.xpose.msra.mxu0 0
        %1098 = vmatprep.subr.bf16.mxu0 0
        %1099 = vmatpush1.bf16.xpose.msra.mxu0 0
        %1100 = vmatprep.subr.bf16.mxu0 0
        %1101 = vmatpush1.bf16.xpose.msra.mxu0 0
        %1102 = vmatprep.mubr.bf16.mxu0 0
        %1103 = vmatmul.mubr.bf16.gmra.mrb[0].mxu0 %v1065
        %v1104 = vpop.f32.mrb[0].mxu0
        %v1105 = vadd.f32 0.0, %v1104
        %v1106 = vpop.f32.mrb[0].mxu0
        %v1107 = vpop.f32.mrb[0].mxu0
        %v1108 = vpop.f32.mrb[0].mxu0
        %1109 = vdwg.mxu0
        %v1110 = vsel %vm885, %v1053, -inf
        %1111 = vmax.xlane.f32.xlu0 %v1110
        %v1112 = vpop.xlane.xlu0 %1111
        %v1113 = vsel %vm885, %v1105, -inf
        %1114 = vmax.xlane.f32.xlu0 %v1113
        %v1115 = vpop.xlane.xlu0 %1114
        %v1116 = vsub.f32 %v1053, %v1112
        %v1117 = vsub.f32 %v1105, %v1115
        %v1118 = vmul.f32 %v1116, 1.442695
        %v1119 = vpow.pop %v1118
        %v1120 = vmul.f32 %v1117, 1.442695
        %v1121 = vpow.pop %v1120
        %v1122 = vsel %vm885, %v1119, 0.0
        %1123 = vadd.xlane.f32.xlu0 %v1122
        %v1124 = vpop.xlane.xlu0 %1123
        %v1125 = vsel %vm885, %v1121, 0.0
        %1126 = vadd.xlane.f32.xlu0 %v1125
        %v1127 = vpop.xlane.xlu0 %1126
        %v1128 = vrcp.pop %v1124
        %v1129 = vrcp.pop %v1127
        %v1130 = vmul.f32 %v1119, %v1128
        %v1131 = vmul.f32 %v1121, %v1129
        %v1132 = vpack.c.bf16 %v1130, %v1130
        %v1133 = vpack.c.bf16 %v1131, %v1131
        %1135 = vrot.lane.b32.xlu0 %v790, 112
        %v1136 = vpop.permute.xlu0 %1135
        %v1138 = vsel %vm885, %v1132, 0
        %v1141 = vsel %vm913, %v1136, 0
        %1143 = vmatprep.subr.bf16.mxu0 0
        %1144 = vmatpush1.bf16.msra.mxu0 %v1141
        %1145 = vmatprep.subr.bf16.mxu0 0
        %1146 = vmatpush1.bf16.msra.mxu0 0
        %1147 = vmatprep.subr.bf16.mxu0 0
        %1148 = vmatpush1.bf16.msra.mxu0 0
        %1149 = vmatprep.subr.bf16.mxu0 0
        %1150 = vmatpush1.bf16.msra.mxu0 0
        %1151 = vmatprep.subr.bf16.mxu0 0
        %1152 = vmatpush1.bf16.msra.mxu0 0
        %1153 = vmatprep.subr.bf16.mxu0 0
        %1154 = vmatpush1.bf16.msra.mxu0 0
        %1155 = vmatprep.subr.bf16.mxu0 0
        %1156 = vmatpush1.bf16.msra.mxu0 0
        %1157 = vmatprep.subr.bf16.mxu0 0
        %1158 = vmatpush1.bf16.msra.mxu0 0
        %1159 = vmatprep.subr.bf16.mxu0 0
        %1160 = vmatpush1.bf16.msra.mxu0 0
        %1161 = vmatprep.subr.bf16.mxu0 0
        %1162 = vmatpush1.bf16.msra.mxu0 0
        %1163 = vmatprep.subr.bf16.mxu0 0
        %1164 = vmatpush1.bf16.msra.mxu0 0
        %1165 = vmatprep.subr.bf16.mxu0 0
        %1166 = vmatpush1.bf16.msra.mxu0 0
        %1167 = vmatprep.subr.bf16.mxu0 0
        %1168 = vmatpush1.bf16.msra.mxu0 0
        %1169 = vmatprep.subr.bf16.mxu0 0
        %1170 = vmatpush1.bf16.msra.mxu0 0
        %1171 = vmatprep.subr.bf16.mxu0 0
        %1172 = vmatpush1.bf16.msra.mxu0 0
        %1173 = vmatprep.subr.bf16.mxu0 0
        %1174 = vmatpush1.bf16.msra.mxu0 0
        %1175 = vmatprep.mubr.bf16.mxu0 0
        %1176 = vmatmul.mubr.bf16.gmra.mrb[0].mxu0 %v1138
        %v1177 = vpop.f32.mrb[0].mxu0
        %v1178 = vadd.f32 0.0, %v1177
        %v1179 = vpop.f32.mrb[0].mxu0
        %v1180 = vpop.f32.mrb[0].mxu0
        %v1181 = vpop.f32.mrb[0].mxu0
        %1182 = vdwg.mxu0
        %1184 = vrot.lane.b32.xlu0 %v791, 112
        %v1185 = vpop.permute.xlu0 %1184
        %v1187 = vsel %vm885, %v1133, 0
        %v1190 = vsel %vm913, %v1185, 0
        %1192 = vmatprep.subr.bf16.mxu0 0
        %1193 = vmatpush1.bf16.msra.mxu0 %v1190
        %1194 = vmatprep.subr.bf16.mxu0 0
        %1195 = vmatpush1.bf16.msra.mxu0 0
        %1196 = vmatprep.subr.bf16.mxu0 0
        %1197 = vmatpush1.bf16.msra.mxu0 0
        %1198 = vmatprep.subr.bf16.mxu0 0
        %1199 = vmatpush1.bf16.msra.mxu0 0
        %1200 = vmatprep.subr.bf16.mxu0 0
        %1201 = vmatpush1.bf16.msra.mxu0 0
        %1202 = vmatprep.subr.bf16.mxu0 0
        %1203 = vmatpush1.bf16.msra.mxu0 0
        %1204 = vmatprep.subr.bf16.mxu0 0
        %1205 = vmatpush1.bf16.msra.mxu0 0
        %1206 = vmatprep.subr.bf16.mxu0 0
        %1207 = vmatpush1.bf16.msra.mxu0 0
        %1208 = vmatprep.subr.bf16.mxu0 0
        %1209 = vmatpush1.bf16.msra.mxu0 0
        %1210 = vmatprep.subr.bf16.mxu0 0
        %1211 = vmatpush1.bf16.msra.mxu0 0
        %1212 = vmatprep.subr.bf16.mxu0 0
        %1213 = vmatpush1.bf16.msra.mxu0 0
        %1214 = vmatprep.subr.bf16.mxu0 0
        %1215 = vmatpush1.bf16.msra.mxu0 0
        %1216 = vmatprep.subr.bf16.mxu0 0
        %1217 = vmatpush1.bf16.msra.mxu0 0
        %1218 = vmatprep.subr.bf16.mxu0 0
        %1219 = vmatpush1.bf16.msra.mxu0 0
        %1220 = vmatprep.subr.bf16.mxu0 0
        %1221 = vmatpush1.bf16.msra.mxu0 0
        %1222 = vmatprep.subr.bf16.mxu0 0
        %1223 = vmatpush1.bf16.msra.mxu0 0
        %1224 = vmatprep.mubr.bf16.mxu0 0
        %1225 = vmatmul.mubr.bf16.gmra.mrb[0].mxu0 %v1187
        %v1226 = vpop.f32.mrb[0].mxu0
        %v1227 = vadd.f32 0.0, %v1226
        %v1228 = vpop.f32.mrb[0].mxu0
        %v1229 = vpop.f32.mrb[0].mxu0
        %v1230 = vpop.f32.mrb[0].mxu0
        %1231 = vdwg.mxu0
        %v1232 = vpack.c.bf16 %v1227, %v1178
        %v1233 = vld [vmem:[#allocation7 + $0x8] sm:$0xf]
        %v1234 = vld [vmem:[#allocation7 + $0xc] sm:$0xf]
        %v1237 = vunpack.c.l.b16 %v1233
        %v1238 = vunpack.c.l.b16 %v1234
        %v1239 = vpack.c.b16 %v1238, %v1237
        %v1242 = vsel %vm792, %v1232, 0
        %1244 = vmatprep.subr.bf16.mxu0 0
        %1245 = vmatpush1.bf16.msra.mxu0 %v1239
        %1246 = vmatprep.subr.bf16.mxu0 0
        %1247 = vmatpush1.bf16.msra.mxu0 0
        %1248 = vmatprep.subr.bf16.mxu0 0
        %1249 = vmatpush1.bf16.msra.mxu0 0
        %1250 = vmatprep.subr.bf16.mxu0 0
        %1251 = vmatpush1.bf16.msra.mxu0 0
        %1252 = vmatprep.subr.bf16.mxu0 0
        %1253 = vmatpush1.bf16.msra.mxu0 0
        %1254 = vmatprep.subr.bf16.mxu0 0
        %1255 = vmatpush1.bf16.msra.mxu0 0
        %1256 = vmatprep.subr.bf16.mxu0 0
        %1257 = vmatpush1.bf16.msra.mxu0 0
        %1258 = vmatprep.subr.bf16.mxu0 0
        %1259 = vmatpush1.bf16.msra.mxu0 0
        %1260 = vmatprep.subr.bf16.mxu0 0
        %1261 = vmatpush1.bf16.msra.mxu0 0
        %1262 = vmatprep.subr.bf16.mxu0 0
        %1263 = vmatpush1.bf16.msra.mxu0 0
        %1264 = vmatprep.subr.bf16.mxu0 0
        %1265 = vmatpush1.bf16.msra.mxu0 0
        %1266 = vmatprep.subr.bf16.mxu0 0
        %1267 = vmatpush1.bf16.msra.mxu0 0
        %1268 = vmatprep.subr.bf16.mxu0 0
        %1269 = vmatpush1.bf16.msra.mxu0 0
        %1270 = vmatprep.subr.bf16.mxu0 0
        %1271 = vmatpush1.bf16.msra.mxu0 0
        %1272 = vmatprep.subr.bf16.mxu0 0
        %1273 = vmatpush1.bf16.msra.mxu0 0
        %1274 = vmatprep.subr.bf16.mxu0 0
        %1275 = vmatpush1.bf16.msra.mxu0 0
        %1276 = vmatprep.mubr.bf16.mxu0 0
        %1277 = vmatmul.mubr.bf16.gmra.mrb[0].mxu0 %v1242
        %v1278 = vpop.f32.mrb[0].mxu0
        %v1279 = vadd.f32 0.0, %v1278
        %v1280 = vpop.f32.mrb[0].mxu0
        %v1281 = vpop.f32.mrb[0].mxu0
        %v1282 = vadd.f32 0.0, %v1281
        %v1283 = vpop.f32.mrb[0].mxu0
        %1284 = vdwg.mxu0
        %v1287 = vunpack.c.l.b16 %v1004
        %v1288 = vunpack.c.l.b16 %v1005
        %v1289 = vpack.c.b16 %v1288, %v1287
        %v1292 = vsel %vm792, %v1003, 0
        %1294 = vmatprep.subr.bf16.mxu0 0
        %1295 = vmatpush1.bf16.msra.mxu0 %v1289
        %1296 = vmatprep.subr.bf16.mxu0 0
        %1297 = vmatpush1.bf16.msra.mxu0 0
        %1298 = vmatprep.subr.bf16.mxu0 0
        %1299 = vmatpush1.bf16.msra.mxu0 0
        %1300 = vmatprep.subr.bf16.mxu0 0
        %1301 = vmatpush1.bf16.msra.mxu0 0
        %1302 = vmatprep.subr.bf16.mxu0 0
        %1303 = vmatpush1.bf16.msra.mxu0 0
        %1304 = vmatprep.subr.bf16.mxu0 0
        %1305 = vmatpush1.bf16.msra.mxu0 0
        %1306 = vmatprep.subr.bf16.mxu0 0
        %1307 = vmatpush1.bf16.msra.mxu0 0
        %1308 = vmatprep.subr.bf16.mxu0 0
        %1309 = vmatpush1.bf16.msra.mxu0 0
        %1310 = vmatprep.subr.bf16.mxu0 0
        %1311 = vmatpush1.bf16.msra.mxu0 0
        %1312 = vmatprep.subr.bf16.mxu0 0
        %1313 = vmatpush1.bf16.msra.mxu0 0
        %1314 = vmatprep.subr.bf16.mxu0 0
        %1315 = vmatpush1.bf16.msra.mxu0 0
        %1316 = vmatprep.subr.bf16.mxu0 0
        %1317 = vmatpush1.bf16.msra.mxu0 0
        %1318 = vmatprep.subr.bf16.mxu0 0
        %1319 = vmatpush1.bf16.msra.mxu0 0
        %1320 = vmatprep.subr.bf16.mxu0 0
        %1321 = vmatpush1.bf16.msra.mxu0 0
        %1322 = vmatprep.subr.bf16.mxu0 0
        %1323 = vmatpush1.bf16.msra.mxu0 0
        %1324 = vmatprep.subr.bf16.mxu0 0
        %1325 = vmatpush1.bf16.msra.mxu0 0
        %1326 = vmatprep.mubr.bf16.mxu0 0
        %1327 = vmatmul.mubr.bf16.gmra.mrb[0].mxu0 %v1292
        %v1328 = vpop.f32.mrb[0].mxu0
        %v1329 = vadd.f32 %v1279, %v1328
        %v1330 = vpop.f32.mrb[0].mxu0
        %v1331 = vpop.f32.mrb[0].mxu0
        %v1332 = vadd.f32 %v1282, %v1331
        %v1333 = vpop.f32.mrb[0].mxu0
        %1334 = vdwg.mxu0
        %1335 = vrot.lane.b32.xlu0 %v786, 96
        %v1336 = vpop.permute.xlu0 %1335
        %1337 = vrot.lane.b32.xlu0 %v788, 96
        %v1338 = vpop.permute.xlu0 %1337
        %v1340 = vsel %vm792, %v1336, 0
        %v1343 = vsel %vm792, %v1338, 0
        %1345 = vmatprep.subr.bf16.mxu0 0
        %1346 = vmatpush1.bf16.xpose.msra.mxu0 %v1343
        %1347 = vmatprep.subr.bf16.mxu0 0
        %1348 = vmatpush1.bf16.xpose.msra.mxu0 0
        %1349 = vmatprep.subr.bf16.mxu0 0
        %1350 = vmatpush1.bf16.xpose.msra.mxu0 0
        %1351 = vmatprep.subr.bf16.mxu0 0
        %1352 = vmatpush1.bf16.xpose.msra.mxu0 0
        %1353 = vmatprep.subr.bf16.mxu0 0
        %1354 = vmatpush1.bf16.xpose.msra.mxu0 0
        %1355 = vmatprep.subr.bf16.mxu0 0
        %1356 = vmatpush1.bf16.xpose.msra.mxu0 0
        %1357 = vmatprep.subr.bf16.mxu0 0
        %1358 = vmatpush1.bf16.xpose.msra.mxu0 0
        %1359 = vmatprep.subr.bf16.mxu0 0
        %1360 = vmatpush1.bf16.xpose.msra.mxu0 0
        %1361 = vmatprep.subr.bf16.mxu0 0
        %1362 = vmatpush1.bf16.xpose.msra.mxu0 0
        %1363 = vmatprep.subr.bf16.mxu0 0
        %1364 = vmatpush1.bf16.xpose.msra.mxu0 0
        %1365 = vmatprep.subr.bf16.mxu0 0
        %1366 = vmatpush1.bf16.xpose.msra.mxu0 0
        %1367 = vmatprep.subr.bf16.mxu0 0
        %1368 = vmatpush1.bf16.xpose.msra.mxu0 0
        %1369 = vmatprep.subr.bf16.mxu0 0
        %1370 = vmatpush1.bf16.xpose.msra.mxu0 0
        %1371 = vmatprep.subr.bf16.mxu0 0
        %1372 = vmatpush1.bf16.xpose.msra.mxu0 0
        %1373 = vmatprep.subr.bf16.mxu0 0
        %1374 = vmatpush1.bf16.xpose.msra.mxu0 0
        %1375 = vmatprep.subr.bf16.mxu0 0
        %1376 = vmatpush1.bf16.xpose.msra.mxu0 0
        %1377 = vmatprep.mubr.bf16.mxu0 0
        %1378 = vmatmul.mubr.bf16.gmra.mrb[0].mxu0 %v1340
        %v1379 = vpop.f32.mrb[0].mxu0
        %v1380 = vadd.f32 0.0, %v1379
        %v1381 = vpop.f32.mrb[0].mxu0
        %v1382 = vpop.f32.mrb[0].mxu0
        %v1383 = vpop.f32.mrb[0].mxu0
        %1384 = vdwg.mxu0
        %1385 = vrot.lane.b32.xlu0 %v787, 96
        %v1386 = vpop.permute.xlu0 %1385
        %1387 = vrot.lane.b32.xlu0 %v789, 96
        %v1388 = vpop.permute.xlu0 %1387
        %v1390 = vsel %vm792, %v1386, 0
        %v1393 = vsel %vm792, %v1388, 0
        %1395 = vmatprep.subr.bf16.mxu0 0
        %1396 = vmatpush1.bf16.xpose.msra.mxu0 %v1393
        %1397 = vmatprep.subr.bf16.mxu0 0
        %1398 = vmatpush1.bf16.xpose.msra.mxu0 0
        %1399 = vmatprep.subr.bf16.mxu0 0
        %1400 = vmatpush1.bf16.xpose.msra.mxu0 0
        %1401 = vmatprep.subr.bf16.mxu0 0
        %1402 = vmatpush1.bf16.xpose.msra.mxu0 0
        %1403 = vmatprep.subr.bf16.mxu0 0
        %1404 = vmatpush1.bf16.xpose.msra.mxu0 0
        %1405 = vmatprep.subr.bf16.mxu0 0
        %1406 = vmatpush1.bf16.xpose.msra.mxu0 0
        %1407 = vmatprep.subr.bf16.mxu0 0
        %1408 = vmatpush1.bf16.xpose.msra.mxu0 0
        %1409 = vmatprep.subr.bf16.mxu0 0
        %1410 = vmatpush1.bf16.xpose.msra.mxu0 0
        %1411 = vmatprep.subr.bf16.mxu0 0
        %1412 = vmatpush1.bf16.xpose.msra.mxu0 0
        %1413 = vmatprep.subr.bf16.mxu0 0
        %1414 = vmatpush1.bf16.xpose.msra.mxu0 0
        %1415 = vmatprep.subr.bf16.mxu0 0
        %1416 = vmatpush1.bf16.xpose.msra.mxu0 0
        %1417 = vmatprep.subr.bf16.mxu0 0
        %1418 = vmatpush1.bf16.xpose.msra.mxu0 0
        %1419 = vmatprep.subr.bf16.mxu0 0
        %1420 = vmatpush1.bf16.xpose.msra.mxu0 0
        %1421 = vmatprep.subr.bf16.mxu0 0
        %1422 = vmatpush1.bf16.xpose.msra.mxu0 0
        %1423 = vmatprep.subr.bf16.mxu0 0
        %1424 = vmatpush1.bf16.xpose.msra.mxu0 0
        %1425 = vmatprep.subr.bf16.mxu0 0
        %1426 = vmatpush1.bf16.xpose.msra.mxu0 0
        %1427 = vmatprep.mubr.bf16.mxu0 0
        %1428 = vmatmul.mubr.bf16.gmra.mrb[0].mxu0 %v1390
        %v1429 = vpop.f32.mrb[0].mxu0
        %v1430 = vadd.f32 0.0, %v1429
        %v1431 = vpop.f32.mrb[0].mxu0
        %v1432 = vpop.f32.mrb[0].mxu0
        %v1433 = vpop.f32.mrb[0].mxu0
        %1434 = vdwg.mxu0
        %v1435 = vsel %vm885, %v1380, -inf
        %1436 = vmax.xlane.f32.xlu0 %v1435
        %v1437 = vpop.xlane.xlu0 %1436
        %v1438 = vsel %vm885, %v1430, -inf
        %1439 = vmax.xlane.f32.xlu0 %v1438
        %v1440 = vpop.xlane.xlu0 %1439
        %v1441 = vsub.f32 %v1380, %v1437
        %v1442 = vsub.f32 %v1430, %v1440
        %v1443 = vmul.f32 %v1441, 1.442695
        %v1444 = vpow.pop %v1443
        %v1445 = vmul.f32 %v1442, 1.442695
        %v1446 = vpow.pop %v1445
        %v1447 = vsel %vm885, %v1444, 0.0
        %1448 = vadd.xlane.f32.xlu0 %v1447
        %v1449 = vpop.xlane.xlu0 %1448
        %v1450 = vsel %vm885, %v1446, 0.0
        %1451 = vadd.xlane.f32.xlu0 %v1450
        %v1452 = vpop.xlane.xlu0 %1451
        %v1453 = vrcp.pop %v1449
        %v1454 = vrcp.pop %v1452
        %v1455 = vmul.f32 %v1444, %v1453
        %v1456 = vmul.f32 %v1446, %v1454
        %v1457 = vpack.c.bf16 %v1455, %v1455
        %v1458 = vpack.c.bf16 %v1456, %v1456
        %1459 = vrot.lane.b32.xlu0 %v790, 96
        %v1460 = vpop.permute.xlu0 %1459
        %v1462 = vsel %vm885, %v1457, 0
        %v1465 = vsel %vm913, %v1460, 0
        %1467 = vmatprep.subr.bf16.mxu0 0
        %1468 = vmatpush1.bf16.msra.mxu0 %v1465
        %1469 = vmatprep.subr.bf16.mxu0 0
        %1470 = vmatpush1.bf16.msra.mxu0 0
        %1471 = vmatprep.subr.bf16.mxu0 0
        %1472 = vmatpush1.bf16.msra.mxu0 0
        %1473 = vmatprep.subr.bf16.mxu0 0
        %1474 = vmatpush1.bf16.msra.mxu0 0
        %1475 = vmatprep.subr.bf16.mxu0 0
        %1476 = vmatpush1.bf16.msra.mxu0 0
        %1477 = vmatprep.subr.bf16.mxu0 0
        %1478 = vmatpush1.bf16.msra.mxu0 0
        %1479 = vmatprep.subr.bf16.mxu0 0
        %1480 = vmatpush1.bf16.msra.mxu0 0
        %1481 = vmatprep.subr.bf16.mxu0 0
        %1482 = vmatpush1.bf16.msra.mxu0 0
        %1483 = vmatprep.subr.bf16.mxu0 0
        %1484 = vmatpush1.bf16.msra.mxu0 0
        %1485 = vmatprep.subr.bf16.mxu0 0
        %1486 = vmatpush1.bf16.msra.mxu0 0
        %1487 = vmatprep.subr.bf16.mxu0 0
        %1488 = vmatpush1.bf16.msra.mxu0 0
        %1489 = vmatprep.subr.bf16.mxu0 0
        %1490 = vmatpush1.bf16.msra.mxu0 0
        %1491 = vmatprep.subr.bf16.mxu0 0
        %1492 = vmatpush1.bf16.msra.mxu0 0
        %1493 = vmatprep.subr.bf16.mxu0 0
        %1494 = vmatpush1.bf16.msra.mxu0 0
        %1495 = vmatprep.subr.bf16.mxu0 0
        %1496 = vmatpush1.bf16.msra.mxu0 0
        %1497 = vmatprep.subr.bf16.mxu0 0
        %1498 = vmatpush1.bf16.msra.mxu0 0
        %1499 = vmatprep.mubr.bf16.mxu0 0
        %1500 = vmatmul.mubr.bf16.gmra.mrb[0].mxu0 %v1462
        %v1501 = vpop.f32.mrb[0].mxu0
        %v1502 = vadd.f32 0.0, %v1501
        %v1503 = vpop.f32.mrb[0].mxu0
        %v1504 = vpop.f32.mrb[0].mxu0
        %v1505 = vpop.f32.mrb[0].mxu0
        %1506 = vdwg.mxu0
        %1507 = vrot.lane.b32.xlu0 %v791, 96
        %v1508 = vpop.permute.xlu0 %1507
        %v1510 = vsel %vm885, %v1458, 0
        %v1513 = vsel %vm913, %v1508, 0
        %1515 = vmatprep.subr.bf16.mxu0 0
        %1516 = vmatpush1.bf16.msra.mxu0 %v1513
        %1517 = vmatprep.subr.bf16.mxu0 0
        %1518 = vmatpush1.bf16.msra.mxu0 0
        %1519 = vmatprep.subr.bf16.mxu0 0
        %1520 = vmatpush1.bf16.msra.mxu0 0
        %1521 = vmatprep.subr.bf16.mxu0 0
        %1522 = vmatpush1.bf16.msra.mxu0 0
        %1523 = vmatprep.subr.bf16.mxu0 0
        %1524 = vmatpush1.bf16.msra.mxu0 0
        %1525 = vmatprep.subr.bf16.mxu0 0
        %1526 = vmatpush1.bf16.msra.mxu0 0
        %1527 = vmatprep.subr.bf16.mxu0 0
        %1528 = vmatpush1.bf16.msra.mxu0 0
        %1529 = vmatprep.subr.bf16.mxu0 0
        %1530 = vmatpush1.bf16.msra.mxu0 0
        %1531 = vmatprep.subr.bf16.mxu0 0
        %1532 = vmatpush1.bf16.msra.mxu0 0
        %1533 = vmatprep.subr.bf16.mxu0 0
        %1534 = vmatpush1.bf16.msra.mxu0 0
        %1535 = vmatprep.subr.bf16.mxu0 0
        %1536 = vmatpush1.bf16.msra.mxu0 0
        %1537 = vmatprep.subr.bf16.mxu0 0
        %1538 = vmatpush1.bf16.msra.mxu0 0
        %1539 = vmatprep.subr.bf16.mxu0 0
        %1540 = vmatpush1.bf16.msra.mxu0 0
        %1541 = vmatprep.subr.bf16.mxu0 0
        %1542 = vmatpush1.bf16.msra.mxu0 0
        %1543 = vmatprep.subr.bf16.mxu0 0
        %1544 = vmatpush1.bf16.msra.mxu0 0
        %1545 = vmatprep.subr.bf16.mxu0 0
        %1546 = vmatpush1.bf16.msra.mxu0 0
        %1547 = vmatprep.mubr.bf16.mxu0 0
        %1548 = vmatmul.mubr.bf16.gmra.mrb[0].mxu0 %v1510
        %v1549 = vpop.f32.mrb[0].mxu0
        %v1550 = vadd.f32 0.0, %v1549
        %v1551 = vpop.f32.mrb[0].mxu0
        %v1552 = vpop.f32.mrb[0].mxu0
        %v1553 = vpop.f32.mrb[0].mxu0
        %1554 = vdwg.mxu0
        %v1555 = vpack.c.bf16 %v1550, %v1502
        %v1556 = vld [vmem:[#allocation7 + $0x10] sm:$0xf]
        %v1557 = vld [vmem:[#allocation7 + $0x14] sm:$0xf]
        %v1560 = vunpack.c.l.b16 %v1556
        %v1561 = vunpack.c.l.b16 %v1557
        %v1562 = vpack.c.b16 %v1561, %v1560
        %v1565 = vsel %vm792, %v1555, 0
        %1567 = vmatprep.subr.bf16.mxu0 0
        %1568 = vmatpush1.bf16.msra.mxu0 %v1562
        %1569 = vmatprep.subr.bf16.mxu0 0
        %1570 = vmatpush1.bf16.msra.mxu0 0
        %1571 = vmatprep.subr.bf16.mxu0 0
        %1572 = vmatpush1.bf16.msra.mxu0 0
        %1573 = vmatprep.subr.bf16.mxu0 0
        %1574 = vmatpush1.bf16.msra.mxu0 0
        %1575 = vmatprep.subr.bf16.mxu0 0
        %1576 = vmatpush1.bf16.msra.mxu0 0
        %1577 = vmatprep.subr.bf16.mxu0 0
        %1578 = vmatpush1.bf16.msra.mxu0 0
        %1579 = vmatprep.subr.bf16.mxu0 0
        %1580 = vmatpush1.bf16.msra.mxu0 0
        %1581 = vmatprep.subr.bf16.mxu0 0
        %1582 = vmatpush1.bf16.msra.mxu0 0
        %1583 = vmatprep.subr.bf16.mxu0 0
        %1584 = vmatpush1.bf16.msra.mxu0 0
        %1585 = vmatprep.subr.bf16.mxu0 0
        %1586 = vmatpush1.bf16.msra.mxu0 0
        %1587 = vmatprep.subr.bf16.mxu0 0
        %1588 = vmatpush1.bf16.msra.mxu0 0
        %1589 = vmatprep.subr.bf16.mxu0 0
        %1590 = vmatpush1.bf16.msra.mxu0 0
        %1591 = vmatprep.subr.bf16.mxu0 0
        %1592 = vmatpush1.bf16.msra.mxu0 0
        %1593 = vmatprep.subr.bf16.mxu0 0
        %1594 = vmatpush1.bf16.msra.mxu0 0
        %1595 = vmatprep.subr.bf16.mxu0 0
        %1596 = vmatpush1.bf16.msra.mxu0 0
        %1597 = vmatprep.subr.bf16.mxu0 0
        %1598 = vmatpush1.bf16.msra.mxu0 0
        %1599 = vmatprep.mubr.bf16.mxu0 0
        %1600 = vmatmul.mubr.bf16.gmra.mrb[0].mxu0 %v1565
        %v1601 = vpop.f32.mrb[0].mxu0
        %v1602 = vadd.f32 0.0, %v1601
        %v1603 = vpop.f32.mrb[0].mxu0
        %v1604 = vpop.f32.mrb[0].mxu0
        %v1605 = vadd.f32 0.0, %v1604
        %v1606 = vpop.f32.mrb[0].mxu0
        %1607 = vdwg.mxu0
        %v1608 = vadd.f32 %v1329, %v1602
        %v1609 = vadd.f32 %v1332, %v1605
        %1610 = vrot.lane.b32.xlu0 %v786, 80
        %v1611 = vpop.permute.xlu0 %1610
        %1612 = vrot.lane.b32.xlu0 %v788, 80
        %v1613 = vpop.permute.xlu0 %1612
        %v1615 = vsel %vm792, %v1611, 0
        %v1618 = vsel %vm792, %v1613, 0
        %1620 = vmatprep.subr.bf16.mxu0 0
        %1621 = vmatpush1.bf16.xpose.msra.mxu0 %v1618
        %1622 = vmatprep.subr.bf16.mxu0 0
        %1623 = vmatpush1.bf16.xpose.msra.mxu0 0
        %1624 = vmatprep.subr.bf16.mxu0 0
        %1625 = vmatpush1.bf16.xpose.msra.mxu0 0
        %1626 = vmatprep.subr.bf16.mxu0 0
        %1627 = vmatpush1.bf16.xpose.msra.mxu0 0
        %1628 = vmatprep.subr.bf16.mxu0 0
        %1629 = vmatpush1.bf16.xpose.msra.mxu0 0
        %1630 = vmatprep.subr.bf16.mxu0 0
        %1631 = vmatpush1.bf16.xpose.msra.mxu0 0
        %1632 = vmatprep.subr.bf16.mxu0 0
        %1633 = vmatpush1.bf16.xpose.msra.mxu0 0
        %1634 = vmatprep.subr.bf16.mxu0 0
        %1635 = vmatpush1.bf16.xpose.msra.mxu0 0
        %1636 = vmatprep.subr.bf16.mxu0 0
        %1637 = vmatpush1.bf16.xpose.msra.mxu0 0
        %1638 = vmatprep.subr.bf16.mxu0 0
        %1639 = vmatpush1.bf16.xpose.msra.mxu0 0
        %1640 = vmatprep.subr.bf16.mxu0 0
        %1641 = vmatpush1.bf16.xpose.msra.mxu0 0
        %1642 = vmatprep.subr.bf16.mxu0 0
        %1643 = vmatpush1.bf16.xpose.msra.mxu0 0
        %1644 = vmatprep.subr.bf16.mxu0 0
        %1645 = vmatpush1.bf16.xpose.msra.mxu0 0
        %1646 = vmatprep.subr.bf16.mxu0 0
        %1647 = vmatpush1.bf16.xpose.msra.mxu0 0
        %1648 = vmatprep.subr.bf16.mxu0 0
        %1649 = vmatpush1.bf16.xpose.msra.mxu0 0
        %1650 = vmatprep.subr.bf16.mxu0 0
        %1651 = vmatpush1.bf16.xpose.msra.mxu0 0
        %1652 = vmatprep.mubr.bf16.mxu0 0
        %1653 = vmatmul.mubr.bf16.gmra.mrb[0].mxu0 %v1615
        %v1654 = vpop.f32.mrb[0].mxu0
        %v1655 = vadd.f32 0.0, %v1654
        %v1656 = vpop.f32.mrb[0].mxu0
        %v1657 = vpop.f32.mrb[0].mxu0
        %v1658 = vpop.f32.mrb[0].mxu0
        %1659 = vdwg.mxu0
        %1660 = vrot.lane.b32.xlu0 %v787, 80
        %v1661 = vpop.permute.xlu0 %1660
        %1662 = vrot.lane.b32.xlu0 %v789, 80
        %v1663 = vpop.permute.xlu0 %1662
        %v1665 = vsel %vm792, %v1661, 0
        %v1668 = vsel %vm792, %v1663, 0
        %1670 = vmatprep.subr.bf16.mxu0 0
        %1671 = vmatpush1.bf16.xpose.msra.mxu0 %v1668
        %1672 = vmatprep.subr.bf16.mxu0 0
        %1673 = vmatpush1.bf16.xpose.msra.mxu0 0
        %1674 = vmatprep.subr.bf16.mxu0 0
        %1675 = vmatpush1.bf16.xpose.msra.mxu0 0
        %1676 = vmatprep.subr.bf16.mxu0 0
        %1677 = vmatpush1.bf16.xpose.msra.mxu0 0
        %1678 = vmatprep.subr.bf16.mxu0 0
        %1679 = vmatpush1.bf16.xpose.msra.mxu0 0
        %1680 = vmatprep.subr.bf16.mxu0 0
        %1681 = vmatpush1.bf16.xpose.msra.mxu0 0
        %1682 = vmatprep.subr.bf16.mxu0 0
        %1683 = vmatpush1.bf16.xpose.msra.mxu0 0
        %1684 = vmatprep.subr.bf16.mxu0 0
        %1685 = vmatpush1.bf16.xpose.msra.mxu0 0
        %1686 = vmatprep.subr.bf16.mxu0 0
        %1687 = vmatpush1.bf16.xpose.msra.mxu0 0
        %1688 = vmatprep.subr.bf16.mxu0 0
        %1689 = vmatpush1.bf16.xpose.msra.mxu0 0
        %1690 = vmatprep.subr.bf16.mxu0 0
        %1691 = vmatpush1.bf16.xpose.msra.mxu0 0
        %1692 = vmatprep.subr.bf16.mxu0 0
        %1693 = vmatpush1.bf16.xpose.msra.mxu0 0
        %1694 = vmatprep.subr.bf16.mxu0 0
        %1695 = vmatpush1.bf16.xpose.msra.mxu0 0
        %1696 = vmatprep.subr.bf16.mxu0 0
        %1697 = vmatpush1.bf16.xpose.msra.mxu0 0
        %1698 = vmatprep.subr.bf16.mxu0 0
        %1699 = vmatpush1.bf16.xpose.msra.mxu0 0
        %1700 = vmatprep.subr.bf16.mxu0 0
        %1701 = vmatpush1.bf16.xpose.msra.mxu0 0
        %1702 = vmatprep.mubr.bf16.mxu0 0
        %1703 = vmatmul.mubr.bf16.gmra.mrb[0].mxu0 %v1665
        %v1704 = vpop.f32.mrb[0].mxu0
        %v1705 = vadd.f32 0.0, %v1704
        %v1706 = vpop.f32.mrb[0].mxu0
        %v1707 = vpop.f32.mrb[0].mxu0
        %v1708 = vpop.f32.mrb[0].mxu0
        %1709 = vdwg.mxu0
        %v1710 = vsel %vm885, %v1655, -inf
        %1711 = vmax.xlane.f32.xlu0 %v1710
        %v1712 = vpop.xlane.xlu0 %1711
        %v1713 = vsel %vm885, %v1705, -inf
        %1714 = vmax.xlane.f32.xlu0 %v1713
        %v1715 = vpop.xlane.xlu0 %1714
        %v1716 = vsub.f32 %v1655, %v1712
        %v1717 = vsub.f32 %v1705, %v1715
        %v1718 = vmul.f32 %v1716, 1.442695
        %v1719 = vpow.pop %v1718
        %v1720 = vmul.f32 %v1717, 1.442695
        %v1721 = vpow.pop %v1720
        %v1722 = vsel %vm885, %v1719, 0.0
        %1723 = vadd.xlane.f32.xlu0 %v1722
        %v1724 = vpop.xlane.xlu0 %1723
        %v1725 = vsel %vm885, %v1721, 0.0
        %1726 = vadd.xlane.f32.xlu0 %v1725
        %v1727 = vpop.xlane.xlu0 %1726
        %v1728 = vrcp.pop %v1724
        %v1729 = vrcp.pop %v1727
        %v1730 = vmul.f32 %v1719, %v1728
        %v1731 = vmul.f32 %v1721, %v1729
        %v1732 = vpack.c.bf16 %v1730, %v1730
        %v1733 = vpack.c.bf16 %v1731, %v1731
        %1734 = vrot.lane.b32.xlu0 %v790, 80
        %v1735 = vpop.permute.xlu0 %1734
        %v1737 = vsel %vm885, %v1732, 0
        %v1740 = vsel %vm913, %v1735, 0
        %1742 = vmatprep.subr.bf16.mxu0 0
        %1743 = vmatpush1.bf16.msra.mxu0 %v1740
        %1744 = vmatprep.subr.bf16.mxu0 0
        %1745 = vmatpush1.bf16.msra.mxu0 0
        %1746 = vmatprep.subr.bf16.mxu0 0
        %1747 = vmatpush1.bf16.msra.mxu0 0
        %1748 = vmatprep.subr.bf16.mxu0 0
        %1749 = vmatpush1.bf16.msra.mxu0 0
        %1750 = vmatprep.subr.bf16.mxu0 0
        %1751 = vmatpush1.bf16.msra.mxu0 0
        %1752 = vmatprep.subr.bf16.mxu0 0
        %1753 = vmatpush1.bf16.msra.mxu0 0
        %1754 = vmatprep.subr.bf16.mxu0 0
        %1755 = vmatpush1.bf16.msra.mxu0 0
        %1756 = vmatprep.subr.bf16.mxu0 0
        %1757 = vmatpush1.bf16.msra.mxu0 0
        %1758 = vmatprep.subr.bf16.mxu0 0
        %1759 = vmatpush1.bf16.msra.mxu0 0
        %1760 = vmatprep.subr.bf16.mxu0 0
        %1761 = vmatpush1.bf16.msra.mxu0 0
        %1762 = vmatprep.subr.bf16.mxu0 0
        %1763 = vmatpush1.bf16.msra.mxu0 0
        %1764 = vmatprep.subr.bf16.mxu0 0
        %1765 = vmatpush1.bf16.msra.mxu0 0
        %1766 = vmatprep.subr.bf16.mxu0 0
        %1767 = vmatpush1.bf16.msra.mxu0 0
        %1768 = vmatprep.subr.bf16.mxu0 0
        %1769 = vmatpush1.bf16.msra.mxu0 0
        %1770 = vmatprep.subr.bf16.mxu0 0
        %1771 = vmatpush1.bf16.msra.mxu0 0
        %1772 = vmatprep.subr.bf16.mxu0 0
        %1773 = vmatpush1.bf16.msra.mxu0 0
        %1774 = vmatprep.mubr.bf16.mxu0 0
        %1775 = vmatmul.mubr.bf16.gmra.mrb[0].mxu0 %v1737
        %v1776 = vpop.f32.mrb[0].mxu0
        %v1777 = vadd.f32 0.0, %v1776
        %v1778 = vpop.f32.mrb[0].mxu0
        %v1779 = vpop.f32.mrb[0].mxu0
        %v1780 = vpop.f32.mrb[0].mxu0
        %1781 = vdwg.mxu0
        %1782 = vrot.lane.b32.xlu0 %v791, 80
        %v1783 = vpop.permute.xlu0 %1782
        %v1785 = vsel %vm885, %v1733, 0
        %v1788 = vsel %vm913, %v1783, 0
        %1790 = vmatprep.subr.bf16.mxu0 0
        %1791 = vmatpush1.bf16.msra.mxu0 %v1788
        %1792 = vmatprep.subr.bf16.mxu0 0
        %1793 = vmatpush1.bf16.msra.mxu0 0
        %1794 = vmatprep.subr.bf16.mxu0 0
        %1795 = vmatpush1.bf16.msra.mxu0 0
        %1796 = vmatprep.subr.bf16.mxu0 0
        %1797 = vmatpush1.bf16.msra.mxu0 0
        %1798 = vmatprep.subr.bf16.mxu0 0
        %1799 = vmatpush1.bf16.msra.mxu0 0
        %1800 = vmatprep.subr.bf16.mxu0 0
        %1801 = vmatpush1.bf16.msra.mxu0 0
        %1802 = vmatprep.subr.bf16.mxu0 0
        %1803 = vmatpush1.bf16.msra.mxu0 0
        %1804 = vmatprep.subr.bf16.mxu0 0
        %1805 = vmatpush1.bf16.msra.mxu0 0
        %1806 = vmatprep.subr.bf16.mxu0 0
        %1807 = vmatpush1.bf16.msra.mxu0 0
        %1808 = vmatprep.subr.bf16.mxu0 0
        %1809 = vmatpush1.bf16.msra.mxu0 0
        %1810 = vmatprep.subr.bf16.mxu0 0
        %1811 = vmatpush1.bf16.msra.mxu0 0
        %1812 = vmatprep.subr.bf16.mxu0 0
        %1813 = vmatpush1.bf16.msra.mxu0 0
        %1814 = vmatprep.subr.bf16.mxu0 0
        %1815 = vmatpush1.bf16.msra.mxu0 0
        %1816 = vmatprep.subr.bf16.mxu0 0
        %1817 = vmatpush1.bf16.msra.mxu0 0
        %1818 = vmatprep.subr.bf16.mxu0 0
        %1819 = vmatpush1.bf16.msra.mxu0 0
        %1820 = vmatprep.subr.bf16.mxu0 0
        %1821 = vmatpush1.bf16.msra.mxu0 0
        %1822 = vmatprep.mubr.bf16.mxu0 0
        %1823 = vmatmul.mubr.bf16.gmra.mrb[0].mxu0 %v1785
        %v1824 = vpop.f32.mrb[0].mxu0
        %v1825 = vadd.f32 0.0, %v1824
        %v1826 = vpop.f32.mrb[0].mxu0
        %v1827 = vpop.f32.mrb[0].mxu0
        %v1828 = vpop.f32.mrb[0].mxu0
        %1829 = vdwg.mxu0
        %v1830 = vpack.c.bf16 %v1825, %v1777
        %v1831 = vld [vmem:[#allocation7 + $0x18] sm:$0xf]
        %v1832 = vld [vmem:[#allocation7 + $0x1c] sm:$0xf]
        %v1835 = vunpack.c.l.b16 %v1831
        %v1836 = vunpack.c.l.b16 %v1832
        %v1837 = vpack.c.b16 %v1836, %v1835
        %v1840 = vsel %vm792, %v1830, 0
        %1842 = vmatprep.subr.bf16.mxu0 0
        %1843 = vmatpush1.bf16.msra.mxu0 %v1837
        %1844 = vmatprep.subr.bf16.mxu0 0
        %1845 = vmatpush1.bf16.msra.mxu0 0
        %1846 = vmatprep.subr.bf16.mxu0 0
        %1847 = vmatpush1.bf16.msra.mxu0 0
        %1848 = vmatprep.subr.bf16.mxu0 0
        %1849 = vmatpush1.bf16.msra.mxu0 0
        %1850 = vmatprep.subr.bf16.mxu0 0
        %1851 = vmatpush1.bf16.msra.mxu0 0
        %1852 = vmatprep.subr.bf16.mxu0 0
        %1853 = vmatpush1.bf16.msra.mxu0 0
        %1854 = vmatprep.subr.bf16.mxu0 0
        %1855 = vmatpush1.bf16.msra.mxu0 0
        %1856 = vmatprep.subr.bf16.mxu0 0
        %1857 = vmatpush1.bf16.msra.mxu0 0
        %1858 = vmatprep.subr.bf16.mxu0 0
        %1859 = vmatpush1.bf16.msra.mxu0 0
        %1860 = vmatprep.subr.bf16.mxu0 0
        %1861 = vmatpush1.bf16.msra.mxu0 0
        %1862 = vmatprep.subr.bf16.mxu0 0
        %1863 = vmatpush1.bf16.msra.mxu0 0
        %1864 = vmatprep.subr.bf16.mxu0 0
        %1865 = vmatpush1.bf16.msra.mxu0 0
        %1866 = vmatprep.subr.bf16.mxu0 0
        %1867 = vmatpush1.bf16.msra.mxu0 0
        %1868 = vmatprep.subr.bf16.mxu0 0
        %1869 = vmatpush1.bf16.msra.mxu0 0
        %1870 = vmatprep.subr.bf16.mxu0 0
        %1871 = vmatpush1.bf16.msra.mxu0 0
        %1872 = vmatprep.subr.bf16.mxu0 0
        %1873 = vmatpush1.bf16.msra.mxu0 0
        %1874 = vmatprep.mubr.bf16.mxu0 0
        %1875 = vmatmul.mubr.bf16.gmra.mrb[0].mxu0 %v1840
        %v1876 = vpop.f32.mrb[0].mxu0
        %v1877 = vadd.f32 0.0, %v1876
        %v1878 = vpop.f32.mrb[0].mxu0
        %v1879 = vpop.f32.mrb[0].mxu0
        %v1880 = vadd.f32 0.0, %v1879
        %v1881 = vpop.f32.mrb[0].mxu0
        %1882 = vdwg.mxu0
        %v1883 = vadd.f32 %v1608, %v1877
        %v1884 = vadd.f32 %v1609, %v1880
        %1885 = vrot.lane.b32.xlu0 %v786, 64
        %v1886 = vpop.permute.xlu0 %1885
        %1887 = vrot.lane.b32.xlu0 %v788, 64
        %v1888 = vpop.permute.xlu0 %1887
        %v1890 = vsel %vm792, %v1886, 0
        %v1893 = vsel %vm792, %v1888, 0
        %1895 = vmatprep.subr.bf16.mxu0 0
        %1896 = vmatpush1.bf16.xpose.msra.mxu0 %v1893
        %1897 = vmatprep.subr.bf16.mxu0 0
        %1898 = vmatpush1.bf16.xpose.msra.mxu0 0
        %1899 = vmatprep.subr.bf16.mxu0 0
        %1900 = vmatpush1.bf16.xpose.msra.mxu0 0
        %1901 = vmatprep.subr.bf16.mxu0 0
        %1902 = vmatpush1.bf16.xpose.msra.mxu0 0
        %1903 = vmatprep.subr.bf16.mxu0 0
        %1904 = vmatpush1.bf16.xpose.msra.mxu0 0
        %1905 = vmatprep.subr.bf16.mxu0 0
        %1906 = vmatpush1.bf16.xpose.msra.mxu0 0
        %1907 = vmatprep.subr.bf16.mxu0 0
        %1908 = vmatpush1.bf16.xpose.msra.mxu0 0
        %1909 = vmatprep.subr.bf16.mxu0 0
        %1910 = vmatpush1.bf16.xpose.msra.mxu0 0
        %1911 = vmatprep.subr.bf16.mxu0 0
        %1912 = vmatpush1.bf16.xpose.msra.mxu0 0
        %1913 = vmatprep.subr.bf16.mxu0 0
        %1914 = vmatpush1.bf16.xpose.msra.mxu0 0
        %1915 = vmatprep.subr.bf16.mxu0 0
        %1916 = vmatpush1.bf16.xpose.msra.mxu0 0
        %1917 = vmatprep.subr.bf16.mxu0 0
        %1918 = vmatpush1.bf16.xpose.msra.mxu0 0
        %1919 = vmatprep.subr.bf16.mxu0 0
        %1920 = vmatpush1.bf16.xpose.msra.mxu0 0
        %1921 = vmatprep.subr.bf16.mxu0 0
        %1922 = vmatpush1.bf16.xpose.msra.mxu0 0
        %1923 = vmatprep.subr.bf16.mxu0 0
        %1924 = vmatpush1.bf16.xpose.msra.mxu0 0
        %1925 = vmatprep.subr.bf16.mxu0 0
        %1926 = vmatpush1.bf16.xpose.msra.mxu0 0
        %1927 = vmatprep.mubr.bf16.mxu0 0
        %1928 = vmatmul.mubr.bf16.gmra.mrb[0].mxu0 %v1890
        %v1929 = vpop.f32.mrb[0].mxu0
        %v1930 = vadd.f32 0.0, %v1929
        %v1931 = vpop.f32.mrb[0].mxu0
        %v1932 = vpop.f32.mrb[0].mxu0
        %v1933 = vpop.f32.mrb[0].mxu0
        %1934 = vdwg.mxu0
        %1935 = vrot.lane.b32.xlu0 %v787, 64
        %v1936 = vpop.permute.xlu0 %1935
        %1937 = vrot.lane.b32.xlu0 %v789, 64
        %v1938 = vpop.permute.xlu0 %1937
        %v1940 = vsel %vm792, %v1936, 0
        %v1943 = vsel %vm792, %v1938, 0
        %1945 = vmatprep.subr.bf16.mxu0 0
        %1946 = vmatpush1.bf16.xpose.msra.mxu0 %v1943
        %1947 = vmatprep.subr.bf16.mxu0 0
        %1948 = vmatpush1.bf16.xpose.msra.mxu0 0
        %1949 = vmatprep.subr.bf16.mxu0 0
        %1950 = vmatpush1.bf16.xpose.msra.mxu0 0
        %1951 = vmatprep.subr.bf16.mxu0 0
        %1952 = vmatpush1.bf16.xpose.msra.mxu0 0
        %1953 = vmatprep.subr.bf16.mxu0 0
        %1954 = vmatpush1.bf16.xpose.msra.mxu0 0
        %1955 = vmatprep.subr.bf16.mxu0 0
        %1956 = vmatpush1.bf16.xpose.msra.mxu0 0
        %1957 = vmatprep.subr.bf16.mxu0 0
        %1958 = vmatpush1.bf16.xpose.msra.mxu0 0
        %1959 = vmatprep.subr.bf16.mxu0 0
        %1960 = vmatpush1.bf16.xpose.msra.mxu0 0
        %1961 = vmatprep.subr.bf16.mxu0 0
        %1962 = vmatpush1.bf16.xpose.msra.mxu0 0
        %1963 = vmatprep.subr.bf16.mxu0 0
        %1964 = vmatpush1.bf16.xpose.msra.mxu0 0
        %1965 = vmatprep.subr.bf16.mxu0 0
        %1966 = vmatpush1.bf16.xpose.msra.mxu0 0
        %1967 = vmatprep.subr.bf16.mxu0 0
        %1968 = vmatpush1.bf16.xpose.msra.mxu0 0
        %1969 = vmatprep.subr.bf16.mxu0 0
        %1970 = vmatpush1.bf16.xpose.msra.mxu0 0
        %1971 = vmatprep.subr.bf16.mxu0 0
        %1972 = vmatpush1.bf16.xpose.msra.mxu0 0
        %1973 = vmatprep.subr.bf16.mxu0 0
        %1974 = vmatpush1.bf16.xpose.msra.mxu0 0
        %1975 = vmatprep.subr.bf16.mxu0 0
        %1976 = vmatpush1.bf16.xpose.msra.mxu0 0
        %1977 = vmatprep.mubr.bf16.mxu0 0
        %1978 = vmatmul.mubr.bf16.gmra.mrb[0].mxu0 %v1940
        %v1979 = vpop.f32.mrb[0].mxu0
        %v1980 = vadd.f32 0.0, %v1979
        %v1981 = vpop.f32.mrb[0].mxu0
        %v1982 = vpop.f32.mrb[0].mxu0
        %v1983 = vpop.f32.mrb[0].mxu0
        %1984 = vdwg.mxu0
        %v1985 = vsel %vm885, %v1930, -inf
        %1986 = vmax.xlane.f32.xlu0 %v1985
        %v1987 = vpop.xlane.xlu0 %1986
        %v1988 = vsel %vm885, %v1980, -inf
        %1989 = vmax.xlane.f32.xlu0 %v1988
        %v1990 = vpop.xlane.xlu0 %1989
        %v1991 = vsub.f32 %v1930, %v1987
        %v1992 = vsub.f32 %v1980, %v1990
        %v1993 = vmul.f32 %v1991, 1.442695
        %v1994 = vpow.pop %v1993
        %v1995 = vmul.f32 %v1992, 1.442695
        %v1996 = vpow.pop %v1995
        %v1997 = vsel %vm885, %v1994, 0.0
        %1998 = vadd.xlane.f32.xlu0 %v1997
        %v1999 = vpop.xlane.xlu0 %1998
        %v2000 = vsel %vm885, %v1996, 0.0
        %2001 = vadd.xlane.f32.xlu0 %v2000
        %v2002 = vpop.xlane.xlu0 %2001
        %v2003 = vrcp.pop %v1999
        %v2004 = vrcp.pop %v2002
        %v2005 = vmul.f32 %v1994, %v2003
        %v2006 = vmul.f32 %v1996, %v2004
        %v2007 = vpack.c.bf16 %v2005, %v2005
        %v2008 = vpack.c.bf16 %v2006, %v2006
        %2009 = vrot.lane.b32.xlu0 %v790, 64
        %v2010 = vpop.permute.xlu0 %2009
        %v2012 = vsel %vm885, %v2007, 0
        %v2015 = vsel %vm913, %v2010, 0
        %2017 = vmatprep.subr.bf16.mxu0 0
        %2018 = vmatpush1.bf16.msra.mxu0 %v2015
        %2019 = vmatprep.subr.bf16.mxu0 0
        %2020 = vmatpush1.bf16.msra.mxu0 0
        %2021 = vmatprep.subr.bf16.mxu0 0
        %2022 = vmatpush1.bf16.msra.mxu0 0
        %2023 = vmatprep.subr.bf16.mxu0 0
        %2024 = vmatpush1.bf16.msra.mxu0 0
        %2025 = vmatprep.subr.bf16.mxu0 0
        %2026 = vmatpush1.bf16.msra.mxu0 0
        %2027 = vmatprep.subr.bf16.mxu0 0
        %2028 = vmatpush1.bf16.msra.mxu0 0
        %2029 = vmatprep.subr.bf16.mxu0 0
        %2030 = vmatpush1.bf16.msra.mxu0 0
        %2031 = vmatprep.subr.bf16.mxu0 0
        %2032 = vmatpush1.bf16.msra.mxu0 0
        %2033 = vmatprep.subr.bf16.mxu0 0
        %2034 = vmatpush1.bf16.msra.mxu0 0
        %2035 = vmatprep.subr.bf16.mxu0 0
        %2036 = vmatpush1.bf16.msra.mxu0 0
        %2037 = vmatprep.subr.bf16.mxu0 0
        %2038 = vmatpush1.bf16.msra.mxu0 0
        %2039 = vmatprep.subr.bf16.mxu0 0
        %2040 = vmatpush1.bf16.msra.mxu0 0
        %2041 = vmatprep.subr.bf16.mxu0 0
        %2042 = vmatpush1.bf16.msra.mxu0 0
        %2043 = vmatprep.subr.bf16.mxu0 0
        %2044 = vmatpush1.bf16.msra.mxu0 0
        %2045 = vmatprep.subr.bf16.mxu0 0
        %2046 = vmatpush1.bf16.msra.mxu0 0
        %2047 = vmatprep.subr.bf16.mxu0 0
        %2048 = vmatpush1.bf16.msra.mxu0 0
        %2049 = vmatprep.mubr.bf16.mxu0 0
        %2050 = vmatmul.mubr.bf16.gmra.mrb[0].mxu0 %v2012
        %v2051 = vpop.f32.mrb[0].mxu0
        %v2052 = vadd.f32 0.0, %v2051
        %v2053 = vpop.f32.mrb[0].mxu0
        %v2054 = vpop.f32.mrb[0].mxu0
        %v2055 = vpop.f32.mrb[0].mxu0
        %2056 = vdwg.mxu0
        %2057 = vrot.lane.b32.xlu0 %v791, 64
        %v2058 = vpop.permute.xlu0 %2057
        %v2060 = vsel %vm885, %v2008, 0
        %v2063 = vsel %vm913, %v2058, 0
        %2065 = vmatprep.subr.bf16.mxu0 0
        %2066 = vmatpush1.bf16.msra.mxu0 %v2063
        %2067 = vmatprep.subr.bf16.mxu0 0
        %2068 = vmatpush1.bf16.msra.mxu0 0
        %2069 = vmatprep.subr.bf16.mxu0 0
        %2070 = vmatpush1.bf16.msra.mxu0 0
        %2071 = vmatprep.subr.bf16.mxu0 0
        %2072 = vmatpush1.bf16.msra.mxu0 0
        %2073 = vmatprep.subr.bf16.mxu0 0
        %2074 = vmatpush1.bf16.msra.mxu0 0
        %2075 = vmatprep.subr.bf16.mxu0 0
        %2076 = vmatpush1.bf16.msra.mxu0 0
        %2077 = vmatprep.subr.bf16.mxu0 0
        %2078 = vmatpush1.bf16.msra.mxu0 0
        %2079 = vmatprep.subr.bf16.mxu0 0
        %2080 = vmatpush1.bf16.msra.mxu0 0
        %2081 = vmatprep.subr.bf16.mxu0 0
        %2082 = vmatpush1.bf16.msra.mxu0 0
        %2083 = vmatprep.subr.bf16.mxu0 0
        %2084 = vmatpush1.bf16.msra.mxu0 0
        %2085 = vmatprep.subr.bf16.mxu0 0
        %2086 = vmatpush1.bf16.msra.mxu0 0
        %2087 = vmatprep.subr.bf16.mxu0 0
        %2088 = vmatpush1.bf16.msra.mxu0 0
        %2089 = vmatprep.subr.bf16.mxu0 0
        %2090 = vmatpush1.bf16.msra.mxu0 0
        %2091 = vmatprep.subr.bf16.mxu0 0
        %2092 = vmatpush1.bf16.msra.mxu0 0
        %2093 = vmatprep.subr.bf16.mxu0 0
        %2094 = vmatpush1.bf16.msra.mxu0 0
        %2095 = vmatprep.subr.bf16.mxu0 0
        %2096 = vmatpush1.bf16.msra.mxu0 0
        %2097 = vmatprep.mubr.bf16.mxu0 0
        %2098 = vmatmul.mubr.bf16.gmra.mrb[0].mxu0 %v2060
        %v2099 = vpop.f32.mrb[0].mxu0
        %v2100 = vadd.f32 0.0, %v2099
        %v2101 = vpop.f32.mrb[0].mxu0
        %v2102 = vpop.f32.mrb[0].mxu0
        %v2103 = vpop.f32.mrb[0].mxu0
        %2104 = vdwg.mxu0
        %v2105 = vpack.c.bf16 %v2100, %v2052
        %v2106 = vld [vmem:[#allocation7 + $0x20] sm:$0xf]
        %v2107 = vld [vmem:[#allocation7 + $0x24] sm:$0xf]
        %v2110 = vunpack.c.l.b16 %v2106
        %v2111 = vunpack.c.l.b16 %v2107
        %v2112 = vpack.c.b16 %v2111, %v2110
        %v2115 = vsel %vm792, %v2105, 0
        %2117 = vmatprep.subr.bf16.mxu0 0
        %2118 = vmatpush1.bf16.msra.mxu0 %v2112
        %2119 = vmatprep.subr.bf16.mxu0 0
        %2120 = vmatpush1.bf16.msra.mxu0 0
        %2121 = vmatprep.subr.bf16.mxu0 0
        %2122 = vmatpush1.bf16.msra.mxu0 0
        %2123 = vmatprep.subr.bf16.mxu0 0
        %2124 = vmatpush1.bf16.msra.mxu0 0
        %2125 = vmatprep.subr.bf16.mxu0 0
        %2126 = vmatpush1.bf16.msra.mxu0 0
        %2127 = vmatprep.subr.bf16.mxu0 0
        %2128 = vmatpush1.bf16.msra.mxu0 0
        %2129 = vmatprep.subr.bf16.mxu0 0
        %2130 = vmatpush1.bf16.msra.mxu0 0
        %2131 = vmatprep.subr.bf16.mxu0 0
        %2132 = vmatpush1.bf16.msra.mxu0 0
        %2133 = vmatprep.subr.bf16.mxu0 0
        %2134 = vmatpush1.bf16.msra.mxu0 0
        %2135 = vmatprep.subr.bf16.mxu0 0
        %2136 = vmatpush1.bf16.msra.mxu0 0
        %2137 = vmatprep.subr.bf16.mxu0 0
        %2138 = vmatpush1.bf16.msra.mxu0 0
        %2139 = vmatprep.subr.bf16.mxu0 0
        %2140 = vmatpush1.bf16.msra.mxu0 0
        %2141 = vmatprep.subr.bf16.mxu0 0
        %2142 = vmatpush1.bf16.msra.mxu0 0
        %2143 = vmatprep.subr.bf16.mxu0 0
        %2144 = vmatpush1.bf16.msra.mxu0 0
        %2145 = vmatprep.subr.bf16.mxu0 0
        %2146 = vmatpush1.bf16.msra.mxu0 0
        %2147 = vmatprep.subr.bf16.mxu0 0
        %2148 = vmatpush1.bf16.msra.mxu0 0
        %2149 = vmatprep.mubr.bf16.mxu0 0
        %2150 = vmatmul.mubr.bf16.gmra.mrb[0].mxu0 %v2115
        %v2151 = vpop.f32.mrb[0].mxu0
        %v2152 = vadd.f32 0.0, %v2151
        %v2153 = vpop.f32.mrb[0].mxu0
        %v2154 = vpop.f32.mrb[0].mxu0
        %v2155 = vadd.f32 0.0, %v2154
        %v2156 = vpop.f32.mrb[0].mxu0
        %2157 = vdwg.mxu0
        %v2158 = vadd.f32 %v1883, %v2152
        %v2159 = vadd.f32 %v1884, %v2155
        %2160 = vrot.lane.b32.xlu0 %v786, 48
        %v2161 = vpop.permute.xlu0 %2160
        %2162 = vrot.lane.b32.xlu0 %v788, 48
        %v2163 = vpop.permute.xlu0 %2162
        %v2165 = vsel %vm792, %v2161, 0
        %v2168 = vsel %vm792, %v2163, 0
        %2170 = vmatprep.subr.bf16.mxu0 0
        %2171 = vmatpush1.bf16.xpose.msra.mxu0 %v2168
        %2172 = vmatprep.subr.bf16.mxu0 0
        %2173 = vmatpush1.bf16.xpose.msra.mxu0 0
        %2174 = vmatprep.subr.bf16.mxu0 0
        %2175 = vmatpush1.bf16.xpose.msra.mxu0 0
        %2176 = vmatprep.subr.bf16.mxu0 0
        %2177 = vmatpush1.bf16.xpose.msra.mxu0 0
        %2178 = vmatprep.subr.bf16.mxu0 0
        %2179 = vmatpush1.bf16.xpose.msra.mxu0 0
        %2180 = vmatprep.subr.bf16.mxu0 0
        %2181 = vmatpush1.bf16.xpose.msra.mxu0 0
        %2182 = vmatprep.subr.bf16.mxu0 0
        %2183 = vmatpush1.bf16.xpose.msra.mxu0 0
        %2184 = vmatprep.subr.bf16.mxu0 0
        %2185 = vmatpush1.bf16.xpose.msra.mxu0 0
        %2186 = vmatprep.subr.bf16.mxu0 0
        %2187 = vmatpush1.bf16.xpose.msra.mxu0 0
        %2188 = vmatprep.subr.bf16.mxu0 0
        %2189 = vmatpush1.bf16.xpose.msra.mxu0 0
        %2190 = vmatprep.subr.bf16.mxu0 0
        %2191 = vmatpush1.bf16.xpose.msra.mxu0 0
        %2192 = vmatprep.subr.bf16.mxu0 0
        %2193 = vmatpush1.bf16.xpose.msra.mxu0 0
        %2194 = vmatprep.subr.bf16.mxu0 0
        %2195 = vmatpush1.bf16.xpose.msra.mxu0 0
        %2196 = vmatprep.subr.bf16.mxu0 0
        %2197 = vmatpush1.bf16.xpose.msra.mxu0 0
        %2198 = vmatprep.subr.bf16.mxu0 0
        %2199 = vmatpush1.bf16.xpose.msra.mxu0 0
        %2200 = vmatprep.subr.bf16.mxu0 0
        %2201 = vmatpush1.bf16.xpose.msra.mxu0 0
        %2202 = vmatprep.mubr.bf16.mxu0 0
        %2203 = vmatmul.mubr.bf16.gmra.mrb[0].mxu0 %v2165
        %v2204 = vpop.f32.mrb[0].mxu0
        %v2205 = vadd.f32 0.0, %v2204
        %v2206 = vpop.f32.mrb[0].mxu0
        %v2207 = vpop.f32.mrb[0].mxu0
        %v2208 = vpop.f32.mrb[0].mxu0
        %2209 = vdwg.mxu0
        %2210 = vrot.lane.b32.xlu0 %v787, 48
        %v2211 = vpop.permute.xlu0 %2210
        %2212 = vrot.lane.b32.xlu0 %v789, 48
        %v2213 = vpop.permute.xlu0 %2212
        %v2215 = vsel %vm792, %v2211, 0
        %v2218 = vsel %vm792, %v2213, 0
        %2220 = vmatprep.subr.bf16.mxu0 0
        %2221 = vmatpush1.bf16.xpose.msra.mxu0 %v2218
        %2222 = vmatprep.subr.bf16.mxu0 0
        %2223 = vmatpush1.bf16.xpose.msra.mxu0 0
        %2224 = vmatprep.subr.bf16.mxu0 0
        %2225 = vmatpush1.bf16.xpose.msra.mxu0 0
        %2226 = vmatprep.subr.bf16.mxu0 0
        %2227 = vmatpush1.bf16.xpose.msra.mxu0 0
        %2228 = vmatprep.subr.bf16.mxu0 0
        %2229 = vmatpush1.bf16.xpose.msra.mxu0 0
        %2230 = vmatprep.subr.bf16.mxu0 0
        %2231 = vmatpush1.bf16.xpose.msra.mxu0 0
        %2232 = vmatprep.subr.bf16.mxu0 0
        %2233 = vmatpush1.bf16.xpose.msra.mxu0 0
        %2234 = vmatprep.subr.bf16.mxu0 0
        %2235 = vmatpush1.bf16.xpose.msra.mxu0 0
        %2236 = vmatprep.subr.bf16.mxu0 0
        %2237 = vmatpush1.bf16.xpose.msra.mxu0 0
        %2238 = vmatprep.subr.bf16.mxu0 0
        %2239 = vmatpush1.bf16.xpose.msra.mxu0 0
        %2240 = vmatprep.subr.bf16.mxu0 0
        %2241 = vmatpush1.bf16.xpose.msra.mxu0 0
        %2242 = vmatprep.subr.bf16.mxu0 0
        %2243 = vmatpush1.bf16.xpose.msra.mxu0 0
        %2244 = vmatprep.subr.bf16.mxu0 0
        %2245 = vmatpush1.bf16.xpose.msra.mxu0 0
        %2246 = vmatprep.subr.bf16.mxu0 0
        %2247 = vmatpush1.bf16.xpose.msra.mxu0 0
        %2248 = vmatprep.subr.bf16.mxu0 0
        %2249 = vmatpush1.bf16.xpose.msra.mxu0 0
        %2250 = vmatprep.subr.bf16.mxu0 0
        %2251 = vmatpush1.bf16.xpose.msra.mxu0 0
        %2252 = vmatprep.mubr.bf16.mxu0 0
        %2253 = vmatmul.mubr.bf16.gmra.mrb[0].mxu0 %v2215
        %v2254 = vpop.f32.mrb[0].mxu0
        %v2255 = vadd.f32 0.0, %v2254
        %v2256 = vpop.f32.mrb[0].mxu0
        %v2257 = vpop.f32.mrb[0].mxu0
        %v2258 = vpop.f32.mrb[0].mxu0
        %2259 = vdwg.mxu0
        %v2260 = vsel %vm885, %v2205, -inf
        %2261 = vmax.xlane.f32.xlu0 %v2260
        %v2262 = vpop.xlane.xlu0 %2261
        %v2263 = vsel %vm885, %v2255, -inf
        %2264 = vmax.xlane.f32.xlu0 %v2263
        %v2265 = vpop.xlane.xlu0 %2264
        %v2266 = vsub.f32 %v2205, %v2262
        %v2267 = vsub.f32 %v2255, %v2265
        %v2268 = vmul.f32 %v2266, 1.442695
        %v2269 = vpow.pop %v2268
        %v2270 = vmul.f32 %v2267, 1.442695
        %v2271 = vpow.pop %v2270
        %v2272 = vsel %vm885, %v2269, 0.0
        %2273 = vadd.xlane.f32.xlu0 %v2272
        %v2274 = vpop.xlane.xlu0 %2273
        %v2275 = vsel %vm885, %v2271, 0.0
        %2276 = vadd.xlane.f32.xlu0 %v2275
        %v2277 = vpop.xlane.xlu0 %2276
        %v2278 = vrcp.pop %v2274
        %v2279 = vrcp.pop %v2277
        %v2280 = vmul.f32 %v2269, %v2278
        %v2281 = vmul.f32 %v2271, %v2279
        %v2282 = vpack.c.bf16 %v2280, %v2280
        %v2283 = vpack.c.bf16 %v2281, %v2281
        %2284 = vrot.lane.b32.xlu0 %v790, 48
        %v2285 = vpop.permute.xlu0 %2284
        %v2287 = vsel %vm885, %v2282, 0
        %v2290 = vsel %vm913, %v2285, 0
        %2292 = vmatprep.subr.bf16.mxu0 0
        %2293 = vmatpush1.bf16.msra.mxu0 %v2290
        %2294 = vmatprep.subr.bf16.mxu0 0
        %2295 = vmatpush1.bf16.msra.mxu0 0
        %2296 = vmatprep.subr.bf16.mxu0 0
        %2297 = vmatpush1.bf16.msra.mxu0 0
        %2298 = vmatprep.subr.bf16.mxu0 0
        %2299 = vmatpush1.bf16.msra.mxu0 0
        %2300 = vmatprep.subr.bf16.mxu0 0
        %2301 = vmatpush1.bf16.msra.mxu0 0
        %2302 = vmatprep.subr.bf16.mxu0 0
        %2303 = vmatpush1.bf16.msra.mxu0 0
        %2304 = vmatprep.subr.bf16.mxu0 0
        %2305 = vmatpush1.bf16.msra.mxu0 0
        %2306 = vmatprep.subr.bf16.mxu0 0
        %2307 = vmatpush1.bf16.msra.mxu0 0
        %2308 = vmatprep.subr.bf16.mxu0 0
        %2309 = vmatpush1.bf16.msra.mxu0 0
        %2310 = vmatprep.subr.bf16.mxu0 0
        %2311 = vmatpush1.bf16.msra.mxu0 0
        %2312 = vmatprep.subr.bf16.mxu0 0
        %2313 = vmatpush1.bf16.msra.mxu0 0
        %2314 = vmatprep.subr.bf16.mxu0 0
        %2315 = vmatpush1.bf16.msra.mxu0 0
        %2316 = vmatprep.subr.bf16.mxu0 0
        %2317 = vmatpush1.bf16.msra.mxu0 0
        %2318 = vmatprep.subr.bf16.mxu0 0
        %2319 = vmatpush1.bf16.msra.mxu0 0
        %2320 = vmatprep.subr.bf16.mxu0 0
        %2321 = vmatpush1.bf16.msra.mxu0 0
        %2322 = vmatprep.subr.bf16.mxu0 0
        %2323 = vmatpush1.bf16.msra.mxu0 0
        %2324 = vmatprep.mubr.bf16.mxu0 0
        %2325 = vmatmul.mubr.bf16.gmra.mrb[0].mxu0 %v2287
        %v2326 = vpop.f32.mrb[0].mxu0
        %v2327 = vadd.f32 0.0, %v2326
        %v2328 = vpop.f32.mrb[0].mxu0
        %v2329 = vpop.f32.mrb[0].mxu0
        %v2330 = vpop.f32.mrb[0].mxu0
        %2331 = vdwg.mxu0
        %2332 = vrot.lane.b32.xlu0 %v791, 48
        %v2333 = vpop.permute.xlu0 %2332
        %v2335 = vsel %vm885, %v2283, 0
        %v2338 = vsel %vm913, %v2333, 0
        %2340 = vmatprep.subr.bf16.mxu0 0
        %2341 = vmatpush1.bf16.msra.mxu0 %v2338
        %2342 = vmatprep.subr.bf16.mxu0 0
        %2343 = vmatpush1.bf16.msra.mxu0 0
        %2344 = vmatprep.subr.bf16.mxu0 0
        %2345 = vmatpush1.bf16.msra.mxu0 0
        %2346 = vmatprep.subr.bf16.mxu0 0
        %2347 = vmatpush1.bf16.msra.mxu0 0
        %2348 = vmatprep.subr.bf16.mxu0 0
        %2349 = vmatpush1.bf16.msra.mxu0 0
        %2350 = vmatprep.subr.bf16.mxu0 0
        %2351 = vmatpush1.bf16.msra.mxu0 0
        %2352 = vmatprep.subr.bf16.mxu0 0
        %2353 = vmatpush1.bf16.msra.mxu0 0
        %2354 = vmatprep.subr.bf16.mxu0 0
        %2355 = vmatpush1.bf16.msra.mxu0 0
        %2356 = vmatprep.subr.bf16.mxu0 0
        %2357 = vmatpush1.bf16.msra.mxu0 0
        %2358 = vmatprep.subr.bf16.mxu0 0
        %2359 = vmatpush1.bf16.msra.mxu0 0
        %2360 = vmatprep.subr.bf16.mxu0 0
        %2361 = vmatpush1.bf16.msra.mxu0 0
        %2362 = vmatprep.subr.bf16.mxu0 0
        %2363 = vmatpush1.bf16.msra.mxu0 0
        %2364 = vmatprep.subr.bf16.mxu0 0
        %2365 = vmatpush1.bf16.msra.mxu0 0
        %2366 = vmatprep.subr.bf16.mxu0 0
        %2367 = vmatpush1.bf16.msra.mxu0 0
        %2368 = vmatprep.subr.bf16.mxu0 0
        %2369 = vmatpush1.bf16.msra.mxu0 0
        %2370 = vmatprep.subr.bf16.mxu0 0
        %2371 = vmatpush1.bf16.msra.mxu0 0
        %2372 = vmatprep.mubr.bf16.mxu0 0
        %2373 = vmatmul.mubr.bf16.gmra.mrb[0].mxu0 %v2335
        %v2374 = vpop.f32.mrb[0].mxu0
        %v2375 = vadd.f32 0.0, %v2374
        %v2376 = vpop.f32.mrb[0].mxu0
        %v2377 = vpop.f32.mrb[0].mxu0
        %v2378 = vpop.f32.mrb[0].mxu0
        %2379 = vdwg.mxu0
        %v2380 = vpack.c.bf16 %v2375, %v2327
        %v2381 = vld [vmem:[#allocation7 + $0x28] sm:$0xf]
        %v2382 = vld [vmem:[#allocation7 + $0x2c] sm:$0xf]
        %v2385 = vunpack.c.l.b16 %v2381
        %v2386 = vunpack.c.l.b16 %v2382
        %v2387 = vpack.c.b16 %v2386, %v2385
        %v2390 = vsel %vm792, %v2380, 0
        %2392 = vmatprep.subr.bf16.mxu0 0
        %2393 = vmatpush1.bf16.msra.mxu0 %v2387
        %2394 = vmatprep.subr.bf16.mxu0 0
        %2395 = vmatpush1.bf16.msra.mxu0 0
        %2396 = vmatprep.subr.bf16.mxu0 0
        %2397 = vmatpush1.bf16.msra.mxu0 0
        %2398 = vmatprep.subr.bf16.mxu0 0
        %2399 = vmatpush1.bf16.msra.mxu0 0
        %2400 = vmatprep.subr.bf16.mxu0 0
        %2401 = vmatpush1.bf16.msra.mxu0 0
        %2402 = vmatprep.subr.bf16.mxu0 0
        %2403 = vmatpush1.bf16.msra.mxu0 0
        %2404 = vmatprep.subr.bf16.mxu0 0
        %2405 = vmatpush1.bf16.msra.mxu0 0
        %2406 = vmatprep.subr.bf16.mxu0 0
        %2407 = vmatpush1.bf16.msra.mxu0 0
        %2408 = vmatprep.subr.bf16.mxu0 0
        %2409 = vmatpush1.bf16.msra.mxu0 0
        %2410 = vmatprep.subr.bf16.mxu0 0
        %2411 = vmatpush1.bf16.msra.mxu0 0
        %2412 = vmatprep.subr.bf16.mxu0 0
        %2413 = vmatpush1.bf16.msra.mxu0 0
        %2414 = vmatprep.subr.bf16.mxu0 0
        %2415 = vmatpush1.bf16.msra.mxu0 0
        %2416 = vmatprep.subr.bf16.mxu0 0
        %2417 = vmatpush1.bf16.msra.mxu0 0
        %2418 = vmatprep.subr.bf16.mxu0 0
        %2419 = vmatpush1.bf16.msra.mxu0 0
        %2420 = vmatprep.subr.bf16.mxu0 0
        %2421 = vmatpush1.bf16.msra.mxu0 0
        %2422 = vmatprep.subr.bf16.mxu0 0
        %2423 = vmatpush1.bf16.msra.mxu0 0
        %2424 = vmatprep.mubr.bf16.mxu0 0
        %2425 = vmatmul.mubr.bf16.gmra.mrb[0].mxu0 %v2390
        %v2426 = vpop.f32.mrb[0].mxu0
        %v2427 = vadd.f32 0.0, %v2426
        %v2428 = vpop.f32.mrb[0].mxu0
        %v2429 = vpop.f32.mrb[0].mxu0
        %v2430 = vadd.f32 0.0, %v2429
        %v2431 = vpop.f32.mrb[0].mxu0
        %2432 = vdwg.mxu0
        %v2433 = vadd.f32 %v2158, %v2427
        %v2434 = vadd.f32 %v2159, %v2430
        %2435 = vrot.lane.b32.xlu0 %v786, 32
        %v2436 = vpop.permute.xlu0 %2435
        %2437 = vrot.lane.b32.xlu0 %v788, 32
        %v2438 = vpop.permute.xlu0 %2437
        %v2440 = vsel %vm792, %v2436, 0
        %v2443 = vsel %vm792, %v2438, 0
        %2445 = vmatprep.subr.bf16.mxu0 0
        %2446 = vmatpush1.bf16.xpose.msra.mxu0 %v2443
        %2447 = vmatprep.subr.bf16.mxu0 0
        %2448 = vmatpush1.bf16.xpose.msra.mxu0 0
        %2449 = vmatprep.subr.bf16.mxu0 0
        %2450 = vmatpush1.bf16.xpose.msra.mxu0 0
        %2451 = vmatprep.subr.bf16.mxu0 0
        %2452 = vmatpush1.bf16.xpose.msra.mxu0 0
        %2453 = vmatprep.subr.bf16.mxu0 0
        %2454 = vmatpush1.bf16.xpose.msra.mxu0 0
        %2455 = vmatprep.subr.bf16.mxu0 0
        %2456 = vmatpush1.bf16.xpose.msra.mxu0 0
        %2457 = vmatprep.subr.bf16.mxu0 0
        %2458 = vmatpush1.bf16.xpose.msra.mxu0 0
        %2459 = vmatprep.subr.bf16.mxu0 0
        %2460 = vmatpush1.bf16.xpose.msra.mxu0 0
        %2461 = vmatprep.subr.bf16.mxu0 0
        %2462 = vmatpush1.bf16.xpose.msra.mxu0 0
        %2463 = vmatprep.subr.bf16.mxu0 0
        %2464 = vmatpush1.bf16.xpose.msra.mxu0 0
        %2465 = vmatprep.subr.bf16.mxu0 0
        %2466 = vmatpush1.bf16.xpose.msra.mxu0 0
        %2467 = vmatprep.subr.bf16.mxu0 0
        %2468 = vmatpush1.bf16.xpose.msra.mxu0 0
        %2469 = vmatprep.subr.bf16.mxu0 0
        %2470 = vmatpush1.bf16.xpose.msra.mxu0 0
        %2471 = vmatprep.subr.bf16.mxu0 0
        %2472 = vmatpush1.bf16.xpose.msra.mxu0 0
        %2473 = vmatprep.subr.bf16.mxu0 0
        %2474 = vmatpush1.bf16.xpose.msra.mxu0 0
        %2475 = vmatprep.subr.bf16.mxu0 0
        %2476 = vmatpush1.bf16.xpose.msra.mxu0 0
        %2477 = vmatprep.mubr.bf16.mxu0 0
        %2478 = vmatmul.mubr.bf16.gmra.mrb[0].mxu0 %v2440
        %v2479 = vpop.f32.mrb[0].mxu0
        %v2480 = vadd.f32 0.0, %v2479
        %v2481 = vpop.f32.mrb[0].mxu0
        %v2482 = vpop.f32.mrb[0].mxu0
        %v2483 = vpop.f32.mrb[0].mxu0
        %2484 = vdwg.mxu0
        %2485 = vrot.lane.b32.xlu0 %v787, 32
        %v2486 = vpop.permute.xlu0 %2485
        %2487 = vrot.lane.b32.xlu0 %v789, 32
        %v2488 = vpop.permute.xlu0 %2487
        %v2490 = vsel %vm792, %v2486, 0
        %v2493 = vsel %vm792, %v2488, 0
        %2495 = vmatprep.subr.bf16.mxu0 0
        %2496 = vmatpush1.bf16.xpose.msra.mxu0 %v2493
        %2497 = vmatprep.subr.bf16.mxu0 0
        %2498 = vmatpush1.bf16.xpose.msra.mxu0 0
        %2499 = vmatprep.subr.bf16.mxu0 0
        %2500 = vmatpush1.bf16.xpose.msra.mxu0 0
        %2501 = vmatprep.subr.bf16.mxu0 0
        %2502 = vmatpush1.bf16.xpose.msra.mxu0 0
        %2503 = vmatprep.subr.bf16.mxu0 0
        %2504 = vmatpush1.bf16.xpose.msra.mxu0 0
        %2505 = vmatprep.subr.bf16.mxu0 0
        %2506 = vmatpush1.bf16.xpose.msra.mxu0 0
        %2507 = vmatprep.subr.bf16.mxu0 0
        %2508 = vmatpush1.bf16.xpose.msra.mxu0 0
        %2509 = vmatprep.subr.bf16.mxu0 0
        %2510 = vmatpush1.bf16.xpose.msra.mxu0 0
        %2511 = vmatprep.subr.bf16.mxu0 0
        %2512 = vmatpush1.bf16.xpose.msra.mxu0 0
        %2513 = vmatprep.subr.bf16.mxu0 0
        %2514 = vmatpush1.bf16.xpose.msra.mxu0 0
        %2515 = vmatprep.subr.bf16.mxu0 0
        %2516 = vmatpush1.bf16.xpose.msra.mxu0 0
        %2517 = vmatprep.subr.bf16.mxu0 0
        %2518 = vmatpush1.bf16.xpose.msra.mxu0 0
        %2519 = vmatprep.subr.bf16.mxu0 0
        %2520 = vmatpush1.bf16.xpose.msra.mxu0 0
        %2521 = vmatprep.subr.bf16.mxu0 0
        %2522 = vmatpush1.bf16.xpose.msra.mxu0 0
        %2523 = vmatprep.subr.bf16.mxu0 0
        %2524 = vmatpush1.bf16.xpose.msra.mxu0 0
        %2525 = vmatprep.subr.bf16.mxu0 0
        %2526 = vmatpush1.bf16.xpose.msra.mxu0 0
        %2527 = vmatprep.mubr.bf16.mxu0 0
        %2528 = vmatmul.mubr.bf16.gmra.mrb[0].mxu0 %v2490
        %v2529 = vpop.f32.mrb[0].mxu0
        %v2530 = vadd.f32 0.0, %v2529
        %v2531 = vpop.f32.mrb[0].mxu0
        %v2532 = vpop.f32.mrb[0].mxu0
        %v2533 = vpop.f32.mrb[0].mxu0
        %2534 = vdwg.mxu0
        %v2535 = vsel %vm885, %v2480, -inf
        %2536 = vmax.xlane.f32.xlu0 %v2535
        %v2537 = vpop.xlane.xlu0 %2536
        %v2538 = vsel %vm885, %v2530, -inf
        %2539 = vmax.xlane.f32.xlu0 %v2538
        %v2540 = vpop.xlane.xlu0 %2539
        %v2541 = vsub.f32 %v2480, %v2537
        %v2542 = vsub.f32 %v2530, %v2540
        %v2543 = vmul.f32 %v2541, 1.442695
        %v2544 = vpow.pop %v2543
        %v2545 = vmul.f32 %v2542, 1.442695
        %v2546 = vpow.pop %v2545
        %v2547 = vsel %vm885, %v2544, 0.0
        %2548 = vadd.xlane.f32.xlu0 %v2547
        %v2549 = vpop.xlane.xlu0 %2548
        %v2550 = vsel %vm885, %v2546, 0.0
        %2551 = vadd.xlane.f32.xlu0 %v2550
        %v2552 = vpop.xlane.xlu0 %2551
        %v2553 = vrcp.pop %v2549
        %v2554 = vrcp.pop %v2552
        %v2555 = vmul.f32 %v2544, %v2553
        %v2556 = vmul.f32 %v2546, %v2554
        %v2557 = vpack.c.bf16 %v2555, %v2555
        %v2558 = vpack.c.bf16 %v2556, %v2556
        %2559 = vrot.lane.b32.xlu0 %v790, 32
        %v2560 = vpop.permute.xlu0 %2559
        %v2562 = vsel %vm885, %v2557, 0
        %v2565 = vsel %vm913, %v2560, 0
        %2567 = vmatprep.subr.bf16.mxu0 0
        %2568 = vmatpush1.bf16.msra.mxu0 %v2565
        %2569 = vmatprep.subr.bf16.mxu0 0
        %2570 = vmatpush1.bf16.msra.mxu0 0
        %2571 = vmatprep.subr.bf16.mxu0 0
        %2572 = vmatpush1.bf16.msra.mxu0 0
        %2573 = vmatprep.subr.bf16.mxu0 0
        %2574 = vmatpush1.bf16.msra.mxu0 0
        %2575 = vmatprep.subr.bf16.mxu0 0
        %2576 = vmatpush1.bf16.msra.mxu0 0
        %2577 = vmatprep.subr.bf16.mxu0 0
        %2578 = vmatpush1.bf16.msra.mxu0 0
        %2579 = vmatprep.subr.bf16.mxu0 0
        %2580 = vmatpush1.bf16.msra.mxu0 0
        %2581 = vmatprep.subr.bf16.mxu0 0
        %2582 = vmatpush1.bf16.msra.mxu0 0
        %2583 = vmatprep.subr.bf16.mxu0 0
        %2584 = vmatpush1.bf16.msra.mxu0 0
        %2585 = vmatprep.subr.bf16.mxu0 0
        %2586 = vmatpush1.bf16.msra.mxu0 0
        %2587 = vmatprep.subr.bf16.mxu0 0
        %2588 = vmatpush1.bf16.msra.mxu0 0
        %2589 = vmatprep.subr.bf16.mxu0 0
        %2590 = vmatpush1.bf16.msra.mxu0 0
        %2591 = vmatprep.subr.bf16.mxu0 0
        %2592 = vmatpush1.bf16.msra.mxu0 0
        %2593 = vmatprep.subr.bf16.mxu0 0
        %2594 = vmatpush1.bf16.msra.mxu0 0
        %2595 = vmatprep.subr.bf16.mxu0 0
        %2596 = vmatpush1.bf16.msra.mxu0 0
        %2597 = vmatprep.subr.bf16.mxu0 0
        %2598 = vmatpush1.bf16.msra.mxu0 0
        %2599 = vmatprep.mubr.bf16.mxu0 0
        %2600 = vmatmul.mubr.bf16.gmra.mrb[0].mxu0 %v2562
        %v2601 = vpop.f32.mrb[0].mxu0
        %v2602 = vadd.f32 0.0, %v2601
        %v2603 = vpop.f32.mrb[0].mxu0
        %v2604 = vpop.f32.mrb[0].mxu0
        %v2605 = vpop.f32.mrb[0].mxu0
        %2606 = vdwg.mxu0
        %2607 = vrot.lane.b32.xlu0 %v791, 32
        %v2608 = vpop.permute.xlu0 %2607
        %v2610 = vsel %vm885, %v2558, 0
        %v2613 = vsel %vm913, %v2608, 0
        %2615 = vmatprep.subr.bf16.mxu0 0
        %2616 = vmatpush1.bf16.msra.mxu0 %v2613
        %2617 = vmatprep.subr.bf16.mxu0 0
        %2618 = vmatpush1.bf16.msra.mxu0 0
        %2619 = vmatprep.subr.bf16.mxu0 0
        %2620 = vmatpush1.bf16.msra.mxu0 0
        %2621 = vmatprep.subr.bf16.mxu0 0
        %2622 = vmatpush1.bf16.msra.mxu0 0
        %2623 = vmatprep.subr.bf16.mxu0 0
        %2624 = vmatpush1.bf16.msra.mxu0 0
        %2625 = vmatprep.subr.bf16.mxu0 0
        %2626 = vmatpush1.bf16.msra.mxu0 0
        %2627 = vmatprep.subr.bf16.mxu0 0
        %2628 = vmatpush1.bf16.msra.mxu0 0
        %2629 = vmatprep.subr.bf16.mxu0 0
        %2630 = vmatpush1.bf16.msra.mxu0 0
        %2631 = vmatprep.subr.bf16.mxu0 0
        %2632 = vmatpush1.bf16.msra.mxu0 0
        %2633 = vmatprep.subr.bf16.mxu0 0
        %2634 = vmatpush1.bf16.msra.mxu0 0
        %2635 = vmatprep.subr.bf16.mxu0 0
        %2636 = vmatpush1.bf16.msra.mxu0 0
        %2637 = vmatprep.subr.bf16.mxu0 0
        %2638 = vmatpush1.bf16.msra.mxu0 0
        %2639 = vmatprep.subr.bf16.mxu0 0
        %2640 = vmatpush1.bf16.msra.mxu0 0
        %2641 = vmatprep.subr.bf16.mxu0 0
        %2642 = vmatpush1.bf16.msra.mxu0 0
        %2643 = vmatprep.subr.bf16.mxu0 0
        %2644 = vmatpush1.bf16.msra.mxu0 0
        %2645 = vmatprep.subr.bf16.mxu0 0
        %2646 = vmatpush1.bf16.msra.mxu0 0
        %2647 = vmatprep.mubr.bf16.mxu0 0
        %2648 = vmatmul.mubr.bf16.gmra.mrb[0].mxu0 %v2610
        %v2649 = vpop.f32.mrb[0].mxu0
        %v2650 = vadd.f32 0.0, %v2649
        %v2651 = vpop.f32.mrb[0].mxu0
        %v2652 = vpop.f32.mrb[0].mxu0
        %v2653 = vpop.f32.mrb[0].mxu0
        %2654 = vdwg.mxu0
        %v2655 = vpack.c.bf16 %v2650, %v2602
        %v2656 = vld [vmem:[#allocation7 + $0x30] sm:$0xf]
        %v2657 = vld [vmem:[#allocation7 + $0x34] sm:$0xf]
        %v2660 = vunpack.c.l.b16 %v2656
        %v2661 = vunpack.c.l.b16 %v2657
        %v2662 = vpack.c.b16 %v2661, %v2660
        %v2665 = vsel %vm792, %v2655, 0
        %2667 = vmatprep.subr.bf16.mxu0 0
        %2668 = vmatpush1.bf16.msra.mxu0 %v2662
        %2669 = vmatprep.subr.bf16.mxu0 0
        %2670 = vmatpush1.bf16.msra.mxu0 0
        %2671 = vmatprep.subr.bf16.mxu0 0
        %2672 = vmatpush1.bf16.msra.mxu0 0
        %2673 = vmatprep.subr.bf16.mxu0 0
        %2674 = vmatpush1.bf16.msra.mxu0 0
        %2675 = vmatprep.subr.bf16.mxu0 0
        %2676 = vmatpush1.bf16.msra.mxu0 0
        %2677 = vmatprep.subr.bf16.mxu0 0
        %2678 = vmatpush1.bf16.msra.mxu0 0
        %2679 = vmatprep.subr.bf16.mxu0 0
        %2680 = vmatpush1.bf16.msra.mxu0 0
        %2681 = vmatprep.subr.bf16.mxu0 0
        %2682 = vmatpush1.bf16.msra.mxu0 0
        %2683 = vmatprep.subr.bf16.mxu0 0
        %2684 = vmatpush1.bf16.msra.mxu0 0
        %2685 = vmatprep.subr.bf16.mxu0 0
        %2686 = vmatpush1.bf16.msra.mxu0 0
        %2687 = vmatprep.subr.bf16.mxu0 0
        %2688 = vmatpush1.bf16.msra.mxu0 0
        %2689 = vmatprep.subr.bf16.mxu0 0
        %2690 = vmatpush1.bf16.msra.mxu0 0
        %2691 = vmatprep.subr.bf16.mxu0 0
        %2692 = vmatpush1.bf16.msra.mxu0 0
        %2693 = vmatprep.subr.bf16.mxu0 0
        %2694 = vmatpush1.bf16.msra.mxu0 0
        %2695 = vmatprep.subr.bf16.mxu0 0
        %2696 = vmatpush1.bf16.msra.mxu0 0
        %2697 = vmatprep.subr.bf16.mxu0 0
        %2698 = vmatpush1.bf16.msra.mxu0 0
        %2699 = vmatprep.mubr.bf16.mxu0 0
        %2700 = vmatmul.mubr.bf16.gmra.mrb[0].mxu0 %v2665
        %v2701 = vpop.f32.mrb[0].mxu0
        %v2702 = vadd.f32 0.0, %v2701
        %v2703 = vpop.f32.mrb[0].mxu0
        %v2704 = vpop.f32.mrb[0].mxu0
        %v2705 = vadd.f32 0.0, %v2704
        %v2706 = vpop.f32.mrb[0].mxu0
        %2707 = vdwg.mxu0
        %v2708 = vadd.f32 %v2433, %v2702
        %v2709 = vadd.f32 %v2434, %v2705
        %2710 = vrot.lane.b32.xlu0 %v786, 16
        %v2711 = vpop.permute.xlu0 %2710
        %2712 = vrot.lane.b32.xlu0 %v788, 16
        %v2713 = vpop.permute.xlu0 %2712
        %v2715 = vsel %vm792, %v2711, 0
        %v2718 = vsel %vm792, %v2713, 0
        %2720 = vmatprep.subr.bf16.mxu0 0
        %2721 = vmatpush1.bf16.xpose.msra.mxu0 %v2718
        %2722 = vmatprep.subr.bf16.mxu0 0
        %2723 = vmatpush1.bf16.xpose.msra.mxu0 0
        %2724 = vmatprep.subr.bf16.mxu0 0
        %2725 = vmatpush1.bf16.xpose.msra.mxu0 0
        %2726 = vmatprep.subr.bf16.mxu0 0
        %2727 = vmatpush1.bf16.xpose.msra.mxu0 0
        %2728 = vmatprep.subr.bf16.mxu0 0
        %2729 = vmatpush1.bf16.xpose.msra.mxu0 0
        %2730 = vmatprep.subr.bf16.mxu0 0
        %2731 = vmatpush1.bf16.xpose.msra.mxu0 0
        %2732 = vmatprep.subr.bf16.mxu0 0
        %2733 = vmatpush1.bf16.xpose.msra.mxu0 0
        %2734 = vmatprep.subr.bf16.mxu0 0
        %2735 = vmatpush1.bf16.xpose.msra.mxu0 0
        %2736 = vmatprep.subr.bf16.mxu0 0
        %2737 = vmatpush1.bf16.xpose.msra.mxu0 0
        %2738 = vmatprep.subr.bf16.mxu0 0
        %2739 = vmatpush1.bf16.xpose.msra.mxu0 0
        %2740 = vmatprep.subr.bf16.mxu0 0
        %2741 = vmatpush1.bf16.xpose.msra.mxu0 0
        %2742 = vmatprep.subr.bf16.mxu0 0
        %2743 = vmatpush1.bf16.xpose.msra.mxu0 0
        %2744 = vmatprep.subr.bf16.mxu0 0
        %2745 = vmatpush1.bf16.xpose.msra.mxu0 0
        %2746 = vmatprep.subr.bf16.mxu0 0
        %2747 = vmatpush1.bf16.xpose.msra.mxu0 0
        %2748 = vmatprep.subr.bf16.mxu0 0
        %2749 = vmatpush1.bf16.xpose.msra.mxu0 0
        %2750 = vmatprep.subr.bf16.mxu0 0
        %2751 = vmatpush1.bf16.xpose.msra.mxu0 0
        %2752 = vmatprep.mubr.bf16.mxu0 0
        %2753 = vmatmul.mubr.bf16.gmra.mrb[0].mxu0 %v2715
        %v2754 = vpop.f32.mrb[0].mxu0
        %v2755 = vadd.f32 0.0, %v2754
        %v2756 = vpop.f32.mrb[0].mxu0
        %v2757 = vpop.f32.mrb[0].mxu0
        %v2758 = vpop.f32.mrb[0].mxu0
        %2759 = vdwg.mxu0
        %2760 = vrot.lane.b32.xlu0 %v787, 16
        %v2761 = vpop.permute.xlu0 %2760
        %2762 = vrot.lane.b32.xlu0 %v789, 16
        %v2763 = vpop.permute.xlu0 %2762
        %v2765 = vsel %vm792, %v2761, 0
        %v2768 = vsel %vm792, %v2763, 0
        %2770 = vmatprep.subr.bf16.mxu0 0
        %2771 = vmatpush1.bf16.xpose.msra.mxu0 %v2768
        %2772 = vmatprep.subr.bf16.mxu0 0
        %2773 = vmatpush1.bf16.xpose.msra.mxu0 0
        %2774 = vmatprep.subr.bf16.mxu0 0
        %2775 = vmatpush1.bf16.xpose.msra.mxu0 0
        %2776 = vmatprep.subr.bf16.mxu0 0
        %2777 = vmatpush1.bf16.xpose.msra.mxu0 0
        %2778 = vmatprep.subr.bf16.mxu0 0
        %2779 = vmatpush1.bf16.xpose.msra.mxu0 0
        %2780 = vmatprep.subr.bf16.mxu0 0
        %2781 = vmatpush1.bf16.xpose.msra.mxu0 0
        %2782 = vmatprep.subr.bf16.mxu0 0
        %2783 = vmatpush1.bf16.xpose.msra.mxu0 0
        %2784 = vmatprep.subr.bf16.mxu0 0
        %2785 = vmatpush1.bf16.xpose.msra.mxu0 0
        %2786 = vmatprep.subr.bf16.mxu0 0
        %2787 = vmatpush1.bf16.xpose.msra.mxu0 0
        %2788 = vmatprep.subr.bf16.mxu0 0
        %2789 = vmatpush1.bf16.xpose.msra.mxu0 0
        %2790 = vmatprep.subr.bf16.mxu0 0
        %2791 = vmatpush1.bf16.xpose.msra.mxu0 0
        %2792 = vmatprep.subr.bf16.mxu0 0
        %2793 = vmatpush1.bf16.xpose.msra.mxu0 0
        %2794 = vmatprep.subr.bf16.mxu0 0
        %2795 = vmatpush1.bf16.xpose.msra.mxu0 0
        %2796 = vmatprep.subr.bf16.mxu0 0
        %2797 = vmatpush1.bf16.xpose.msra.mxu0 0
        %2798 = vmatprep.subr.bf16.mxu0 0
        %2799 = vmatpush1.bf16.xpose.msra.mxu0 0
        %2800 = vmatprep.subr.bf16.mxu0 0
        %2801 = vmatpush1.bf16.xpose.msra.mxu0 0
        %2802 = vmatprep.mubr.bf16.mxu0 0
        %2803 = vmatmul.mubr.bf16.gmra.mrb[0].mxu0 %v2765
        %v2804 = vpop.f32.mrb[0].mxu0
        %v2805 = vadd.f32 0.0, %v2804
        %v2806 = vpop.f32.mrb[0].mxu0
        %v2807 = vpop.f32.mrb[0].mxu0
        %v2808 = vpop.f32.mrb[0].mxu0
        %2809 = vdwg.mxu0
        %v2810 = vsel %vm885, %v2755, -inf
        %2811 = vmax.xlane.f32.xlu0 %v2810
        %v2812 = vpop.xlane.xlu0 %2811
        %v2813 = vsel %vm885, %v2805, -inf
        %2814 = vmax.xlane.f32.xlu0 %v2813
        %v2815 = vpop.xlane.xlu0 %2814
        %v2816 = vsub.f32 %v2755, %v2812
        %v2817 = vsub.f32 %v2805, %v2815
        %v2818 = vmul.f32 %v2816, 1.442695
        %v2819 = vpow.pop %v2818
        %v2820 = vmul.f32 %v2817, 1.442695
        %v2821 = vpow.pop %v2820
        %v2822 = vsel %vm885, %v2819, 0.0
        %2823 = vadd.xlane.f32.xlu0 %v2822
        %v2824 = vpop.xlane.xlu0 %2823
        %v2825 = vsel %vm885, %v2821, 0.0
        %2826 = vadd.xlane.f32.xlu0 %v2825
        %v2827 = vpop.xlane.xlu0 %2826
        %v2828 = vrcp.pop %v2824
        %v2829 = vrcp.pop %v2827
        %v2830 = vmul.f32 %v2819, %v2828
        %v2831 = vmul.f32 %v2821, %v2829
        %v2832 = vpack.c.bf16 %v2830, %v2830
        %v2833 = vpack.c.bf16 %v2831, %v2831
        %2834 = vrot.lane.b32.xlu0 %v790, 16
        %v2835 = vpop.permute.xlu0 %2834
        %v2837 = vsel %vm885, %v2832, 0
        %v2840 = vsel %vm913, %v2835, 0
        %2842 = vmatprep.subr.bf16.mxu0 0
        %2843 = vmatpush1.bf16.msra.mxu0 %v2840
        %2844 = vmatprep.subr.bf16.mxu0 0
        %2845 = vmatpush1.bf16.msra.mxu0 0
        %2846 = vmatprep.subr.bf16.mxu0 0
        %2847 = vmatpush1.bf16.msra.mxu0 0
        %2848 = vmatprep.subr.bf16.mxu0 0
        %2849 = vmatpush1.bf16.msra.mxu0 0
        %2850 = vmatprep.subr.bf16.mxu0 0
        %2851 = vmatpush1.bf16.msra.mxu0 0
        %2852 = vmatprep.subr.bf16.mxu0 0
        %2853 = vmatpush1.bf16.msra.mxu0 0
        %2854 = vmatprep.subr.bf16.mxu0 0
        %2855 = vmatpush1.bf16.msra.mxu0 0
        %2856 = vmatprep.subr.bf16.mxu0 0
        %2857 = vmatpush1.bf16.msra.mxu0 0
        %2858 = vmatprep.subr.bf16.mxu0 0
        %2859 = vmatpush1.bf16.msra.mxu0 0
        %2860 = vmatprep.subr.bf16.mxu0 0
        %2861 = vmatpush1.bf16.msra.mxu0 0
        %2862 = vmatprep.subr.bf16.mxu0 0
        %2863 = vmatpush1.bf16.msra.mxu0 0
        %2864 = vmatprep.subr.bf16.mxu0 0
        %2865 = vmatpush1.bf16.msra.mxu0 0
        %2866 = vmatprep.subr.bf16.mxu0 0
        %2867 = vmatpush1.bf16.msra.mxu0 0
        %2868 = vmatprep.subr.bf16.mxu0 0
        %2869 = vmatpush1.bf16.msra.mxu0 0
        %2870 = vmatprep.subr.bf16.mxu0 0
        %2871 = vmatpush1.bf16.msra.mxu0 0
        %2872 = vmatprep.subr.bf16.mxu0 0
        %2873 = vmatpush1.bf16.msra.mxu0 0
        %2874 = vmatprep.mubr.bf16.mxu0 0
        %2875 = vmatmul.mubr.bf16.gmra.mrb[0].mxu0 %v2837
        %v2876 = vpop.f32.mrb[0].mxu0
        %v2877 = vadd.f32 0.0, %v2876
        %v2878 = vpop.f32.mrb[0].mxu0
        %v2879 = vpop.f32.mrb[0].mxu0
        %v2880 = vpop.f32.mrb[0].mxu0
        %2881 = vdwg.mxu0
        %2882 = vrot.lane.b32.xlu0 %v791, 16
        %v2883 = vpop.permute.xlu0 %2882
        %v2885 = vsel %vm885, %v2833, 0
        %v2888 = vsel %vm913, %v2883, 0
        %2890 = vmatprep.subr.bf16.mxu0 0
        %2891 = vmatpush1.bf16.msra.mxu0 %v2888
        %2892 = vmatprep.subr.bf16.mxu0 0
        %2893 = vmatpush1.bf16.msra.mxu0 0
        %2894 = vmatprep.subr.bf16.mxu0 0
        %2895 = vmatpush1.bf16.msra.mxu0 0
        %2896 = vmatprep.subr.bf16.mxu0 0
        %2897 = vmatpush1.bf16.msra.mxu0 0
        %2898 = vmatprep.subr.bf16.mxu0 0
        %2899 = vmatpush1.bf16.msra.mxu0 0
        %2900 = vmatprep.subr.bf16.mxu0 0
        %2901 = vmatpush1.bf16.msra.mxu0 0
        %2902 = vmatprep.subr.bf16.mxu0 0
        %2903 = vmatpush1.bf16.msra.mxu0 0
        %2904 = vmatprep.subr.bf16.mxu0 0
        %2905 = vmatpush1.bf16.msra.mxu0 0
        %2906 = vmatprep.subr.bf16.mxu0 0
        %2907 = vmatpush1.bf16.msra.mxu0 0
        %2908 = vmatprep.subr.bf16.mxu0 0
        %2909 = vmatpush1.bf16.msra.mxu0 0
        %2910 = vmatprep.subr.bf16.mxu0 0
        %2911 = vmatpush1.bf16.msra.mxu0 0
        %2912 = vmatprep.subr.bf16.mxu0 0
        %2913 = vmatpush1.bf16.msra.mxu0 0
        %2914 = vmatprep.subr.bf16.mxu0 0
        %2915 = vmatpush1.bf16.msra.mxu0 0
        %2916 = vmatprep.subr.bf16.mxu0 0
        %2917 = vmatpush1.bf16.msra.mxu0 0
        %2918 = vmatprep.subr.bf16.mxu0 0
        %2919 = vmatpush1.bf16.msra.mxu0 0
        %2920 = vmatprep.subr.bf16.mxu0 0
        %2921 = vmatpush1.bf16.msra.mxu0 0
        %2922 = vmatprep.mubr.bf16.mxu0 0
        %2923 = vmatmul.mubr.bf16.gmra.mrb[0].mxu0 %v2885
        %v2924 = vpop.f32.mrb[0].mxu0
        %v2925 = vadd.f32 0.0, %v2924
        %v2926 = vpop.f32.mrb[0].mxu0
        %v2927 = vpop.f32.mrb[0].mxu0
        %v2928 = vpop.f32.mrb[0].mxu0
        %2929 = vdwg.mxu0
        %v2930 = vpack.c.bf16 %v2925, %v2877
        %v2931 = vld [vmem:[#allocation7 + $0x38] sm:$0xf]
        %v2932 = vld [vmem:[#allocation7 + $0x3c] sm:$0xf]
        %v2935 = vunpack.c.l.b16 %v2931
        %v2936 = vunpack.c.l.b16 %v2932
        %v2937 = vpack.c.b16 %v2936, %v2935
        %v2940 = vsel %vm792, %v2930, 0
        %2942 = vmatprep.subr.bf16.mxu0 0
        %2943 = vmatpush1.bf16.msra.mxu0 %v2937
        %2944 = vmatprep.subr.bf16.mxu0 0
        %2945 = vmatpush1.bf16.msra.mxu0 0
        %2946 = vmatprep.subr.bf16.mxu0 0
        %2947 = vmatpush1.bf16.msra.mxu0 0
        %2948 = vmatprep.subr.bf16.mxu0 0
        %2949 = vmatpush1.bf16.msra.mxu0 0
        %2950 = vmatprep.subr.bf16.mxu0 0
        %2951 = vmatpush1.bf16.msra.mxu0 0
        %2952 = vmatprep.subr.bf16.mxu0 0
        %2953 = vmatpush1.bf16.msra.mxu0 0
        %2954 = vmatprep.subr.bf16.mxu0 0
        %2955 = vmatpush1.bf16.msra.mxu0 0
        %2956 = vmatprep.subr.bf16.mxu0 0
        %2957 = vmatpush1.bf16.msra.mxu0 0
        %2958 = vmatprep.subr.bf16.mxu0 0
        %2959 = vmatpush1.bf16.msra.mxu0 0
        %2960 = vmatprep.subr.bf16.mxu0 0
        %2961 = vmatpush1.bf16.msra.mxu0 0
        %2962 = vmatprep.subr.bf16.mxu0 0
        %2963 = vmatpush1.bf16.msra.mxu0 0
        %2964 = vmatprep.subr.bf16.mxu0 0
        %2965 = vmatpush1.bf16.msra.mxu0 0
        %2966 = vmatprep.subr.bf16.mxu0 0
        %2967 = vmatpush1.bf16.msra.mxu0 0
        %2968 = vmatprep.subr.bf16.mxu0 0
        %2969 = vmatpush1.bf16.msra.mxu0 0
        %2970 = vmatprep.subr.bf16.mxu0 0
        %2971 = vmatpush1.bf16.msra.mxu0 0
        %2972 = vmatprep.subr.bf16.mxu0 0
        %2973 = vmatpush1.bf16.msra.mxu0 0
        %2974 = vmatprep.mubr.bf16.mxu0 0
        %2975 = vmatmul.mubr.bf16.gmra.mrb[0].mxu0 %v2940
        %v2976 = vpop.f32.mrb[0].mxu0
        %v2977 = vadd.f32 0.0, %v2976
        %v2978 = vpop.f32.mrb[0].mxu0
        %v2979 = vpop.f32.mrb[0].mxu0
        %v2980 = vadd.f32 0.0, %v2979
        %v2981 = vpop.f32.mrb[0].mxu0
        %2982 = vdwg.mxu0
        %v2983 = vadd.f32 %v2708, %v2977
        %v2984 = vadd.f32 %v2709, %v2980
        %v2985 = vld [vmem:[%s4] sm:$0x1]
        %v2987 = vlaneseq
        %v2988 = vshrl.u32 %v2987, 7
        %v2989 = vsub.s32 0, %v2988
        %v2990 = vrot.slane %v2985, %v2989
        %v2992 = vadd.f32 %v2983, %v2990
        %v2993 = vadd.f32 %v2984, %v2990
        %v2994 = vadd.f32 %v520, %v2992
        %v2995 = vadd.f32 %v521, %v2993
        %v2996 = vld [vmem:[%s9] sm:$0x1]
        %v2997 = vld [vmem:[%s10] sm:$0x1]
        %2998 = vadd.xlane.f32.xlu0 %v2994
        %v2999 = vpop.xlane.xlu0 %2998
        %3000 = vadd.xlane.f32.xlu0 %v2995
        %v3001 = vpop.xlane.xlu0 %3000
        %v3002 = vrcp.pop 128.0
        %v3003 = vmul.f32 %v2999, %v3002
        %v3004 = vmul.f32 %v3001, %v3002
        %v3005 = vsub.f32 %v2994, %v3003
        %v3006 = vsub.f32 %v2995, %v3004
        %v3007 = vmul.f32 %v3005, %v3005
        %v3008 = vmul.f32 %v3006, %v3006
        %3009 = vadd.xlane.f32.xlu0 %v3007
        %v3010 = vpop.xlane.xlu0 %3009
        %3011 = vadd.xlane.f32.xlu0 %v3008
        %v3012 = vpop.xlane.xlu0 %3011
        %v3013 = vmul.f32 %v3010, %v3002
        %v3014 = vmul.f32 %v3012, %v3002
        %v3015 = vadd.f32 %v3013, 1e-05
        %v3016 = vadd.f32 %v3014, 1e-05
        %v3017 = vrsqrt.pop %v3015
        %v3018 = vrsqrt.pop %v3016
        %v3019 = vmul.f32 %v3005, %v3017
        %v3020 = vmul.f32 %v3006, %v3018
        %v3022 = vlaneseq
        %v3023 = vshrl.u32 %v3022, 7
        %v3024 = vsub.s32 0, %v3023
        %v3025 = vrot.slane %v2996, %v3024
        %v3027 = vmul.f32 %v3019, %v3025
        %v3028 = vmul.f32 %v3020, %v3025
        %v3030 = vlaneseq
        %v3031 = vshrl.u32 %v3030, 7
        %v3032 = vsub.s32 0, %v3031
        %v3033 = vrot.slane %v2997, %v3032
        %v3035 = vadd.f32 %v3027, %v3033
        %v3036 = vadd.f32 %v3028, %v3033
        %v3037 = vpack.c.bf16 %v3036, %v3035
        %v3038 = vld [vmem:[#allocation8] sm:$0xf]
        %v3039 = vld [vmem:[#allocation8 + $0x4] sm:$0xf]
        %v3040 = vld [vmem:[#allocation8 + $0x8] sm:$0xf]
        %v3041 = vld [vmem:[#allocation8 + $0xc] sm:$0xf]
        %v3042 = vld [vmem:[#allocation8 + $0x10] sm:$0xf]
        %v3043 = vld [vmem:[#allocation8 + $0x14] sm:$0xf]
        %v3044 = vld [vmem:[#allocation8 + $0x18] sm:$0xf]
        %v3045 = vld [vmem:[#allocation8 + $0x1c] sm:$0xf]
        %v3046 = vld [vmem:[#allocation8 + $0x20] sm:$0xf]
        %v3047 = vld [vmem:[#allocation8 + $0x24] sm:$0xf]
        %v3048 = vld [vmem:[#allocation8 + $0x28] sm:$0xf]
        %v3049 = vld [vmem:[#allocation8 + $0x2c] sm:$0xf]
        %v3050 = vld [vmem:[#allocation8 + $0x30] sm:$0xf]
        %v3051 = vld [vmem:[#allocation8 + $0x34] sm:$0xf]
        %v3052 = vld [vmem:[#allocation8 + $0x38] sm:$0xf]
        %v3053 = vld [vmem:[#allocation8 + $0x3c] sm:$0xf]
        %v3054 = vld [vmem:[%s6] sm:$0x1]
        %v3056 = vlaneseq
        %v3057 = vshrl.u32 %v3056, 7
        %v3058 = vsub.s32 0, %v3057
        %v3059 = vrot.slane %v3054, %v3058
        %v3077 = vunpack.c.l.b16 %v3038
        %v3078 = vunpack.c.l.b16 %v3039
        %v3079 = vunpack.c.l.b16 %v3040
        %v3080 = vunpack.c.l.b16 %v3041
        %v3081 = vunpack.c.l.b16 %v3042
        %v3082 = vunpack.c.l.b16 %v3043
        %v3083 = vunpack.c.l.b16 %v3044
        %v3084 = vunpack.c.l.b16 %v3045
        %v3085 = vunpack.c.l.b16 %v3046
        %v3086 = vunpack.c.l.b16 %v3047
        %v3087 = vunpack.c.l.b16 %v3048
        %v3088 = vunpack.c.l.b16 %v3049
        %v3089 = vunpack.c.l.b16 %v3050
        %v3090 = vunpack.c.l.b16 %v3051
        %v3091 = vunpack.c.l.b16 %v3052
        %v3092 = vunpack.c.l.b16 %v3053
        %v3093 = vpack.c.b16 %v3078, %v3077
        %v3094 = vpack.c.b16 %v3080, %v3079
        %v3095 = vpack.c.b16 %v3082, %v3081
        %v3096 = vpack.c.b16 %v3084, %v3083
        %v3097 = vpack.c.b16 %v3086, %v3085
        %v3098 = vpack.c.b16 %v3088, %v3087
        %v3099 = vpack.c.b16 %v3090, %v3089
        %v3100 = vpack.c.b16 %v3092, %v3091
        %3109 = vmatprep.subr.bf16.mxu0 0
        %3110 = vmatpush1.bf16.msra.mxu0 %v3093
        %3111 = vmatprep.subr.bf16.mxu0 0
        %3112 = vmatpush1.bf16.msra.mxu0 %v3094
        %3113 = vmatprep.subr.bf16.mxu0 0
        %3114 = vmatpush1.bf16.msra.mxu0 %v3095
        %3115 = vmatprep.subr.bf16.mxu0 0
        %3116 = vmatpush1.bf16.msra.mxu0 %v3096
        %3117 = vmatprep.subr.bf16.mxu0 0
        %3118 = vmatpush1.bf16.msra.mxu0 %v3097
        %3119 = vmatprep.subr.bf16.mxu0 0
        %3120 = vmatpush1.bf16.msra.mxu0 %v3098
        %3121 = vmatprep.subr.bf16.mxu0 0
        %3122 = vmatpush1.bf16.msra.mxu0 %v3099
        %3123 = vmatprep.subr.bf16.mxu0 0
        %3124 = vmatpush1.bf16.msra.mxu0 %v3100
        %3125 = vmatprep.subr.bf16.mxu0 0
        %3126 = vmatpush1.bf16.msra.mxu0 0
        %3127 = vmatprep.subr.bf16.mxu0 0
        %3128 = vmatpush1.bf16.msra.mxu0 0
        %3129 = vmatprep.subr.bf16.mxu0 0
        %3130 = vmatpush1.bf16.msra.mxu0 0
        %3131 = vmatprep.subr.bf16.mxu0 0
        %3132 = vmatpush1.bf16.msra.mxu0 0
        %3133 = vmatprep.subr.bf16.mxu0 0
        %3134 = vmatpush1.bf16.msra.mxu0 0
        %3135 = vmatprep.subr.bf16.mxu0 0
        %3136 = vmatpush1.bf16.msra.mxu0 0
        %3137 = vmatprep.subr.bf16.mxu0 0
        %3138 = vmatpush1.bf16.msra.mxu0 0
        %3139 = vmatprep.subr.bf16.mxu0 0
        %3140 = vmatpush1.bf16.msra.mxu0 0
        %3141 = vmatprep.mubr.bf16.mxu0 0
        %3142 = vmatmul.mubr.bf16.gmra.mrb[0].mxu0 %v3037
        %v3143 = vpop.f32.mrb[0].mxu0
        %v3144 = vadd.f32 %v3059, %v3143
        %v3145 = vpop.f32.mrb[0].mxu0
        %v3146 = vpop.f32.mrb[0].mxu0
        %v3147 = vadd.f32 %v3059, %v3146
        %v3148 = vpop.f32.mrb[0].mxu0
        %3149 = vdwg.mxu0
        %v3150 = vmax.f32 %v3144, 0.0
        %v3151 = vmax.f32 %v3147, 0.0
        %v3152 = vpack.c.bf16 %v3151, %v3150
        %v3153 = vld [vmem:[#allocation10] sm:$0xf]
        %v3154 = vld [vmem:[#allocation10 + $0x4] sm:$0xf]
        %v3155 = vld [vmem:[#allocation10 + $0x8] sm:$0xf]
        %v3156 = vld [vmem:[#allocation10 + $0xc] sm:$0xf]
        %v3157 = vld [vmem:[#allocation10 + $0x10] sm:$0xf]
        %v3158 = vld [vmem:[#allocation10 + $0x14] sm:$0xf]
        %v3159 = vld [vmem:[#allocation10 + $0x18] sm:$0xf]
        %v3160 = vld [vmem:[#allocation10 + $0x1c] sm:$0xf]
        %v3161 = vld [vmem:[#allocation10 + $0x20] sm:$0xf]
        %v3162 = vld [vmem:[#allocation10 + $0x24] sm:$0xf]
        %v3163 = vld [vmem:[#allocation10 + $0x28] sm:$0xf]
        %v3164 = vld [vmem:[#allocation10 + $0x2c] sm:$0xf]
        %v3165 = vld [vmem:[#allocation10 + $0x30] sm:$0xf]
        %v3166 = vld [vmem:[#allocation10 + $0x34] sm:$0xf]
        %v3167 = vld [vmem:[#allocation10 + $0x38] sm:$0xf]
        %v3168 = vld [vmem:[#allocation10 + $0x3c] sm:$0xf]
        %v3169 = vld [vmem:[%s8] sm:$0x1]
        %v3171 = vlaneseq
        %v3172 = vshrl.u32 %v3171, 7
        %v3173 = vsub.s32 0, %v3172
        %v3174 = vrot.slane %v3169, %v3173
        %v3192 = vunpack.c.l.b16 %v3153
        %v3193 = vunpack.c.l.b16 %v3154
        %v3194 = vunpack.c.l.b16 %v3155
        %v3195 = vunpack.c.l.b16 %v3156
        %v3196 = vunpack.c.l.b16 %v3157
        %v3197 = vunpack.c.l.b16 %v3158
        %v3198 = vunpack.c.l.b16 %v3159
        %v3199 = vunpack.c.l.b16 %v3160
        %v3200 = vunpack.c.l.b16 %v3161
        %v3201 = vunpack.c.l.b16 %v3162
        %v3202 = vunpack.c.l.b16 %v3163
        %v3203 = vunpack.c.l.b16 %v3164
        %v3204 = vunpack.c.l.b16 %v3165
        %v3205 = vunpack.c.l.b16 %v3166
        %v3206 = vunpack.c.l.b16 %v3167
        %v3207 = vunpack.c.l.b16 %v3168
        %v3208 = vpack.c.b16 %v3193, %v3192
        %v3209 = vpack.c.b16 %v3195, %v3194
        %v3210 = vpack.c.b16 %v3197, %v3196
        %v3211 = vpack.c.b16 %v3199, %v3198
        %v3212 = vpack.c.b16 %v3201, %v3200
        %v3213 = vpack.c.b16 %v3203, %v3202
        %v3214 = vpack.c.b16 %v3205, %v3204
        %v3215 = vpack.c.b16 %v3207, %v3206
        %3224 = vmatprep.subr.bf16.mxu0 0
        %3225 = vmatpush1.bf16.msra.mxu0 %v3208
        %3226 = vmatprep.subr.bf16.mxu0 0
        %3227 = vmatpush1.bf16.msra.mxu0 %v3209
        %3228 = vmatprep.subr.bf16.mxu0 0
        %3229 = vmatpush1.bf16.msra.mxu0 %v3210
        %3230 = vmatprep.subr.bf16.mxu0 0
        %3231 = vmatpush1.bf16.msra.mxu0 %v3211
        %3232 = vmatprep.subr.bf16.mxu0 0
        %3233 = vmatpush1.bf16.msra.mxu0 %v3212
        %3234 = vmatprep.subr.bf16.mxu0 0
        %3235 = vmatpush1.bf16.msra.mxu0 %v3213
        %3236 = vmatprep.subr.bf16.mxu0 0
        %3237 = vmatpush1.bf16.msra.mxu0 %v3214
        %3238 = vmatprep.subr.bf16.mxu0 0
        %3239 = vmatpush1.bf16.msra.mxu0 %v3215
        %3240 = vmatprep.subr.bf16.mxu0 0
        %3241 = vmatpush1.bf16.msra.mxu0 0
        %3242 = vmatprep.subr.bf16.mxu0 0
        %3243 = vmatpush1.bf16.msra.mxu0 0
        %3244 = vmatprep.subr.bf16.mxu0 0
        %3245 = vmatpush1.bf16.msra.mxu0 0
        %3246 = vmatprep.subr.bf16.mxu0 0
        %3247 = vmatpush1.bf16.msra.mxu0 0
        %3248 = vmatprep.subr.bf16.mxu0 0
        %3249 = vmatpush1.bf16.msra.mxu0 0
        %3250 = vmatprep.subr.bf16.mxu0 0
        %3251 = vmatpush1.bf16.msra.mxu0 0
        %3252 = vmatprep.subr.bf16.mxu0 0
        %3253 = vmatpush1.bf16.msra.mxu0 0
        %3254 = vmatprep.subr.bf16.mxu0 0
        %3255 = vmatpush1.bf16.msra.mxu0 0
        %3256 = vmatprep.mubr.bf16.mxu0 0
        %3257 = vmatmul.mubr.bf16.gmra.mrb[0].mxu0 %v3152
        %v3258 = vpop.f32.mrb[0].mxu0
        %v3259 = vadd.f32 %v3174, %v3258
        %v3260 = vpop.f32.mrb[0].mxu0
        %v3261 = vpop.f32.mrb[0].mxu0
        %v3262 = vadd.f32 %v3174, %v3261
        %v3263 = vpop.f32.mrb[0].mxu0
        %3264 = vdwg.mxu0
        %v3265 = vadd.f32 %v3035, %v3259
        %v3266 = vadd.f32 %v3036, %v3262
        %v3267 = vld [vmem:[%s11] sm:$0x1]
        %v3268 = vld [vmem:[%s12] sm:$0x1]
        %3269 = vadd.xlane.f32.xlu0 %v3265
        %v3270 = vpop.xlane.xlu0 %3269
        %3271 = vadd.xlane.f32.xlu0 %v3266
        %v3272 = vpop.xlane.xlu0 %3271
        %v3273 = vmul.f32 %v3270, %v3002
        %v3274 = vmul.f32 %v3272, %v3002
        %v3275 = vsub.f32 %v3265, %v3273
        %v3276 = vsub.f32 %v3266, %v3274
        %v3277 = vmul.f32 %v3275, %v3275
        %v3278 = vmul.f32 %v3276, %v3276
        %3279 = vadd.xlane.f32.xlu0 %v3277
        %v3280 = vpop.xlane.xlu0 %3279
        %3281 = vadd.xlane.f32.xlu0 %v3278
        %v3282 = vpop.xlane.xlu0 %3281
        %v3283 = vmul.f32 %v3280, %v3002
        %v3284 = vmul.f32 %v3282, %v3002
        %v3285 = vadd.f32 %v3283, 1e-05
        %v3286 = vadd.f32 %v3284, 1e-05
        %v3287 = vrsqrt.pop %v3285
        %v3288 = vrsqrt.pop %v3286
        %v3289 = vmul.f32 %v3275, %v3287
        %v3290 = vmul.f32 %v3276, %v3288
        %v3292 = vlaneseq
        %v3293 = vshrl.u32 %v3292, 7
        %v3294 = vsub.s32 0, %v3293
        %v3295 = vrot.slane %v3267, %v3294
        %v3297 = vmul.f32 %v3289, %v3295
        %v3298 = vmul.f32 %v3290, %v3295
        %v3300 = vlaneseq
        %v3301 = vshrl.u32 %v3300, 7
        %v3302 = vsub.s32 0, %v3301
        %v3303 = vrot.slane %v3268, %v3302
        %v3305 = vadd.f32 %v3297, %v3303
        %v3306 = vadd.f32 %v3298, %v3303
        %3307 = vst [vmem:[%s516] sm:$0xff] %v3305
        %3308 = vst [vmem:[%s516 + $0x8] sm:$0xff] %v3306
        %s3309 = sand.u32 %s318, 1
        %s3310 = scalar_lea.sflag [#allocation4], %s3309
        %s3311 = sand.u32 %s318, 1
        %s3312 = smul.addr %s3311, 16
        %s3313 = scalar_lea.vmem [#allocation11], %s3312
        // Predicated region
        $region93: #{tpu_custom_call.1} parent=71 // pred_check
          %p3314 = pneg %p328
        $region94: #{tpu_custom_call.1} parent=71 // pred_check_branch
          %3316 = sbr.rel (%p3314) target = $region96
        $region95: #{tpu_custom_call.1} parent=71 // pred_region
          %s3317 = smul.u32 2, %s32
          %s3319 = ssub.s32 256, 256
          %3320 = vsyncadd %s3310, %s3319
          %s3321 = smul.addr %s3317, 128
          %s3322 = scalar_lea.hbm %s13, %s3321
          %s3323 = sshll.u32 %s3313, 4
          %s3324 = int_to_ptr.vmem [resolvable:$true] %s3323
          %3329 = dma.vmem_to_hbm [thread:$0]  %s3324, 256, %s3322, %s3310, 128, 128, 8
        $region96: #{tpu_custom_call.1} parent=71 // pred_fallthru
          _
      $region72: #{tpu_custom_call.1} parent=5 // pred_fallthru
        _
      %p3330 = scmp.le.s32.totalorder 2, %s27
      // Predicated region
      $region97: #{tpu_custom_call.1} parent=5 // pred_check
        %p3331 = pneg %p3330
      $region98: #{tpu_custom_call.1} parent=5 // pred_check_branch
        %3333 = sbr.rel (%p3331) target = $region100
      $region99: #{tpu_custom_call.1} parent=5 // pred_region
        %s3334 = ssub.s32 %s27, 2
        // Predicated region
        $region101: #{tpu_custom_call.1} parent=99 // pred_check
          %p3335 = pneg %p334
        $region102: #{tpu_custom_call.1} parent=99 // pred_check_branch
          %3337 = sbr.rel (%p3335) target = $region104
        $region103: #{tpu_custom_call.1} parent=99 // pred_region
          %s3338 = sand.u32 %s319, 1
          %s3339 = scalar_lea.sflag [#allocation4], %s3338
          %s3340 = sand.u32 %s319, 1
          %s3341 = smul.addr %s3340, 16
          %s3342 = scalar_lea.vmem [#allocation11], %s3341
          %3343 = dma.done %s3339, 256
        $region104: #{tpu_custom_call.1} parent=99 // pred_fallthru
          _
      $region100: #{tpu_custom_call.1} parent=5 // pred_fallthru
        _
    $region6: #{tpu_custom_call.1} parent=1 // loop_footer
      %s31 = sadd.s32 1, %s27
    $region7: #{tpu_custom_call.1} parent=1 // loop_footer_branch
      %26 = sbr.rel target = $region3
    $region8: #{tpu_custom_call.1} parent=1 // loop_exit
      _
    %3344 = vsyncpa [#allocation3], 1
    %s3345 = scalar_lea.sflag [#allocation3], 1
    %3346 = vsyncpa %s3345, 1
    %3347 = vsyncpa [#allocation6], 1
    %3348 = vsyncpa [#allocation9], 1
    %3349 = vsyncpa [#allocation4], 1
    %s3350 = scalar_lea.sflag [#allocation4], 1
    %3351 = vsyncpa %s3350, 1

</llo_original>
